<compile_context>
chip_gen: v7x
topology: tpu7x:2x2x1
jax: 0.10.0
libtpu: 0.0.40
codegen_flags: <defaults>
</compile_context>

<pallas_src>
import functools

import jax
import jax.numpy as jnp
from jax.experimental import pallas as pl
from jax.experimental.pallas import tpu as pltpu


_PAD = 8  # spare scratch rows so stride-1 "wide" taps may safely over-read
          # (<= 2 rows past the valid region; values only feed garbage columns)


# -----------------------------------------------------------------------------
# Fused encoder kernel: `bsz` batch samples per grid step.
# -----------------------------------------------------------------------------
def _encoder_kernel(p1_ref, w1_ref, w2_ref, w3_ref, w4_ref, b_ref,
                    o_ref, buf_a, buf_b, stage, *, oh1, ow1, ow4, bsz):
    f32 = jnp.float32
    m1 = oh1 * ow1
    oh4 = oh1 - 6
    m4c = oh4 * ow4

    def conv3x3_deep(src, rows_in, w_tap_ref, bias_row):
        """Stride-1 3x3 conv on a 'wide' (rows*ow1, 32) activation buffer.

        The 9 shifted tap windows (tap (kh, kw) starts at flat row
        kh*ow1 + kw) are staged into a single (m_out, 288) VMEM buffer as
        32-lane column blocks, so the whole layer is ONE deep-K MXU matmul.

        Invariant: valid output positions (row < rows_out, col < valid_width-2)
        only ever read valid input positions; garbage columns (wide width >=
        valid width) and the <=2-row over-read into the _PAD/stale tail only
        feed other garbage columns, which the final compaction discards.
        """
        rows_out = rows_in - 2
        m_out = rows_out * ow1
        wins = [src[pl.ds(kh * ow1 + kw, m_out), :]
                for kh in range(3) for kw in range(3)]           # 9 x (m_out, 32)
        # 128-aligned staging stores: two full-vreg-width groups + 32-wide tail.
        stage[pl.ds(0, m_out), pl.ds(0, 128)] = jnp.concatenate(wins[0:4], axis=1)
        stage[pl.ds(0, m_out), pl.ds(128, 128)] = jnp.concatenate(wins[4:8], axis=1)
        stage[pl.ds(0, m_out), pl.ds(256, 32)] = wins[8]
        acc = jnp.dot(stage[pl.ds(0, m_out), :], w_tap_ref[...],
                      preferred_element_type=f32)                # (m_out, 32)
        return jnp.maximum(acc + bias_row, 0.0), rows_out, m_out

    # Unrolled per-sample loop: amortizes fixed per-grid-step cost, enlarges
    # DMAs.  Scratch reuse is safe: each sample fully rewrites every row it
    # later reads (layer 1 rewrites buf_a[0:m1], etc.).
    for s in range(bsz):
        # ---- layer 1 (stride 2) via wrapper-side bf16 im2col patches.
        # /255 - 0.5 is folded into post-matmul scale + pre-adjusted bias
        # (exact algebra: (x/255-0.5)@W + b == (x@W)/255 + (b - 0.5*colsum(W))).
        p = p1_ref[s].astype(f32)                                  # (M1, K1p)
        a1 = jnp.dot(p, w1_ref[...], preferred_element_type=f32)   # (M1, 32)
        a1 = jnp.maximum(a1 * (1.0 / 255.0) + b_ref[0:1, :], 0.0)
        buf_a[pl.ds(0, m1), :] = a1

        # ---- layers 2-4 (stride 1), one deep-K matmul each.
        a2, oh2, m2 = conv3x3_deep(buf_a, oh1, w2_ref, b_ref[1:2, :])
        buf_b[pl.ds(0, m2), :] = a2
        a3, oh3, m3 = conv3x3_deep(buf_b, oh2, w3_ref, b_ref[2:3, :])
        buf_a[pl.ds(0, m3), :] = a3
        a4, _, _ = conv3x3_deep(buf_a, oh3, w4_ref, b_ref[3:4, :])

        # ---- compact valid columns in-kernel, then lane-dense channel-major
        # store (32, oh4*ow4); the wrapper reshape becomes pure metadata.
        for r in range(oh4):
            buf_b[pl.ds(r * ow4, ow4), :] = a4[r * ow1:r * ow1 + ow4, :]
        o_ref[s] = jnp.transpose(buf_b[pl.ds(0, m4c), :])


# -----------------------------------------------------------------------------
# Wrapper-side helpers.
# -----------------------------------------------------------------------------
def _im2col_stride2(x, k=3, stride=2):
    """x: (N, C, H, W) -> (N, OH*OW, C*k*k) patches with (c, kh, kw) K-order."""
    n, c, h, w = x.shape
    oh = (h - k) // stride + 1
    ow = (w - k) // stride + 1
    cols = []
    for di in range(k):
        for dj in range(k):
            cols.append(x[:, :, di:di + stride * oh:stride,
                             dj:dj + stride * ow:stride])
    p = jnp.stack(cols, axis=2)                 # (N, C, 9, OH, OW)
    p = p.transpose(0, 3, 4, 1, 2)              # (N, OH, OW, C, 9)
    return p.reshape(n, oh * ow, c * k * k), oh, ow


def _pick_batch_block(n, max_b=8):
    """Largest divisor of n <= max_b, preferring a grid of >= 2 steps."""
    cands = [b for b in range(1, min(n, max_b) + 1) if n % b == 0]
    pref = [b for b in cands if n // b >= 2]
    return max(pref) if pref else max(cands)


def _pack_params(params, c_in):
    """Pack PyTorch-layout weights once for the fused kernel."""
    (w1, b1), (w2, b2), (w3, b3), (w4, b4) = params
    k1 = c_in * 9
    k1p = ((k1 + 7) // 8) * 8                   # sublane-friendly padded K
    w1t = w1.reshape(32, k1).T                  # (K1, 32), (c, kh, kw) row order
    w1t = jnp.pad(w1t, ((0, k1p - k1), (0, 0)))
    b1_adj = b1 - 0.5 * jnp.sum(w1t, axis=0)    # fold the -0.5 of (x/255 - 0.5)

    def concat_pack(w):                         # (32,32,3,3) -> (288, 32)
        return w.transpose(2, 3, 1, 0).reshape(9 * 32, 32)   # rows: t*32 + cin

    b_all = jnp.stack([b1_adj, b2, b3, b4], axis=0)           # (4, 32)
    return w1t, concat_pack(w2), concat_pack(w3), concat_pack(w4), b_all, k1p


def encoder_forward(params, obs):
    """obs: (N, C, H, W) float raw pixels in [0, 255] -> (N, 32*OH4*OW4)."""
    n, c, h, w = obs.shape
    w1t, w2c, w3c, w4c, b_all, k1p = _pack_params(params, c)

    p1, oh1, ow1 = _im2col_stride2(obs)          # (N, M1, C*9)
    k1 = c * 9
    p1 = jnp.pad(p1, ((0, 0), (0, 0), (0, k1p - k1)))
    # Raw pixels 0..255 are exact in bf16 -> halves the dominant input DMA.
    p1 = p1.astype(jnp.bfloat16)

    oh4, ow4 = oh1 - 6, ow1 - 6
    assert oh4 >= 1 and ow4 >= 1, "input spatial size too small for 4 convs"
    m1 = oh1 * ow1
    m2 = (oh1 - 2) * ow1
    m3 = (oh1 - 4) * ow1
    m4w = oh4 * ow1
    m4c = oh4 * ow4
    m_stage = ((m2 + 7) // 8) * 8

    bsz = _pick_batch_block(n)
    grid_n = n // bsz

    flops = 2 * n * (m1 * k1p * 32 + 288 * 32 * (m2 + m3 + m4w))
    bytes_accessed = (2 * n * m1 * k1p                                  # bf16 in
                      + 4 * (w1t.size + w2c.size + w3c.size + w4c.size
                             + b_all.size)
                      + 4 * n * 32 * m4c)                               # f32 out

    out = pl.pallas_call(
        functools.partial(_encoder_kernel, oh1=oh1, ow1=ow1, ow4=ow4, bsz=bsz),
        out_shape=jax.ShapeDtypeStruct((n, 32, m4c), jnp.float32),
        grid=(grid_n,),
        in_specs=[
            pl.BlockSpec((bsz, m1, k1p), lambda i: (i, 0, 0)),  # per-block patches
            pl.BlockSpec((k1p, 32), lambda i: (0, 0)),          # resident weights
            pl.BlockSpec((288, 32), lambda i: (0, 0)),
            pl.BlockSpec((288, 32), lambda i: (0, 0)),
            pl.BlockSpec((288, 32), lambda i: (0, 0)),
            pl.BlockSpec((4, 32), lambda i: (0, 0)),            # resident biases
        ],
        out_specs=pl.BlockSpec((bsz, 32, m4c), lambda i: (i, 0, 0)),
        scratch_shapes=[
            pltpu.VMEM((m1 + _PAD, 32), jnp.float32),           # ping activation
            pltpu.VMEM((m1 + _PAD, 32), jnp.float32),           # pong activation
            pltpu.VMEM((m_stage, 288), jnp.float32),            # deep-K staging
        ],
        compiler_params=pltpu.CompilerParams(
            dimension_semantics=("parallel",),                  # batch across TCs
            vmem_limit_bytes=32 * 1024 * 1024),
        cost_estimate=pl.CostEstimate(
            flops=int(flops), transcendentals=0,
            bytes_accessed=int(bytes_accessed)),
    )(p1, w1t, w2c, w3c, w4c, b_all)

    # Pure metadata: output is already (32, oh4*ow4) per sample in NCHW
    # flatten order (channel-major, then oh, then ow).
    return out.reshape(n, 32 * m4c)


# -----------------------------------------------------------------------------
# Parameter construction (same shapes as the PyTorch module) and a pure-JAX
# reference used for the correctness check.
# -----------------------------------------------------------------------------
def init_encoder_params(key, in_channels):
    chans = [in_channels, 32, 32, 32, 32]
    params = []
    for li in range(4):
        key, k_w = jax.random.split(key)
        cin, cout = chans[li], chans[li + 1]
        fan_in = cin * 3 * 3
        w = jax.random.normal(k_w, (cout, cin, 3, 3), jnp.float32)
        w = w * (2.0 / fan_in) ** 0.5
        b = jnp.zeros((cout,), jnp.float32)
        params.append((w, b))
    return params


def encoder_forward_ref(params, obs):
    strides = [2, 1, 1, 1]
    h = obs / 255.0 - 0.5
    for (w, b), s in zip(params, strides):
        h = jax.lax.conv_general_dilated(
            h, w, window_strides=(s, s), padding="VALID",
            dimension_numbers=("NCHW", "OIHW", "NCHW"))
        h = jax.nn.relu(h + b[None, :, None, None])
    return h.reshape(h.shape[0], -1)


if __name__ == "__main__":
    key = jax.random.PRNGKey(0)
    k_obs, k_par = jax.random.split(key)

    batch, channels, spatial = 4, 4, 20        # small, 4 valid 3x3 convs
    obs = jax.random.randint(k_obs, (batch, channels, spatial, spatial),
                             0, 256).astype(jnp.float32)
    params = init_encoder_params(k_par, channels)

    out = jax.jit(encoder_forward)(params, obs)
    out = jax.block_until_ready(out)

    ref = encoder_forward_ref(params, obs)
    assert out.shape == ref.shape, (out.shape, ref.shape)
    assert jnp.allclose(out, ref, atol=1e-3, rtol=1e-3), \
        float(jnp.max(jnp.abs(out - ref)))

    print("KERNEL_OK")
</pallas_src>

<mosaic_0001>
module attributes {stable_mosaic.version = 11 : i64} {
  func.func @_encoder_kernel(%arg0: i32, %arg1: memref<2x81x40xbf16, #tpu.memory_space<vmem>>, %arg2: memref<40x32xf32, #tpu.memory_space<vmem>>, %arg3: memref<288x32xf32, #tpu.memory_space<vmem>>, %arg4: memref<288x32xf32, #tpu.memory_space<vmem>>, %arg5: memref<288x32xf32, #tpu.memory_space<vmem>>, %arg6: memref<4x32xf32, #tpu.memory_space<vmem>>, %arg7: memref<2x32x9xf32, #tpu.memory_space<vmem>>, %arg8: memref<89x32xf32, #tpu.memory_space<vmem>>, %arg9: memref<89x32xf32, #tpu.memory_space<vmem>>, %arg10: memref<64x288xf32, #tpu.memory_space<vmem>>) attributes {dimension_semantics = [#tpu.dimension_semantics<parallel>], iteration_bounds = array<i64: 2>, scalar_prefetch = 0 : i64, scratch_operands = 3 : i64, tpu.core_type = #tpu.core_type<tc>, window_params = [{transform_indices = @transform_0, window_bounds = array<i64: 2, 81, 40>}, {pipeline_mode = #tpu.pipeline_mode<synchronous>, transform_indices = @transform_1, window_bounds = array<i64: 40, 32>}, {pipeline_mode = #tpu.pipeline_mode<synchronous>, transform_indices = @transform_2, window_bounds = array<i64: 288, 32>}, {pipeline_mode = #tpu.pipeline_mode<synchronous>, transform_indices = @transform_3, window_bounds = array<i64: 288, 32>}, {pipeline_mode = #tpu.pipeline_mode<synchronous>, transform_indices = @transform_4, window_bounds = array<i64: 288, 32>}, {pipeline_mode = #tpu.pipeline_mode<synchronous>, transform_indices = @transform_5, window_bounds = array<i64: 4, 32>}, {transform_indices = @transform_6, window_bounds = array<i64: 2, 32, 9>}]} {
    %c0 = arith.constant 0 : index
    %c0_0 = arith.constant 0 : index
    %c0_1 = arith.constant 0 : index
    %0 = vector.load %arg1[%c0, %c0_0, %c0_1] : memref<2x81x40xbf16, #tpu.memory_space<vmem>>, vector<1x81x40xbf16>
    %1 = vector.shape_cast %0 : vector<1x81x40xbf16> to vector<81x40xbf16>
    %2 = arith.extf %1 : vector<81x40xbf16> to vector<81x40xf32>
    %c0_2 = arith.constant 0 : index
    %c0_3 = arith.constant 0 : index
    %3 = vector.load %arg2[%c0_2, %c0_3] : memref<40x32xf32, #tpu.memory_space<vmem>>, vector<40x32xf32>
    %cst = arith.constant dense<0.000000e+00> : vector<81x32xf32>
    %4 = tpu.matmul %2, %3, %cst {dimension_numbers = #tpu.dot_dimension_numbers<[1], [0], [0], [1], [0, 0, 1, 1], [], []>} : vector<81x40xf32>, vector<40x32xf32>, vector<81x32xf32> -> vector<81x32xf32>
    %cst_4 = arith.constant 0.00392156886 : f32
    %5 = vector.broadcast %cst_4 : f32 to vector<81x32xf32>
    %6 = arith.mulf %4, %5 : vector<81x32xf32>
    %c0_5 = arith.constant 0 : index
    %c0_6 = arith.constant 0 : index
    %7 = vector.load %arg6[%c0_5, %c0_6] : memref<4x32xf32, #tpu.memory_space<vmem>>, vector<1x32xf32>
    %8 = vector.broadcast %7 : vector<1x32xf32> to vector<81x32xf32>
    %9 = arith.addf %6, %8 : vector<81x32xf32>
    %cst_7 = arith.constant 0.000000e+00 : f32
    %10 = vector.broadcast %cst_7 : f32 to vector<81x32xf32>
    %11 = arith.maximumf %9, %10 : vector<81x32xf32>
    %c0_8 = arith.constant 0 : index
    %c0_9 = arith.constant 0 : index
    %12 = vector.load %arg8[%c0_8, %c0_9] : memref<89x32xf32, #tpu.memory_space<vmem>>, vector<81x32xf32>
    tpu.vector_store %arg8[%c0_8, %c0_9], %11 {strides = array<i32>} : memref<89x32xf32, #tpu.memory_space<vmem>>, vector<81x32xf32>,
    %c1 = arith.constant 1 : index
    %c0_10 = arith.constant 0 : index
    %13 = vector.load %arg6[%c1, %c0_10] : memref<4x32xf32, #tpu.memory_space<vmem>>, vector<1x32xf32>
    %c0_11 = arith.constant 0 : index
    %c0_12 = arith.constant 0 : index
    %14 = vector.load %arg8[%c0_11, %c0_12] : memref<89x32xf32, #tpu.memory_space<vmem>>, vector<63x32xf32>
    %c1_13 = arith.constant 1 : index
    %c0_14 = arith.constant 0 : index
    %15 = vector.load %arg8[%c1_13, %c0_14] : memref<89x32xf32, #tpu.memory_space<vmem>>, vector<63x32xf32>
    %c2 = arith.constant 2 : index
    %c0_15 = arith.constant 0 : index
    %16 = vector.load %arg8[%c2, %c0_15] : memref<89x32xf32, #tpu.memory_space<vmem>>, vector<63x32xf32>
    %c9 = arith.constant 9 : index
    %c0_16 = arith.constant 0 : index
    %17 = vector.load %arg8[%c9, %c0_16] : memref<89x32xf32, #tpu.memory_space<vmem>>, vector<63x32xf32>
    %c10 = arith.constant 10 : index
    %c0_17 = arith.constant 0 : index
    %18 = vector.load %arg8[%c10, %c0_17] : memref<89x32xf32, #tpu.memory_space<vmem>>, vector<63x32xf32>
    %c11 = arith.constant 11 : index
    %c0_18 = arith.constant 0 : index
    %19 = vector.load %arg8[%c11, %c0_18] : memref<89x32xf32, #tpu.memory_space<vmem>>, vector<63x32xf32>
    %c18 = arith.constant 18 : index
    %c0_19 = arith.constant 0 : index
    %20 = vector.load %arg8[%c18, %c0_19] : memref<89x32xf32, #tpu.memory_space<vmem>>, vector<63x32xf32>
    %c19 = arith.constant 19 : index
    %c0_20 = arith.constant 0 : index
    %21 = vector.load %arg8[%c19, %c0_20] : memref<89x32xf32, #tpu.memory_space<vmem>>, vector<63x32xf32>
    %c20 = arith.constant 20 : index
    %c0_21 = arith.constant 0 : index
    %22 = vector.load %arg8[%c20, %c0_21] : memref<89x32xf32, #tpu.memory_space<vmem>>, vector<63x32xf32>
    %23 = tpu.concatenate %14, %15, %16, %17 in 1 : vector<63x32xf32>, vector<63x32xf32>, vector<63x32xf32>, vector<63x32xf32> -> vector<63x128xf32>
    %c0_22 = arith.constant 0 : index
    %c0_23 = arith.constant 0 : index
    %24 = vector.load %arg10[%c0_22, %c0_23] : memref<64x288xf32, #tpu.memory_space<vmem>>, vector<63x128xf32>
    tpu.vector_store %arg10[%c0_22, %c0_23], %23 {strides = array<i32>} : memref<64x288xf32, #tpu.memory_space<vmem>>, vector<63x128xf32>,
    %25 = tpu.concatenate %18, %19, %20, %21 in 1 : vector<63x32xf32>, vector<63x32xf32>, vector<63x32xf32>, vector<63x32xf32> -> vector<63x128xf32>
    %c0_24 = arith.constant 0 : index
    %c128 = arith.constant 128 : index
    %26 = vector.load %arg10[%c0_24, %c128] : memref<64x288xf32, #tpu.memory_space<vmem>>, vector<63x128xf32>
    tpu.vector_store %arg10[%c0_24, %c128], %25 {strides = array<i32>} : memref<64x288xf32, #tpu.memory_space<vmem>>, vector<63x128xf32>,
    %c0_25 = arith.constant 0 : index
    %c256 = arith.constant 256 : index
    %27 = vector.load %arg10[%c0_25, %c256] : memref<64x288xf32, #tpu.memory_space<vmem>>, vector<63x32xf32>
    tpu.vector_store %arg10[%c0_25, %c256], %22 {strides = array<i32>} : memref<64x288xf32, #tpu.memory_space<vmem>>, vector<63x32xf32>,
    %c0_26 = arith.constant 0 : index
    %c0_27 = arith.constant 0 : index
    %28 = vector.load %arg10[%c0_26, %c0_27] : memref<64x288xf32, #tpu.memory_space<vmem>>, vector<63x288xf32>
    %c0_28 = arith.constant 0 : index
    %c0_29 = arith.constant 0 : index
    %29 = vector.load %arg3[%c0_28, %c0_29] : memref<288x32xf32, #tpu.memory_space<vmem>>, vector<288x32xf32>
    %cst_30 = arith.constant dense<0.000000e+00> : vector<63x32xf32>
    %30 = tpu.matmul %28, %29, %cst_30 {dimension_numbers = #tpu.dot_dimension_numbers<[1], [0], [0], [1], [0, 0, 1, 1], [], []>} : vector<63x288xf32>, vector<288x32xf32>, vector<63x32xf32> -> vector<63x32xf32>
    %31 = vector.broadcast %13 : vector<1x32xf32> to vector<63x32xf32>
    %32 = arith.addf %30, %31 : vector<63x32xf32>
    %cst_31 = arith.constant 0.000000e+00 : f32
    %33 = vector.broadcast %cst_31 : f32 to vector<63x32xf32>
    %34 = arith.maximumf %32, %33 : vector<63x32xf32>
    %c0_32 = arith.constant 0 : index
    %c0_33 = arith.constant 0 : index
    %35 = vector.load %arg9[%c0_32, %c0_33] : memref<89x32xf32, #tpu.memory_space<vmem>>, vector<63x32xf32>
    tpu.vector_store %arg9[%c0_32, %c0_33], %34 {strides = array<i32>} : memref<89x32xf32, #tpu.memory_space<vmem>>, vector<63x32xf32>,
    %c2_34 = arith.constant 2 : index
    %c0_35 = arith.constant 0 : index
    %36 = vector.load %arg6[%c2_34, %c0_35] : memref<4x32xf32, #tpu.memory_space<vmem>>, vector<1x32xf32>
    %c0_36 = arith.constant 0 : index
    %c0_37 = arith.constant 0 : index
    %37 = vector.load %arg9[%c0_36, %c0_37] : memref<89x32xf32, #tpu.memory_space<vmem>>, vector<45x32xf32>
    %c1_38 = arith.constant 1 : index
    %c0_39 = arith.constant 0 : index
    %38 = vector.load %arg9[%c1_38, %c0_39] : memref<89x32xf32, #tpu.memory_space<vmem>>, vector<45x32xf32>
    %c2_40 = arith.constant 2 : index
    %c0_41 = arith.constant 0 : index
    %39 = vector.load %arg9[%c2_40, %c0_41] : memref<89x32xf32, #tpu.memory_space<vmem>>, vector<45x32xf32>
    %c9_42 = arith.constant 9 : index
    %c0_43 = arith.constant 0 : index
    %40 = vector.load %arg9[%c9_42, %c0_43] : memref<89x32xf32, #tpu.memory_space<vmem>>, vector<45x32xf32>
    %c10_44 = arith.constant 10 : index
    %c0_45 = arith.constant 0 : index
    %41 = vector.load %arg9[%c10_44, %c0_45] : memref<89x32xf32, #tpu.memory_space<vmem>>, vector<45x32xf32>
    %c11_46 = arith.constant 11 : index
    %c0_47 = arith.constant 0 : index
    %42 = vector.load %arg9[%c11_46, %c0_47] : memref<89x32xf32, #tpu.memory_space<vmem>>, vector<45x32xf32>
    %c18_48 = arith.constant 18 : index
    %c0_49 = arith.constant 0 : index
    %43 = vector.load %arg9[%c18_48, %c0_49] : memref<89x32xf32, #tpu.memory_space<vmem>>, vector<45x32xf32>
    %c19_50 = arith.constant 19 : index
    %c0_51 = arith.constant 0 : index
    %44 = vector.load %arg9[%c19_50, %c0_51] : memref<89x32xf32, #tpu.memory_space<vmem>>, vector<45x32xf32>
    %c20_52 = arith.constant 20 : index
    %c0_53 = arith.constant 0 : index
    %45 = vector.load %arg9[%c20_52, %c0_53] : memref<89x32xf32, #tpu.memory_space<vmem>>, vector<45x32xf32>
    %46 = tpu.concatenate %37, %38, %39, %40 in 1 : vector<45x32xf32>, vector<45x32xf32>, vector<45x32xf32>, vector<45x32xf32> -> vector<45x128xf32>
    %c0_54 = arith.constant 0 : index
    %c0_55 = arith.constant 0 : index
    %47 = vector.load %arg10[%c0_54, %c0_55] : memref<64x288xf32, #tpu.memory_space<vmem>>, vector<45x128xf32>
    tpu.vector_store %arg10[%c0_54, %c0_55], %46 {strides = array<i32>} : memref<64x288xf32, #tpu.memory_space<vmem>>, vector<45x128xf32>,
    %48 = tpu.concatenate %41, %42, %43, %44 in 1 : vector<45x32xf32>, vector<45x32xf32>, vector<45x32xf32>, vector<45x32xf32> -> vector<45x128xf32>
    %c0_56 = arith.constant 0 : index
    %c128_57 = arith.constant 128 : index
    %49 = vector.load %arg10[%c0_56, %c128_57] : memref<64x288xf32, #tpu.memory_space<vmem>>, vector<45x128xf32>
    tpu.vector_store %arg10[%c0_56, %c128_57], %48 {strides = array<i32>} : memref<64x288xf32, #tpu.memory_space<vmem>>, vector<45x128xf32>,
    %c0_58 = arith.constant 0 : index
    %c256_59 = arith.constant 256 : index
    %50 = vector.load %arg10[%c0_58, %c256_59] : memref<64x288xf32, #tpu.memory_space<vmem>>, vector<45x32xf32>
    tpu.vector_store %arg10[%c0_58, %c256_59], %45 {strides = array<i32>} : memref<64x288xf32, #tpu.memory_space<vmem>>, vector<45x32xf32>,
    %c0_60 = arith.constant 0 : index
    %c0_61 = arith.constant 0 : index
    %51 = vector.load %arg10[%c0_60, %c0_61] : memref<64x288xf32, #tpu.memory_space<vmem>>, vector<45x288xf32>
    %c0_62 = arith.constant 0 : index
    %c0_63 = arith.constant 0 : index
    %52 = vector.load %arg4[%c0_62, %c0_63] : memref<288x32xf32, #tpu.memory_space<vmem>>, vector<288x32xf32>
    %cst_64 = arith.constant dense<0.000000e+00> : vector<45x32xf32>
    %53 = tpu.matmul %51, %52, %cst_64 {dimension_numbers = #tpu.dot_dimension_numbers<[1], [0], [0], [1], [0, 0, 1, 1], [], []>} : vector<45x288xf32>, vector<288x32xf32>, vector<45x32xf32> -> vector<45x32xf32>
    %54 = vector.broadcast %36 : vector<1x32xf32> to vector<45x32xf32>
    %55 = arith.addf %53, %54 : vector<45x32xf32>
    %cst_65 = arith.constant 0.000000e+00 : f32
    %56 = vector.broadcast %cst_65 : f32 to vector<45x32xf32>
    %57 = arith.maximumf %55, %56 : vector<45x32xf32>
    %c0_66 = arith.constant 0 : index
    %c0_67 = arith.constant 0 : index
    %58 = vector.load %arg8[%c0_66, %c0_67] : memref<89x32xf32, #tpu.memory_space<vmem>>, vector<45x32xf32>
    tpu.vector_store %arg8[%c0_66, %c0_67], %57 {strides = array<i32>} : memref<89x32xf32, #tpu.memory_space<vmem>>, vector<45x32xf32>,
    %c3 = arith.constant 3 : index
    %c0_68 = arith.constant 0 : index
    %59 = vector.load %arg6[%c3, %c0_68] : memref<4x32xf32, #tpu.memory_space<vmem>>, vector<1x32xf32>
    %c0_69 = arith.constant 0 : index
    %c0_70 = arith.constant 0 : index
    %60 = vector.load %arg8[%c0_69, %c0_70] : memref<89x32xf32, #tpu.memory_space<vmem>>, vector<27x32xf32>
    %c1_71 = arith.constant 1 : index
    %c0_72 = arith.constant 0 : index
    %61 = vector.load %arg8[%c1_71, %c0_72] : memref<89x32xf32, #tpu.memory_space<vmem>>, vector<27x32xf32>
    %c2_73 = arith.constant 2 : index
    %c0_74 = arith.constant 0 : index
    %62 = vector.load %arg8[%c2_73, %c0_74] : memref<89x32xf32, #tpu.memory_space<vmem>>, vector<27x32xf32>
    %c9_75 = arith.constant 9 : index
    %c0_76 = arith.constant 0 : index
    %63 = vector.load %arg8[%c9_75, %c0_76] : memref<89x32xf32, #tpu.memory_space<vmem>>, vector<27x32xf32>
    %c10_77 = arith.constant 10 : index
    %c0_78 = arith.constant 0 : index
    %64 = vector.load %arg8[%c10_77, %c0_78] : memref<89x32xf32, #tpu.memory_space<vmem>>, vector<27x32xf32>
    %c11_79 = arith.constant 11 : index
    %c0_80 = arith.constant 0 : index
    %65 = vector.load %arg8[%c11_79, %c0_80] : memref<89x32xf32, #tpu.memory_space<vmem>>, vector<27x32xf32>
    %c18_81 = arith.constant 18 : index
    %c0_82 = arith.constant 0 : index
    %66 = vector.load %arg8[%c18_81, %c0_82] : memref<89x32xf32, #tpu.memory_space<vmem>>, vector<27x32xf32>
    %c19_83 = arith.constant 19 : index
    %c0_84 = arith.constant 0 : index
    %67 = vector.load %arg8[%c19_83, %c0_84] : memref<89x32xf32, #tpu.memory_space<vmem>>, vector<27x32xf32>
    %c20_85 = arith.constant 20 : index
    %c0_86 = arith.constant 0 : index
    %68 = vector.load %arg8[%c20_85, %c0_86] : memref<89x32xf32, #tpu.memory_space<vmem>>, vector<27x32xf32>
    %69 = tpu.concatenate %60, %61, %62, %63 in 1 : vector<27x32xf32>, vector<27x32xf32>, vector<27x32xf32>, vector<27x32xf32> -> vector<27x128xf32>
    %c0_87 = arith.constant 0 : index
    %c0_88 = arith.constant 0 : index
    %70 = vector.load %arg10[%c0_87, %c0_88] : memref<64x288xf32, #tpu.memory_space<vmem>>, vector<27x128xf32>
    tpu.vector_store %arg10[%c0_87, %c0_88], %69 {strides = array<i32>} : memref<64x288xf32, #tpu.memory_space<vmem>>, vector<27x128xf32>,
    %71 = tpu.concatenate %64, %65, %66, %67 in 1 : vector<27x32xf32>, vector<27x32xf32>, vector<27x32xf32>, vector<27x32xf32> -> vector<27x128xf32>
    %c0_89 = arith.constant 0 : index
    %c128_90 = arith.constant 128 : index
    %72 = vector.load %arg10[%c0_89, %c128_90] : memref<64x288xf32, #tpu.memory_space<vmem>>, vector<27x128xf32>
    tpu.vector_store %arg10[%c0_89, %c128_90], %71 {strides = array<i32>} : memref<64x288xf32, #tpu.memory_space<vmem>>, vector<27x128xf32>,
    %c0_91 = arith.constant 0 : index
    %c256_92 = arith.constant 256 : index
    %73 = vector.load %arg10[%c0_91, %c256_92] : memref<64x288xf32, #tpu.memory_space<vmem>>, vector<27x32xf32>
    tpu.vector_store %arg10[%c0_91, %c256_92], %68 {strides = array<i32>} : memref<64x288xf32, #tpu.memory_space<vmem>>, vector<27x32xf32>,
    %c0_93 = arith.constant 0 : index
    %c0_94 = arith.constant 0 : index
    %74 = vector.load %arg10[%c0_93, %c0_94] : memref<64x288xf32, #tpu.memory_space<vmem>>, vector<27x288xf32>
    %c0_95 = arith.constant 0 : index
    %c0_96 = arith.constant 0 : index
    %75 = vector.load %arg5[%c0_95, %c0_96] : memref<288x32xf32, #tpu.memory_space<vmem>>, vector<288x32xf32>
    %cst_97 = arith.constant dense<0.000000e+00> : vector<27x32xf32>
    %76 = tpu.matmul %74, %75, %cst_97 {dimension_numbers = #tpu.dot_dimension_numbers<[1], [0], [0], [1], [0, 0, 1, 1], [], []>} : vector<27x288xf32>, vector<288x32xf32>, vector<27x32xf32> -> vector<27x32xf32>
    %77 = vector.broadcast %59 : vector<1x32xf32> to vector<27x32xf32>
    %78 = arith.addf %76, %77 : vector<27x32xf32>
    %cst_98 = arith.constant 0.000000e+00 : f32
    %79 = vector.broadcast %cst_98 : f32 to vector<27x32xf32>
    %80 = arith.maximumf %78, %79 : vector<27x32xf32>
    %81 = vector.extract_strided_slice %80 {offsets = [0, 0], sizes = [3, 32], strides = [1, 1]} : vector<27x32xf32> to vector<3x32xf32>
    %c0_99 = arith.constant 0 : index
    %c0_100 = arith.constant 0 : index
    %82 = vector.load %arg9[%c0_99, %c0_100] : memref<89x32xf32, #tpu.memory_space<vmem>>, vector<3x32xf32>
    tpu.vector_store %arg9[%c0_99, %c0_100], %81 {strides = array<i32>} : memref<89x32xf32, #tpu.memory_space<vmem>>, vector<3x32xf32>,
    %83 = vector.extract_strided_slice %80 {offsets = [9, 0], sizes = [3, 32], strides = [1, 1]} : vector<27x32xf32> to vector<3x32xf32>
    %c3_101 = arith.constant 3 : index
    %c0_102 = arith.constant 0 : index
    %84 = vector.load %arg9[%c3_101, %c0_102] : memref<89x32xf32, #tpu.memory_space<vmem>>, vector<3x32xf32>
    tpu.vector_store %arg9[%c3_101, %c0_102], %83 {strides = array<i32>} : memref<89x32xf32, #tpu.memory_space<vmem>>, vector<3x32xf32>,
    %85 = vector.extract_strided_slice %80 {offsets = [18, 0], sizes = [3, 32], strides = [1, 1]} : vector<27x32xf32> to vector<3x32xf32>
    %c6 = arith.constant 6 : index
    %c0_103 = arith.constant 0 : index
    %86 = vector.load %arg9[%c6, %c0_103] : memref<89x32xf32, #tpu.memory_space<vmem>>, vector<3x32xf32>
    tpu.vector_store %arg9[%c6, %c0_103], %85 {strides = array<i32>} : memref<89x32xf32, #tpu.memory_space<vmem>>, vector<3x32xf32>,
    %c0_104 = arith.constant 0 : index
    %c0_105 = arith.constant 0 : index
    %87 = vector.load %arg9[%c0_104, %c0_105] : memref<89x32xf32, #tpu.memory_space<vmem>>, vector<9x32xf32>
    %88 = tpu.transpose %87, [1, 0] : vector<9x32xf32> -> vector<32x9xf32>
    %c0_106 = arith.constant 0 : index
    %c0_107 = arith.constant 0 : index
    %c0_108 = arith.constant 0 : index
    %89 = vector.load %arg7[%c0_106, %c0_107, %c0_108] : memref<2x32x9xf32, #tpu.memory_space<vmem>>, vector<1x32x9xf32>
    %90 = vector.shape_cast %89 : vector<1x32x9xf32> to vector<32x9xf32>
    %91 = vector.shape_cast %88 : vector<32x9xf32> to vector<1x32x9xf32>
    tpu.vector_store %arg7[%c0_106, %c0_107, %c0_108], %91 {strides = array<i32>} : memref<2x32x9xf32, #tpu.memory_space<vmem>>, vector<1x32x9xf32>,
    %c1_109 = arith.constant 1 : index
    %c0_110 = arith.constant 0 : index
    %c0_111 = arith.constant 0 : index
    %92 = vector.load %arg1[%c1_109, %c0_110, %c0_111] : memref<2x81x40xbf16, #tpu.memory_space<vmem>>, vector<1x81x40xbf16>
    %93 = vector.shape_cast %92 : vector<1x81x40xbf16> to vector<81x40xbf16>
    %94 = arith.extf %93 : vector<81x40xbf16> to vector<81x40xf32>
    %c0_112 = arith.constant 0 : index
    %c0_113 = arith.constant 0 : index
    %95 = vector.load %arg2[%c0_112, %c0_113] : memref<40x32xf32, #tpu.memory_space<vmem>>, vector<40x32xf32>
    %cst_114 = arith.constant dense<0.000000e+00> : vector<81x32xf32>
    %96 = tpu.matmul %94, %95, %cst_114 {dimension_numbers = #tpu.dot_dimension_numbers<[1], [0], [0], [1], [0, 0, 1, 1], [], []>} : vector<81x40xf32>, vector<40x32xf32>, vector<81x32xf32> -> vector<81x32xf32>
    %cst_115 = arith.constant 0.00392156886 : f32
    %97 = vector.broadcast %cst_115 : f32 to vector<81x32xf32>
    %98 = arith.mulf %96, %97 : vector<81x32xf32>
    %c0_116 = arith.constant 0 : index
    %c0_117 = arith.constant 0 : index
    %99 = vector.load %arg6[%c0_116, %c0_117] : memref<4x32xf32, #tpu.memory_space<vmem>>, vector<1x32xf32>
    %100 = vector.broadcast %99 : vector<1x32xf32> to vector<81x32xf32>
    %101 = arith.addf %98, %100 : vector<81x32xf32>
    %cst_118 = arith.constant 0.000000e+00 : f32
    %102 = vector.broadcast %cst_118 : f32 to vector<81x32xf32>
    %103 = arith.maximumf %101, %102 : vector<81x32xf32>
    %c0_119 = arith.constant 0 : index
    %c0_120 = arith.constant 0 : index
    %104 = vector.load %arg8[%c0_119, %c0_120] : memref<89x32xf32, #tpu.memory_space<vmem>>, vector<81x32xf32>
    tpu.vector_store %arg8[%c0_119, %c0_120], %103 {strides = array<i32>} : memref<89x32xf32, #tpu.memory_space<vmem>>, vector<81x32xf32>,
    %c1_121 = arith.constant 1 : index
    %c0_122 = arith.constant 0 : index
    %105 = vector.load %arg6[%c1_121, %c0_122] : memref<4x32xf32, #tpu.memory_space<vmem>>, vector<1x32xf32>
    %c0_123 = arith.constant 0 : index
    %c0_124 = arith.constant 0 : index
    %106 = vector.load %arg8[%c0_123, %c0_124] : memref<89x32xf32, #tpu.memory_space<vmem>>, vector<63x32xf32>
    %c1_125 = arith.constant 1 : index
    %c0_126 = arith.constant 0 : index
    %107 = vector.load %arg8[%c1_125, %c0_126] : memref<89x32xf32, #tpu.memory_space<vmem>>, vector<63x32xf32>
    %c2_127 = arith.constant 2 : index
    %c0_128 = arith.constant 0 : index
    %108 = vector.load %arg8[%c2_127, %c0_128] : memref<89x32xf32, #tpu.memory_space<vmem>>, vector<63x32xf32>
    %c9_129 = arith.constant 9 : index
    %c0_130 = arith.constant 0 : index
    %109 = vector.load %arg8[%c9_129, %c0_130] : memref<89x32xf32, #tpu.memory_space<vmem>>, vector<63x32xf32>
    %c10_131 = arith.constant 10 : index
    %c0_132 = arith.constant 0 : index
    %110 = vector.load %arg8[%c10_131, %c0_132] : memref<89x32xf32, #tpu.memory_space<vmem>>, vector<63x32xf32>
    %c11_133 = arith.constant 11 : index
    %c0_134 = arith.constant 0 : index
    %111 = vector.load %arg8[%c11_133, %c0_134] : memref<89x32xf32, #tpu.memory_space<vmem>>, vector<63x32xf32>
    %c18_135 = arith.constant 18 : index
    %c0_136 = arith.constant 0 : index
    %112 = vector.load %arg8[%c18_135, %c0_136] : memref<89x32xf32, #tpu.memory_space<vmem>>, vector<63x32xf32>
    %c19_137 = arith.constant 19 : index
    %c0_138 = arith.constant 0 : index
    %113 = vector.load %arg8[%c19_137, %c0_138] : memref<89x32xf32, #tpu.memory_space<vmem>>, vector<63x32xf32>
    %c20_139 = arith.constant 20 : index
    %c0_140 = arith.constant 0 : index
    %114 = vector.load %arg8[%c20_139, %c0_140] : memref<89x32xf32, #tpu.memory_space<vmem>>, vector<63x32xf32>
    %115 = tpu.concatenate %106, %107, %108, %109 in 1 : vector<63x32xf32>, vector<63x32xf32>, vector<63x32xf32>, vector<63x32xf32> -> vector<63x128xf32>
    %c0_141 = arith.constant 0 : index
    %c0_142 = arith.constant 0 : index
    %116 = vector.load %arg10[%c0_141, %c0_142] : memref<64x288xf32, #tpu.memory_space<vmem>>, vector<63x128xf32>
    tpu.vector_store %arg10[%c0_141, %c0_142], %115 {strides = array<i32>} : memref<64x288xf32, #tpu.memory_space<vmem>>, vector<63x128xf32>,
    %117 = tpu.concatenate %110, %111, %112, %113 in 1 : vector<63x32xf32>, vector<63x32xf32>, vector<63x32xf32>, vector<63x32xf32> -> vector<63x128xf32>
    %c0_143 = arith.constant 0 : index
    %c128_144 = arith.constant 128 : index
    %118 = vector.load %arg10[%c0_143, %c128_144] : memref<64x288xf32, #tpu.memory_space<vmem>>, vector<63x128xf32>
    tpu.vector_store %arg10[%c0_143, %c128_144], %117 {strides = array<i32>} : memref<64x288xf32, #tpu.memory_space<vmem>>, vector<63x128xf32>,
    %c0_145 = arith.constant 0 : index
    %c256_146 = arith.constant 256 : index
    %119 = vector.load %arg10[%c0_145, %c256_146] : memref<64x288xf32, #tpu.memory_space<vmem>>, vector<63x32xf32>
    tpu.vector_store %arg10[%c0_145, %c256_146], %114 {strides = array<i32>} : memref<64x288xf32, #tpu.memory_space<vmem>>, vector<63x32xf32>,
    %c0_147 = arith.constant 0 : index
    %c0_148 = arith.constant 0 : index
    %120 = vector.load %arg10[%c0_147, %c0_148] : memref<64x288xf32, #tpu.memory_space<vmem>>, vector<63x288xf32>
    %c0_149 = arith.constant 0 : index
    %c0_150 = arith.constant 0 : index
    %121 = vector.load %arg3[%c0_149, %c0_150] : memref<288x32xf32, #tpu.memory_space<vmem>>, vector<288x32xf32>
    %cst_151 = arith.constant dense<0.000000e+00> : vector<63x32xf32>
    %122 = tpu.matmul %120, %121, %cst_151 {dimension_numbers = #tpu.dot_dimension_numbers<[1], [0], [0], [1], [0, 0, 1, 1], [], []>} : vector<63x288xf32>, vector<288x32xf32>, vector<63x32xf32> -> vector<63x32xf32>
    %123 = vector.broadcast %105 : vector<1x32xf32> to vector<63x32xf32>
    %124 = arith.addf %122, %123 : vector<63x32xf32>
    %cst_152 = arith.constant 0.000000e+00 : f32
    %125 = vector.broadcast %cst_152 : f32 to vector<63x32xf32>
    %126 = arith.maximumf %124, %125 : vector<63x32xf32>
    %c0_153 = arith.constant 0 : index
    %c0_154 = arith.constant 0 : index
    %127 = vector.load %arg9[%c0_153, %c0_154] : memref<89x32xf32, #tpu.memory_space<vmem>>, vector<63x32xf32>
    tpu.vector_store %arg9[%c0_153, %c0_154], %126 {strides = array<i32>} : memref<89x32xf32, #tpu.memory_space<vmem>>, vector<63x32xf32>,
    %c2_155 = arith.constant 2 : index
    %c0_156 = arith.constant 0 : index
    %128 = vector.load %arg6[%c2_155, %c0_156] : memref<4x32xf32, #tpu.memory_space<vmem>>, vector<1x32xf32>
    %c0_157 = arith.constant 0 : index
    %c0_158 = arith.constant 0 : index
    %129 = vector.load %arg9[%c0_157, %c0_158] : memref<89x32xf32, #tpu.memory_space<vmem>>, vector<45x32xf32>
    %c1_159 = arith.constant 1 : index
    %c0_160 = arith.constant 0 : index
    %130 = vector.load %arg9[%c1_159, %c0_160] : memref<89x32xf32, #tpu.memory_space<vmem>>, vector<45x32xf32>
    %c2_161 = arith.constant 2 : index
    %c0_162 = arith.constant 0 : index
    %131 = vector.load %arg9[%c2_161, %c0_162] : memref<89x32xf32, #tpu.memory_space<vmem>>, vector<45x32xf32>
    %c9_163 = arith.constant 9 : index
    %c0_164 = arith.constant 0 : index
    %132 = vector.load %arg9[%c9_163, %c0_164] : memref<89x32xf32, #tpu.memory_space<vmem>>, vector<45x32xf32>
    %c10_165 = arith.constant 10 : index
    %c0_166 = arith.constant 0 : index
    %133 = vector.load %arg9[%c10_165, %c0_166] : memref<89x32xf32, #tpu.memory_space<vmem>>, vector<45x32xf32>
    %c11_167 = arith.constant 11 : index
    %c0_168 = arith.constant 0 : index
    %134 = vector.load %arg9[%c11_167, %c0_168] : memref<89x32xf32, #tpu.memory_space<vmem>>, vector<45x32xf32>
    %c18_169 = arith.constant 18 : index
    %c0_170 = arith.constant 0 : index
    %135 = vector.load %arg9[%c18_169, %c0_170] : memref<89x32xf32, #tpu.memory_space<vmem>>, vector<45x32xf32>
    %c19_171 = arith.constant 19 : index
    %c0_172 = arith.constant 0 : index
    %136 = vector.load %arg9[%c19_171, %c0_172] : memref<89x32xf32, #tpu.memory_space<vmem>>, vector<45x32xf32>
    %c20_173 = arith.constant 20 : index
    %c0_174 = arith.constant 0 : index
    %137 = vector.load %arg9[%c20_173, %c0_174] : memref<89x32xf32, #tpu.memory_space<vmem>>, vector<45x32xf32>
    %138 = tpu.concatenate %129, %130, %131, %132 in 1 : vector<45x32xf32>, vector<45x32xf32>, vector<45x32xf32>, vector<45x32xf32> -> vector<45x128xf32>
    %c0_175 = arith.constant 0 : index
    %c0_176 = arith.constant 0 : index
    %139 = vector.load %arg10[%c0_175, %c0_176] : memref<64x288xf32, #tpu.memory_space<vmem>>, vector<45x128xf32>
    tpu.vector_store %arg10[%c0_175, %c0_176], %138 {strides = array<i32>} : memref<64x288xf32, #tpu.memory_space<vmem>>, vector<45x128xf32>,
    %140 = tpu.concatenate %133, %134, %135, %136 in 1 : vector<45x32xf32>, vector<45x32xf32>, vector<45x32xf32>, vector<45x32xf32> -> vector<45x128xf32>
    %c0_177 = arith.constant 0 : index
    %c128_178 = arith.constant 128 : index
    %141 = vector.load %arg10[%c0_177, %c128_178] : memref<64x288xf32, #tpu.memory_space<vmem>>, vector<45x128xf32>
    tpu.vector_store %arg10[%c0_177, %c128_178], %140 {strides = array<i32>} : memref<64x288xf32, #tpu.memory_space<vmem>>, vector<45x128xf32>,
    %c0_179 = arith.constant 0 : index
    %c256_180 = arith.constant 256 : index
    %142 = vector.load %arg10[%c0_179, %c256_180] : memref<64x288xf32, #tpu.memory_space<vmem>>, vector<45x32xf32>
    tpu.vector_store %arg10[%c0_179, %c256_180], %137 {strides = array<i32>} : memref<64x288xf32, #tpu.memory_space<vmem>>, vector<45x32xf32>,
    %c0_181 = arith.constant 0 : index
    %c0_182 = arith.constant 0 : index
    %143 = vector.load %arg10[%c0_181, %c0_182] : memref<64x288xf32, #tpu.memory_space<vmem>>, vector<45x288xf32>
    %c0_183 = arith.constant 0 : index
    %c0_184 = arith.constant 0 : index
    %144 = vector.load %arg4[%c0_183, %c0_184] : memref<288x32xf32, #tpu.memory_space<vmem>>, vector<288x32xf32>
    %cst_185 = arith.constant dense<0.000000e+00> : vector<45x32xf32>
    %145 = tpu.matmul %143, %144, %cst_185 {dimension_numbers = #tpu.dot_dimension_numbers<[1], [0], [0], [1], [0, 0, 1, 1], [], []>} : vector<45x288xf32>, vector<288x32xf32>, vector<45x32xf32> -> vector<45x32xf32>
    %146 = vector.broadcast %128 : vector<1x32xf32> to vector<45x32xf32>
    %147 = arith.addf %145, %146 : vector<45x32xf32>
    %cst_186 = arith.constant 0.000000e+00 : f32
    %148 = vector.broadcast %cst_186 : f32 to vector<45x32xf32>
    %149 = arith.maximumf %147, %148 : vector<45x32xf32>
    %c0_187 = arith.constant 0 : index
    %c0_188 = arith.constant 0 : index
    %150 = vector.load %arg8[%c0_187, %c0_188] : memref<89x32xf32, #tpu.memory_space<vmem>>, vector<45x32xf32>
    tpu.vector_store %arg8[%c0_187, %c0_188], %149 {strides = array<i32>} : memref<89x32xf32, #tpu.memory_space<vmem>>, vector<45x32xf32>,
    %c3_189 = arith.constant 3 : index
    %c0_190 = arith.constant 0 : index
    %151 = vector.load %arg6[%c3_189, %c0_190] : memref<4x32xf32, #tpu.memory_space<vmem>>, vector<1x32xf32>
    %c0_191 = arith.constant 0 : index
    %c0_192 = arith.constant 0 : index
    %152 = vector.load %arg8[%c0_191, %c0_192] : memref<89x32xf32, #tpu.memory_space<vmem>>, vector<27x32xf32>
    %c1_193 = arith.constant 1 : index
    %c0_194 = arith.constant 0 : index
    %153 = vector.load %arg8[%c1_193, %c0_194] : memref<89x32xf32, #tpu.memory_space<vmem>>, vector<27x32xf32>
    %c2_195 = arith.constant 2 : index
    %c0_196 = arith.constant 0 : index
    %154 = vector.load %arg8[%c2_195, %c0_196] : memref<89x32xf32, #tpu.memory_space<vmem>>, vector<27x32xf32>
    %c9_197 = arith.constant 9 : index
    %c0_198 = arith.constant 0 : index
    %155 = vector.load %arg8[%c9_197, %c0_198] : memref<89x32xf32, #tpu.memory_space<vmem>>, vector<27x32xf32>
    %c10_199 = arith.constant 10 : index
    %c0_200 = arith.constant 0 : index
    %156 = vector.load %arg8[%c10_199, %c0_200] : memref<89x32xf32, #tpu.memory_space<vmem>>, vector<27x32xf32>
    %c11_201 = arith.constant 11 : index
    %c0_202 = arith.constant 0 : index
    %157 = vector.load %arg8[%c11_201, %c0_202] : memref<89x32xf32, #tpu.memory_space<vmem>>, vector<27x32xf32>
    %c18_203 = arith.constant 18 : index
    %c0_204 = arith.constant 0 : index
    %158 = vector.load %arg8[%c18_203, %c0_204] : memref<89x32xf32, #tpu.memory_space<vmem>>, vector<27x32xf32>
    %c19_205 = arith.constant 19 : index
    %c0_206 = arith.constant 0 : index
    %159 = vector.load %arg8[%c19_205, %c0_206] : memref<89x32xf32, #tpu.memory_space<vmem>>, vector<27x32xf32>
    %c20_207 = arith.constant 20 : index
    %c0_208 = arith.constant 0 : index
    %160 = vector.load %arg8[%c20_207, %c0_208] : memref<89x32xf32, #tpu.memory_space<vmem>>, vector<27x32xf32>
    %161 = tpu.concatenate %152, %153, %154, %155 in 1 : vector<27x32xf32>, vector<27x32xf32>, vector<27x32xf32>, vector<27x32xf32> -> vector<27x128xf32>
    %c0_209 = arith.constant 0 : index
    %c0_210 = arith.constant 0 : index
    %162 = vector.load %arg10[%c0_209, %c0_210] : memref<64x288xf32, #tpu.memory_space<vmem>>, vector<27x128xf32>
    tpu.vector_store %arg10[%c0_209, %c0_210], %161 {strides = array<i32>} : memref<64x288xf32, #tpu.memory_space<vmem>>, vector<27x128xf32>,
    %163 = tpu.concatenate %156, %157, %158, %159 in 1 : vector<27x32xf32>, vector<27x32xf32>, vector<27x32xf32>, vector<27x32xf32> -> vector<27x128xf32>
    %c0_211 = arith.constant 0 : index
    %c128_212 = arith.constant 128 : index
    %164 = vector.load %arg10[%c0_211, %c128_212] : memref<64x288xf32, #tpu.memory_space<vmem>>, vector<27x128xf32>
    tpu.vector_store %arg10[%c0_211, %c128_212], %163 {strides = array<i32>} : memref<64x288xf32, #tpu.memory_space<vmem>>, vector<27x128xf32>,
    %c0_213 = arith.constant 0 : index
    %c256_214 = arith.constant 256 : index
    %165 = vector.load %arg10[%c0_213, %c256_214] : memref<64x288xf32, #tpu.memory_space<vmem>>, vector<27x32xf32>
    tpu.vector_store %arg10[%c0_213, %c256_214], %160 {strides = array<i32>} : memref<64x288xf32, #tpu.memory_space<vmem>>, vector<27x32xf32>,
    %c0_215 = arith.constant 0 : index
    %c0_216 = arith.constant 0 : index
    %166 = vector.load %arg10[%c0_215, %c0_216] : memref<64x288xf32, #tpu.memory_space<vmem>>, vector<27x288xf32>
    %c0_217 = arith.constant 0 : index
    %c0_218 = arith.constant 0 : index
    %167 = vector.load %arg5[%c0_217, %c0_218] : memref<288x32xf32, #tpu.memory_space<vmem>>, vector<288x32xf32>
    %cst_219 = arith.constant dense<0.000000e+00> : vector<27x32xf32>
    %168 = tpu.matmul %166, %167, %cst_219 {dimension_numbers = #tpu.dot_dimension_numbers<[1], [0], [0], [1], [0, 0, 1, 1], [], []>} : vector<27x288xf32>, vector<288x32xf32>, vector<27x32xf32> -> vector<27x32xf32>
    %169 = vector.broadcast %151 : vector<1x32xf32> to vector<27x32xf32>
    %170 = arith.addf %168, %169 : vector<27x32xf32>
    %cst_220 = arith.constant 0.000000e+00 : f32
    %171 = vector.broadcast %cst_220 : f32 to vector<27x32xf32>
    %172 = arith.maximumf %170, %171 : vector<27x32xf32>
    %173 = vector.extract_strided_slice %172 {offsets = [0, 0], sizes = [3, 32], strides = [1, 1]} : vector<27x32xf32> to vector<3x32xf32>
    %c0_221 = arith.constant 0 : index
    %c0_222 = arith.constant 0 : index
    %174 = vector.load %arg9[%c0_221, %c0_222] : memref<89x32xf32, #tpu.memory_space<vmem>>, vector<3x32xf32>
    tpu.vector_store %arg9[%c0_221, %c0_222], %173 {strides = array<i32>} : memref<89x32xf32, #tpu.memory_space<vmem>>, vector<3x32xf32>,
    %175 = vector.extract_strided_slice %172 {offsets = [9, 0], sizes = [3, 32], strides = [1, 1]} : vector<27x32xf32> to vector<3x32xf32>
    %c3_223 = arith.constant 3 : index
    %c0_224 = arith.constant 0 : index
    %176 = vector.load %arg9[%c3_223, %c0_224] : memref<89x32xf32, #tpu.memory_space<vmem>>, vector<3x32xf32>
    tpu.vector_store %arg9[%c3_223, %c0_224], %175 {strides = array<i32>} : memref<89x32xf32, #tpu.memory_space<vmem>>, vector<3x32xf32>,
    %177 = vector.extract_strided_slice %172 {offsets = [18, 0], sizes = [3, 32], strides = [1, 1]} : vector<27x32xf32> to vector<3x32xf32>
    %c6_225 = arith.constant 6 : index
    %c0_226 = arith.constant 0 : index
    %178 = vector.load %arg9[%c6_225, %c0_226] : memref<89x32xf32, #tpu.memory_space<vmem>>, vector<3x32xf32>
    tpu.vector_store %arg9[%c6_225, %c0_226], %177 {strides = array<i32>} : memref<89x32xf32, #tpu.memory_space<vmem>>, vector<3x32xf32>,
    %c0_227 = arith.constant 0 : index
    %c0_228 = arith.constant 0 : index
    %179 = vector.load %arg9[%c0_227, %c0_228] : memref<89x32xf32, #tpu.memory_space<vmem>>, vector<9x32xf32>
    %180 = tpu.transpose %179, [1, 0] : vector<9x32xf32> -> vector<32x9xf32>
    %c1_229 = arith.constant 1 : index
    %c0_230 = arith.constant 0 : index
    %c0_231 = arith.constant 0 : index
    %181 = vector.load %arg7[%c1_229, %c0_230, %c0_231] : memref<2x32x9xf32, #tpu.memory_space<vmem>>, vector<1x32x9xf32>
    %182 = vector.shape_cast %181 : vector<1x32x9xf32> to vector<32x9xf32>
    %183 = vector.shape_cast %180 : vector<32x9xf32> to vector<1x32x9xf32>
    tpu.vector_store %arg7[%c1_229, %c0_230, %c0_231], %183 {strides = array<i32>} : memref<2x32x9xf32, #tpu.memory_space<vmem>>, vector<1x32x9xf32>,
    return
  }
  func.func @transform_0(%arg0: i32) -> (i32, i32, i32) {
    %c0_i32 = arith.constant 0 : i32
    %c0_i32_0 = arith.constant 0 : i32
    %c0_i32_1 = arith.constant 0 : i32
    return %arg0, %c0_i32, %c0_i32_0 : i32, i32, i32
  }
  func.func @transform_1(%arg0: i32) -> (i32, i32) {
    %c0_i32 = arith.constant 0 : i32
    %c0_i32_0 = arith.constant 0 : i32
    %c0_i32_1 = arith.constant 0 : i32
    return %c0_i32, %c0_i32_0 : i32, i32
  }
  func.func @transform_2(%arg0: i32) -> (i32, i32) {
    %c0_i32 = arith.constant 0 : i32
    %c0_i32_0 = arith.constant 0 : i32
    %c0_i32_1 = arith.constant 0 : i32
    return %c0_i32, %c0_i32_0 : i32, i32
  }
  func.func @transform_3(%arg0: i32) -> (i32, i32) {
    %c0_i32 = arith.constant 0 : i32
    %c0_i32_0 = arith.constant 0 : i32
    %c0_i32_1 = arith.constant 0 : i32
    return %c0_i32, %c0_i32_0 : i32, i32
  }
  func.func @transform_4(%arg0: i32) -> (i32, i32) {
    %c0_i32 = arith.constant 0 : i32
    %c0_i32_0 = arith.constant 0 : i32
    %c0_i32_1 = arith.constant 0 : i32
    return %c0_i32, %c0_i32_0 : i32, i32
  }
  func.func @transform_5(%arg0: i32) -> (i32, i32) {
    %c0_i32 = arith.constant 0 : i32
    %c0_i32_0 = arith.constant 0 : i32
    %c0_i32_1 = arith.constant 0 : i32
    return %c0_i32, %c0_i32_0 : i32, i32
  }
  func.func @transform_6(%arg0: i32) -> (i32, i32, i32) {
    %c0_i32 = arith.constant 0 : i32
    %c0_i32_0 = arith.constant 0 : i32
    %c0_i32_1 = arith.constant 0 : i32
    return %arg0, %c0_i32, %c0_i32_0 : i32, i32, i32
  }
}

</mosaic_0001>

<llo_original>
// kernel: encoder_forward.1
$region0: #{encoder_forward.1}
  #allocation0 [shape = 'u32[]', space=smem, size = 0x4, offset = 0x4, fixed_abs, tag = 'smem constant byte address 0x4 - core index']
  #allocation1 [shape = 'u32[144,128]{1,0:T(1,128)}', space=vmem, size = 0x12000, scoped, tag = 'internal scratch']
  #allocation2 [shape = 'f32[89,32]{1,0:T(8,128)}', space=vmem, size = 0xc000, scoped, tag = 'scratch operand']
  #allocation3 [shape = 'f32[89,32]{1,0:T(8,128)}', space=vmem, size = 0xc000, scoped, tag = 'scratch operand']
  #allocation4 [shape = 'f32[64,288]{1,0:T(8,128)}', space=vmem, size = 0x18000, scoped, tag = 'scratch operand']
  %s0 = inlined_call_operand.vmem [shape: bf16[4,81,40], index: 0, kind: input, shape index: {}]
  %s1 = inlined_call_operand.vmem [shape: f32[40,32], index: 1, kind: input, shape index: {}]
  %s2 = inlined_call_operand.vmem [shape: f32[288,32], index: 2, kind: input, shape index: {}]
  %s3 = inlined_call_operand.vmem [shape: f32[288,32], index: 3, kind: input, shape index: {}]
  %s4 = inlined_call_operand.vmem [shape: f32[288,32], index: 4, kind: input, shape index: {}]
  %s5 = inlined_call_operand.vmem [shape: f32[4,32], index: 5, kind: input, shape index: {}]
  %s6 = inlined_call_operand.vmem [shape: f32[4,32,9], index: 6, kind: output, shape index: {}]
  %s7 = sld [smem:[#allocation0]]
  $region57: #{encoder_forward.1} parent=0
    _
  %s9 = ssub.s32 1, %s7
  %s10 = scalar_select 0, %s9, %s7
  loop: start=0, step=1, limit=4
  $region2: #{encoder_forward.1} parent=0 // loop_pre_header
    _
  $region3: #{encoder_forward.1} parent=0 // loop_header
    %s12 = sphi 0, %s16
    %p13 = scmp.ge.s32.totalorder %s12, 4
    %s22 = sphi 0, %s24
    %s25 = sphi 0, %s22
    %s26 = sphi 0, %s25
    %s42 = sphi 0, %s26
    %s46 = sphi 0, %s46
    %s48 = sphi 0, %s46
    %s49 = sphi 0, %s48
    %s63 = sphi 0, %s49
    %s67 = sphi 0, %s67
    %s69 = sphi 0, %s67
    %s70 = sphi 0, %s69
    %s84 = sphi 0, %s70
    %s88 = sphi 0, %s88
    %s90 = sphi 0, %s88
    %s91 = sphi 0, %s90
    %s105 = sphi 0, %s91
    %s109 = sphi 0, %s109
    %s111 = sphi 0, %s109
    %s112 = sphi 0, %s111
    %s126 = sphi 0, %s112
    %s130 = sphi 0, %s130
    %s132 = sphi 0, %s130
    %s133 = sphi 0, %s132
    %s147 = sphi 0, %s133
    %s153 = sphi 0, %s155
    %s156 = sphi 0, %s153
    %s157 = sphi 0, %s156
    %s173 = sphi 0, %s157
  $region4: #{encoder_forward.1} parent=0 // loop_header_branch
    %15 = sbr.rel (%p13) target = $region8
  $region5: #{encoder_forward.1} parent=0 // loop_body
    %s17 = ssub.s32 %s12, 1
    %s18 = ssub.s32 %s12, 2
    %s19 = sadd.s32 %s12, 1
    %s20 = ssub.s32 %s12, %s19
    %p21 = scmp.eq.s32.totalorder %s20, 0
    %s23 = sadd.s32 %s22, 1
    %s24 = scalar_select %p21, %s22, %s23
    %p27 = pneg %p21
    %p28 = scmp.eq.s32.totalorder %s12, 1
    %p29 = por %p27, %p28
    %p30 = scmp.ne.s32.totalorder %s22, %s25
    %p31 = scmp.eq.s32.totalorder %s12, 0
    %p32 = por %p30, %p31
    %p33 = scmp.ne.s32.totalorder %s22, %s25
    %p34 = scmp.eq.s32.totalorder %s17, 1
    %p35 = por %p33, %p34
    %p36 = scmp.ne.s32.totalorder %s25, %s26
    %p37 = scmp.eq.s32.totalorder %s17, 0
    %p38 = por %p36, %p37
    %p39 = scmp.ne.s32.totalorder %s25, %s26
    %p40 = scmp.eq.s32.totalorder %s18, 1
    %p41 = por %p39, %p40
    %p43 = scmp.ne.s32.totalorder %s26, %s42
    %p44 = scmp.eq.s32.totalorder %s18, 0
    %p45 = por %p43, %p44
    %s47 = sadd.s32 %s46, 1
    %p50 = scmp.eq.s32.totalorder %s12, 1
    %p51 = scmp.ne.s32.totalorder %s46, %s48
    %p52 = scmp.eq.s32.totalorder %s12, 0
    %p53 = por %p51, %p52
    %p54 = scmp.ne.s32.totalorder %s46, %s48
    %p55 = scmp.eq.s32.totalorder %s17, 1
    %p56 = por %p54, %p55
    %p57 = scmp.ne.s32.totalorder %s48, %s49
    %p58 = scmp.eq.s32.totalorder %s17, 0
    %p59 = por %p57, %p58
    %p60 = scmp.ne.s32.totalorder %s48, %s49
    %p61 = scmp.eq.s32.totalorder %s18, 1
    %p62 = por %p60, %p61
    %p64 = scmp.ne.s32.totalorder %s49, %s63
    %p65 = scmp.eq.s32.totalorder %s18, 0
    %p66 = por %p64, %p65
    %s68 = sadd.s32 %s67, 1
    %p71 = scmp.eq.s32.totalorder %s12, 1
    %p72 = scmp.ne.s32.totalorder %s67, %s69
    %p73 = scmp.eq.s32.totalorder %s12, 0
    %p74 = por %p72, %p73
    %p75 = scmp.ne.s32.totalorder %s67, %s69
    %p76 = scmp.eq.s32.totalorder %s17, 1
    %p77 = por %p75, %p76
    %p78 = scmp.ne.s32.totalorder %s69, %s70
    %p79 = scmp.eq.s32.totalorder %s17, 0
    %p80 = por %p78, %p79
    %p81 = scmp.ne.s32.totalorder %s69, %s70
    %p82 = scmp.eq.s32.totalorder %s18, 1
    %p83 = por %p81, %p82
    %p85 = scmp.ne.s32.totalorder %s70, %s84
    %p86 = scmp.eq.s32.totalorder %s18, 0
    %p87 = por %p85, %p86
    %s89 = sadd.s32 %s88, 1
    %p92 = scmp.eq.s32.totalorder %s12, 1
    %p93 = scmp.ne.s32.totalorder %s88, %s90
    %p94 = scmp.eq.s32.totalorder %s12, 0
    %p95 = por %p93, %p94
    %p96 = scmp.ne.s32.totalorder %s88, %s90
    %p97 = scmp.eq.s32.totalorder %s17, 1
    %p98 = por %p96, %p97
    %p99 = scmp.ne.s32.totalorder %s90, %s91
    %p100 = scmp.eq.s32.totalorder %s17, 0
    %p101 = por %p99, %p100
    %p102 = scmp.ne.s32.totalorder %s90, %s91
    %p103 = scmp.eq.s32.totalorder %s18, 1
    %p104 = por %p102, %p103
    %p106 = scmp.ne.s32.totalorder %s91, %s105
    %p107 = scmp.eq.s32.totalorder %s18, 0
    %p108 = por %p106, %p107
    %s110 = sadd.s32 %s109, 1
    %p113 = scmp.eq.s32.totalorder %s12, 1
    %p114 = scmp.ne.s32.totalorder %s109, %s111
    %p115 = scmp.eq.s32.totalorder %s12, 0
    %p116 = por %p114, %p115
    %p117 = scmp.ne.s32.totalorder %s109, %s111
    %p118 = scmp.eq.s32.totalorder %s17, 1
    %p119 = por %p117, %p118
    %p120 = scmp.ne.s32.totalorder %s111, %s112
    %p121 = scmp.eq.s32.totalorder %s17, 0
    %p122 = por %p120, %p121
    %p123 = scmp.ne.s32.totalorder %s111, %s112
    %p124 = scmp.eq.s32.totalorder %s18, 1
    %p125 = por %p123, %p124
    %p127 = scmp.ne.s32.totalorder %s112, %s126
    %p128 = scmp.eq.s32.totalorder %s18, 0
    %p129 = por %p127, %p128
    %s131 = sadd.s32 %s130, 1
    %p134 = scmp.eq.s32.totalorder %s12, 1
    %p135 = scmp.ne.s32.totalorder %s130, %s132
    %p136 = scmp.eq.s32.totalorder %s12, 0
    %p137 = por %p135, %p136
    %p138 = scmp.ne.s32.totalorder %s130, %s132
    %p139 = scmp.eq.s32.totalorder %s17, 1
    %p140 = por %p138, %p139
    %p141 = scmp.ne.s32.totalorder %s132, %s133
    %p142 = scmp.eq.s32.totalorder %s17, 0
    %p143 = por %p141, %p142
    %p144 = scmp.ne.s32.totalorder %s132, %s133
    %p145 = scmp.eq.s32.totalorder %s18, 1
    %p146 = por %p144, %p145
    %p148 = scmp.ne.s32.totalorder %s133, %s147
    %p149 = scmp.eq.s32.totalorder %s18, 0
    %p150 = por %p148, %p149
    %s151 = ssub.s32 %s12, %s19
    %p152 = scmp.eq.s32.totalorder %s151, 0
    %s154 = sadd.s32 %s153, 1
    %s155 = scalar_select %p152, %s153, %s154
    %p158 = pneg %p152
    %p159 = scmp.eq.s32.totalorder %s12, 1
    %p160 = por %p158, %p159
    %p161 = scmp.ne.s32.totalorder %s153, %s156
    %p162 = scmp.eq.s32.totalorder %s12, 0
    %p163 = por %p161, %p162
    %p164 = scmp.ne.s32.totalorder %s153, %s156
    %p165 = scmp.eq.s32.totalorder %s17, 1
    %p166 = por %p164, %p165
    %p167 = scmp.ne.s32.totalorder %s156, %s157
    %p168 = scmp.eq.s32.totalorder %s17, 0
    %p169 = por %p167, %p168
    %p170 = scmp.ne.s32.totalorder %s156, %s157
    %p171 = scmp.eq.s32.totalorder %s18, 1
    %p172 = por %p170, %p171
    %p174 = scmp.ne.s32.totalorder %s157, %s173
    %p175 = scmp.eq.s32.totalorder %s18, 0
    %p176 = por %p174, %p175
    %p177 = scmp.le.s32.totalorder 1, %s12
    %p178 = scmp.lt.s32.totalorder %s12, 3
    %p179 = pnand %p177, %p178
    %p180 = pneg %p179
    // Predicated region
    $region9: #{encoder_forward.1} parent=5 // pred_check
      _
    $region10: #{encoder_forward.1} parent=5 // pred_check_branch
      %182 = sbr.rel (%p179) target = $region12
    $region11: #{encoder_forward.1} parent=5 // pred_region
      %s183 = ssub.s32 %s12, 1
      // Predicated region
      $region13: #{encoder_forward.1} parent=11 // pred_check
        %p184 = pneg %p59
      $region14: #{encoder_forward.1} parent=11 // pred_check_branch
        %186 = sbr.rel (%p184) target = $region16
      $region15: #{encoder_forward.1} parent=11 // pred_region
        _
      $region16: #{encoder_forward.1} parent=11 // pred_fallthru
        _
      // Predicated region
      $region17: #{encoder_forward.1} parent=11 // pred_check
        %p187 = pneg %p80
      $region18: #{encoder_forward.1} parent=11 // pred_check_branch
        %189 = sbr.rel (%p187) target = $region20
      $region19: #{encoder_forward.1} parent=11 // pred_region
        _
      $region20: #{encoder_forward.1} parent=11 // pred_fallthru
        _
      // Predicated region
      $region21: #{encoder_forward.1} parent=11 // pred_check
        %p190 = pneg %p101
      $region22: #{encoder_forward.1} parent=11 // pred_check_branch
        %192 = sbr.rel (%p190) target = $region24
      $region23: #{encoder_forward.1} parent=11 // pred_region
        _
      $region24: #{encoder_forward.1} parent=11 // pred_fallthru
        _
      // Predicated region
      $region25: #{encoder_forward.1} parent=11 // pred_check
        %p193 = pneg %p122
      $region26: #{encoder_forward.1} parent=11 // pred_check_branch
        %195 = sbr.rel (%p193) target = $region28
      $region27: #{encoder_forward.1} parent=11 // pred_region
        _
      $region28: #{encoder_forward.1} parent=11 // pred_fallthru
        _
      // Predicated region
      $region29: #{encoder_forward.1} parent=11 // pred_check
        %p196 = pneg %p143
      $region30: #{encoder_forward.1} parent=11 // pred_check_branch
        %198 = sbr.rel (%p196) target = $region32
      $region31: #{encoder_forward.1} parent=11 // pred_region
        _
      $region32: #{encoder_forward.1} parent=11 // pred_fallthru
        _
    $region12: #{encoder_forward.1} parent=5 // pred_fallthru
      _
    %p199 = scmp.lt.s32.totalorder %s12, 2
    // Predicated region
    $region33: #{encoder_forward.1} parent=5 // pred_check
      %p200 = pneg %p199
    $region34: #{encoder_forward.1} parent=5 // pred_check_branch
      %202 = sbr.rel (%p200) target = $region36
    $region35: #{encoder_forward.1} parent=5 // pred_region
      // Predicated region
      $region37: #{encoder_forward.1} parent=35 // pred_check
        %p203 = pneg %p32
      $region38: #{encoder_forward.1} parent=35 // pred_check_branch
        %205 = sbr.rel (%p203) target = $region40
      $region39: #{encoder_forward.1} parent=35 // pred_region
        %s206 = smul.u32 2, %s12
        %p207 = scmp.lt.s32.totalorder %s206, 3
        %s208 = scalar_select %p207, %s206, 3
        %s209 = smul.addr %s208, 11
        %s210 = smul.addr %s209, 4
        %s211 = scalar_lea.vmem %s0, %s210
        %s212 = smul.u32 2, %s12
      $region40: #{encoder_forward.1} parent=35 // pred_fallthru
        _
    $region36: #{encoder_forward.1} parent=5 // pred_fallthru
      _
    %p213 = scmp.le.s32.totalorder 1, %s12
    %p214 = scmp.lt.s32.totalorder %s12, 3
    %p215 = pnand %p213, %p214
    %p216 = pneg %p215
    // Predicated region
    $region41: #{encoder_forward.1} parent=5 // pred_check
      _
    $region42: #{encoder_forward.1} parent=5 // pred_check_branch
      %218 = sbr.rel (%p215) target = $region44
    $region43: #{encoder_forward.1} parent=5 // pred_region
      %s219 = ssub.s32 %s12, 1
      %s220 = smul.u32 2, %s17
      %p221 = scmp.lt.s32.totalorder %s220, 3
      %s222 = scalar_select %p221, %s220, 3
      %s223 = smul.addr %s222, 11
      %s224 = smul.addr %s223, 4
      %s225 = scalar_lea.vmem %s0, %s224
      %p226 = pneg %p38
      %p227 = pneg %p35
      %p228 = pneg %p59
      %p229 = pneg %p56
      %p230 = pneg %p80
      %p231 = pneg %p77
      %p232 = pneg %p101
      %p233 = pneg %p98
      %p234 = pneg %p122
      %p235 = pneg %p119
      %p236 = pneg %p143
      %p237 = pneg %p140
      %p238 = pneg %p169
      %p239 = pneg %p166
      %s240 = smul.u32 2, %s17
      %p241 = scmp.lt.s32.totalorder %s240, 3
      %s242 = scalar_select %p241, %s240, 3
      %s243 = smul.addr %s242, 4
      %s244 = smul.addr %s243, 8
      %s245 = scalar_lea.vmem %s6, %s244
      %s246 = smul.u32 2, %s17
      %p247 = scmp.lt.s32.totalorder %s246, 3
      %s248 = scalar_select %p247, %s246, 3
      %s249 = smul.addr %s248, 11
      %s250 = smul.addr %s249, 4
      %s251 = scalar_lea.vmem %s0, %s250
      %s252 = smul.u32 2, %s17
      %s253 = smul.u32 2, %s17
      %p254 = scmp.lt.s32.totalorder %s253, 3
      %s255 = scalar_select %p254, %s253, 3
      %s256 = smul.addr %s255, 4
      %s257 = smul.addr %s256, 8
      %s258 = scalar_lea.vmem %s6, %s257
      %s259 = smul.u32 2, %s17
      %v260 = vld [vmem:[%s251] sm:$0xf]
      %v261 = vld [vmem:[%s251 + $0x4] sm:$0xf]
      %v262 = vld [vmem:[%s251 + $0x8] sm:$0xf]
      %v263 = vld [vmem:[%s251 + $0xc] sm:$0xf]
      %v264 = vld [vmem:[%s251 + $0x10] sm:$0xf]
      %v265 = vld [vmem:[%s251 + $0x14] sm:$0xf]
      %v266 = vld [vmem:[%s251 + $0x18] sm:$0xf]
      %v267 = vld [vmem:[%s251 + $0x1c] sm:$0xf]
      %v268 = vld [vmem:[%s251 + $0x20] sm:$0xf]
      %v269 = vld [vmem:[%s251 + $0x24] sm:$0xf]
      %v270 = vld [vmem:[%s251 + $0x28] sm:$0x1]
      %v271 = vunpack.c.l.bf16 %v260
      %v272 = vunpack.c.l.bf16 %v261
      %v273 = vunpack.c.l.bf16 %v262
      %v274 = vunpack.c.l.bf16 %v263
      %v275 = vunpack.c.l.bf16 %v264
      %v276 = vunpack.c.l.bf16 %v265
      %v277 = vunpack.c.l.bf16 %v266
      %v278 = vunpack.c.l.bf16 %v267
      %v279 = vunpack.c.l.bf16 %v268
      %v280 = vunpack.c.l.bf16 %v269
      %v281 = vunpack.c.l.bf16 %v270
      %v282 = vld [vmem:[%s1] sm:$0xff]
      %v283 = vld [vmem:[%s1 + $0x8] sm:$0xff]
      %v284 = vld [vmem:[%s1 + $0x10] sm:$0xff]
      %v285 = vld [vmem:[%s1 + $0x18] sm:$0xff]
      %v286 = vld [vmem:[%s1 + $0x20] sm:$0xff]
      %vm287 = vcmask 326656
      %v289 = vsel %vm287, %v271, 0
      %v292 = vsel %vm287, %v272, 0
      %v295 = vsel %vm287, %v273, 0
      %v298 = vsel %vm287, %v274, 0
      %v301 = vsel %vm287, %v275, 0
      %v304 = vsel %vm287, %v276, 0
      %v307 = vsel %vm287, %v277, 0
      %v310 = vsel %vm287, %v278, 0
      %v313 = vsel %vm287, %v279, 0
      %v316 = vsel %vm287, %v280, 0
      %v319 = vsel %vm287, %v281, 0
      %321 = vmatprep.subr.mxu0 0.0
      %322 = vmatpush1.msra.mxu0 %v282
      %323 = vmatprep.subr.mxu0 0.0
      %324 = vmatpush1.msra.mxu0 %v283
      %325 = vmatprep.subr.mxu0 0.0
      %326 = vmatpush1.msra.mxu0 %v284
      %327 = vmatprep.subr.mxu0 0.0
      %328 = vmatpush1.msra.mxu0 %v285
      %329 = vmatprep.subr.mxu0 0.0
      %330 = vmatpush1.msra.mxu0 %v286
      %331 = vmatprep.subr.mxu0 0.0
      %332 = vmatpush1.msra.mxu0 0.0
      %333 = vmatprep.subr.mxu0 0.0
      %334 = vmatpush1.msra.mxu0 0.0
      %335 = vmatprep.subr.mxu0 0.0
      %336 = vmatpush1.msra.mxu0 0.0
      %337 = vmatprep.subr.mxu0 0.0
      %338 = vmatpush1.msra.mxu0 0.0
      %339 = vmatprep.subr.mxu0 0.0
      %340 = vmatpush1.msra.mxu0 0.0
      %341 = vmatprep.subr.mxu0 0.0
      %342 = vmatpush1.msra.mxu0 0.0
      %343 = vmatprep.subr.mxu0 0.0
      %344 = vmatpush1.msra.mxu0 0.0
      %345 = vmatprep.subr.mxu0 0.0
      %346 = vmatpush1.msra.mxu0 0.0
      %347 = vmatprep.subr.mxu0 0.0
      %348 = vmatpush1.msra.mxu0 0.0
      %349 = vmatprep.subr.mxu0 0.0
      %350 = vmatpush1.msra.mxu0 0.0
      %351 = vmatprep.subr.mxu0 0.0
      %352 = vmatpush1.msra.mxu0 0.0
      %353 = vmatprep.subr.mxu0 0.0
      %354 = vmatpush1.msra.mxu0 0.0
      %355 = vmatprep.subr.mxu0 0.0
      %356 = vmatpush1.msra.mxu0 0.0
      %357 = vmatprep.subr.mxu0 0.0
      %358 = vmatpush1.msra.mxu0 0.0
      %359 = vmatprep.subr.mxu0 0.0
      %360 = vmatpush1.msra.mxu0 0.0
      %361 = vmatprep.subr.mxu0 0.0
      %362 = vmatpush1.msra.mxu0 0.0
      %363 = vmatprep.subr.mxu0 0.0
      %364 = vmatpush1.msra.mxu0 0.0
      %365 = vmatprep.subr.mxu0 0.0
      %366 = vmatpush1.msra.mxu0 0.0
      %367 = vmatprep.subr.mxu0 0.0
      %368 = vmatpush1.msra.mxu0 0.0
      %369 = vmatprep.subr.mxu0 0.0
      %370 = vmatpush1.msra.mxu0 0.0
      %371 = vmatprep.subr.mxu0 0.0
      %372 = vmatpush1.msra.mxu0 0.0
      %373 = vmatprep.subr.mxu0 0.0
      %374 = vmatpush1.msra.mxu0 0.0
      %375 = vmatprep.subr.mxu0 0.0
      %376 = vmatpush1.msra.mxu0 0.0
      %377 = vmatprep.subr.mxu0 0.0
      %378 = vmatpush1.msra.mxu0 0.0
      %379 = vmatprep.subr.mxu0 0.0
      %380 = vmatpush1.msra.mxu0 0.0
      %381 = vmatprep.subr.mxu0 0.0
      %382 = vmatpush1.msra.mxu0 0.0
      %383 = vmatprep.subr.mxu0 0.0
      %384 = vmatpush1.msra.mxu0 0.0
      %385 = vmatprep.mubr.f32.mxu0 0.0
      %386 = vmatmul.mubr.f32.gmra.mrb[0].mxu0 %v289
      %v387 = vpop.f32.mrb[0].mxu0
      %v388 = vadd.f32 0.0, %v387
      %v389 = vpop.f32.mrb[0].mxu0
      %390 = vmatprep.mubr.f32.mxu0 0.0
      %391 = vmatmul.mubr.f32.gmra.mrb[0].mxu0 %v292
      %v392 = vpop.f32.mrb[0].mxu0
      %v393 = vadd.f32 0.0, %v392
      %v394 = vpop.f32.mrb[0].mxu0
      %395 = vmatprep.mubr.f32.mxu0 0.0
      %396 = vmatmul.mubr.f32.gmra.mrb[0].mxu0 %v295
      %v397 = vpop.f32.mrb[0].mxu0
      %v398 = vadd.f32 0.0, %v397
      %v399 = vpop.f32.mrb[0].mxu0
      %400 = vmatprep.mubr.f32.mxu0 0.0
      %401 = vmatmul.mubr.f32.gmra.mrb[0].mxu0 %v298
      %v402 = vpop.f32.mrb[0].mxu0
      %v403 = vadd.f32 0.0, %v402
      %v404 = vpop.f32.mrb[0].mxu0
      %405 = vmatprep.mubr.f32.mxu0 0.0
      %406 = vmatmul.mubr.f32.gmra.mrb[0].mxu0 %v301
      %v407 = vpop.f32.mrb[0].mxu0
      %v408 = vadd.f32 0.0, %v407
      %v409 = vpop.f32.mrb[0].mxu0
      %410 = vmatprep.mubr.f32.mxu0 0.0
      %411 = vmatmul.mubr.f32.gmra.mrb[0].mxu0 %v304
      %v412 = vpop.f32.mrb[0].mxu0
      %v413 = vadd.f32 0.0, %v412
      %v414 = vpop.f32.mrb[0].mxu0
      %415 = vmatprep.mubr.f32.mxu0 0.0
      %416 = vmatmul.mubr.f32.gmra.mrb[0].mxu0 %v307
      %v417 = vpop.f32.mrb[0].mxu0
      %v418 = vadd.f32 0.0, %v417
      %v419 = vpop.f32.mrb[0].mxu0
      %420 = vmatprep.mubr.f32.mxu0 0.0
      %421 = vmatmul.mubr.f32.gmra.mrb[0].mxu0 %v310
      %v422 = vpop.f32.mrb[0].mxu0
      %v423 = vadd.f32 0.0, %v422
      %v424 = vpop.f32.mrb[0].mxu0
      %425 = vmatprep.mubr.f32.mxu0 0.0
      %426 = vmatmul.mubr.f32.gmra.mrb[0].mxu0 %v313
      %v427 = vpop.f32.mrb[0].mxu0
      %v428 = vadd.f32 0.0, %v427
      %v429 = vpop.f32.mrb[0].mxu0
      %430 = vmatprep.mubr.f32.mxu0 0.0
      %431 = vmatmul.mubr.f32.gmra.mrb[0].mxu0 %v316
      %v432 = vpop.f32.mrb[0].mxu0
      %v433 = vadd.f32 0.0, %v432
      %v434 = vpop.f32.mrb[0].mxu0
      %435 = vmatprep.mubr.f32.mxu0 0.0
      %436 = vmatmul.mubr.f32.gmra.mrb[0].mxu0 %v319
      %v437 = vpop.f32.mrb[0].mxu0
      %v438 = vadd.f32 0.0, %v437
      %v439 = vpop.f32.mrb[0].mxu0
      %440 = vdwg.mxu0
      %v441 = vmul.f32 %v388, 0.003921569
      %v442 = vmul.f32 %v393, 0.003921569
      %v443 = vmul.f32 %v398, 0.003921569
      %v444 = vmul.f32 %v403, 0.003921569
      %v445 = vmul.f32 %v408, 0.003921569
      %v446 = vmul.f32 %v413, 0.003921569
      %v447 = vmul.f32 %v418, 0.003921569
      %v448 = vmul.f32 %v423, 0.003921569
      %v449 = vmul.f32 %v428, 0.003921569
      %v450 = vmul.f32 %v433, 0.003921569
      %v451 = vmul.f32 %v438, 0.003921569
      %v452 = vld [vmem:[%s5] sm:$0x1]
      %v453 = vlaneseq
      %v454 = vshrl.u32 %v453, 7
      %v455 = vsub.s32 0, %v454
      %v456 = vrot.slane %v452, %v455
      %v457 = vadd.f32 %v441, %v456
      %v458 = vadd.f32 %v442, %v456
      %v459 = vadd.f32 %v443, %v456
      %v460 = vadd.f32 %v444, %v456
      %v461 = vadd.f32 %v445, %v456
      %v462 = vadd.f32 %v446, %v456
      %v463 = vadd.f32 %v447, %v456
      %v464 = vadd.f32 %v448, %v456
      %v465 = vadd.f32 %v449, %v456
      %v466 = vadd.f32 %v450, %v456
      %v467 = vadd.f32 %v451, %v456
      %v468 = vmax.f32 %v457, 0.0
      %v469 = vmax.f32 %v458, 0.0
      %v470 = vmax.f32 %v459, 0.0
      %v471 = vmax.f32 %v460, 0.0
      %v472 = vmax.f32 %v461, 0.0
      %v473 = vmax.f32 %v462, 0.0
      %v474 = vmax.f32 %v463, 0.0
      %v475 = vmax.f32 %v464, 0.0
      %v476 = vmax.f32 %v465, 0.0
      %v477 = vmax.f32 %v466, 0.0
      %v478 = vmax.f32 %v467, 0.0
      %vm479 = vcmask 261120
      %480 = vst.msk [vmem:[#allocation2] sm:$0xff] %vm479, %v468
      %481 = vst.msk [vmem:[#allocation2 + $0x8] sm:$0xff] %vm479, %v469
      %482 = vst.msk [vmem:[#allocation2 + $0x10] sm:$0xff] %vm479, %v470
      %483 = vst.msk [vmem:[#allocation2 + $0x18] sm:$0xff] %vm479, %v471
      %484 = vst.msk [vmem:[#allocation2 + $0x20] sm:$0xff] %vm479, %v472
      %485 = vst.msk [vmem:[#allocation2 + $0x28] sm:$0xff] %vm479, %v473
      %486 = vst.msk [vmem:[#allocation2 + $0x30] sm:$0xff] %vm479, %v474
      %487 = vst.msk [vmem:[#allocation2 + $0x38] sm:$0xff] %vm479, %v475
      %488 = vst.msk [vmem:[#allocation2 + $0x40] sm:$0xff] %vm479, %v476
      %489 = vst.msk [vmem:[#allocation2 + $0x48] sm:$0xff] %vm479, %v477
      %vm490 = vcmask 253952
      %491 = vst.msk [vmem:[#allocation2 + $0x50] sm:$0x1] %vm490, %v478
      %v492 = vld [vmem:[%s5 + $0x1] sm:$0x1]
      %v493 = vld [vmem:[#allocation2] sm:$0xff]
      %v494 = vld [vmem:[#allocation2 + $0x8] sm:$0xff]
      %v495 = vld [vmem:[#allocation2 + $0x10] sm:$0xff]
      %v496 = vld [vmem:[#allocation2 + $0x18] sm:$0xff]
      %v497 = vld [vmem:[#allocation2 + $0x20] sm:$0xff]
      %v498 = vld [vmem:[#allocation2 + $0x28] sm:$0xff]
      %v499 = vld [vmem:[#allocation2 + $0x30] sm:$0xff]
      %v500 = vld [vmem:[#allocation2 + $0x38] sm:$0x7f]
      %v501 = vld [vmem:[#allocation2 + $0x1] sm:$0xff]
      %v502 = vld [vmem:[#allocation2 + $0x9] sm:$0xff]
      %v503 = vld [vmem:[#allocation2 + $0x11] sm:$0xff]
      %v504 = vld [vmem:[#allocation2 + $0x19] sm:$0xff]
      %v505 = vld [vmem:[#allocation2 + $0x21] sm:$0xff]
      %v506 = vld [vmem:[#allocation2 + $0x29] sm:$0xff]
      %v507 = vld [vmem:[#allocation2 + $0x31] sm:$0xff]
      %v508 = vld [vmem:[#allocation2 + $0x39] sm:$0x7f]
      %v509 = vld [vmem:[#allocation2 + $0x2] sm:$0xff]
      %v510 = vld [vmem:[#allocation2 + $0xa] sm:$0xff]
      %v511 = vld [vmem:[#allocation2 + $0x12] sm:$0xff]
      %v512 = vld [vmem:[#allocation2 + $0x1a] sm:$0xff]
      %v513 = vld [vmem:[#allocation2 + $0x22] sm:$0xff]
      %v514 = vld [vmem:[#allocation2 + $0x2a] sm:$0xff]
      %v515 = vld [vmem:[#allocation2 + $0x32] sm:$0xff]
      %v516 = vld [vmem:[#allocation2 + $0x3a] sm:$0x7f]
      %v517 = vld [vmem:[#allocation2 + $0x39] sm:$0xff]
      %v518 = vld [vmem:[#allocation2 + $0x41] sm:$0x7f]
      %v519 = vld [vmem:[#allocation2 + $0x3a] sm:$0xff]
      %v520 = vld [vmem:[#allocation2 + $0x42] sm:$0x7f]
      %v521 = vld [vmem:[#allocation2 + $0xb] sm:$0xff]
      %v522 = vld [vmem:[#allocation2 + $0x13] sm:$0xff]
      %v523 = vld [vmem:[#allocation2 + $0x1b] sm:$0xff]
      %v524 = vld [vmem:[#allocation2 + $0x23] sm:$0xff]
      %v525 = vld [vmem:[#allocation2 + $0x2b] sm:$0xff]
      %v526 = vld [vmem:[#allocation2 + $0x33] sm:$0xff]
      %v527 = vld [vmem:[#allocation2 + $0x3b] sm:$0xff]
      %v528 = vld [vmem:[#allocation2 + $0x43] sm:$0x7f]
      %v529 = vld [vmem:[#allocation2 + $0x42] sm:$0xff]
      %v530 = vld [vmem:[#allocation2 + $0x4a] sm:$0x7f]
      %v531 = vld [vmem:[#allocation2 + $0x43] sm:$0xff]
      %v532 = vld [vmem:[#allocation2 + $0x4b] sm:$0x7f]
      %v533 = vld [vmem:[#allocation2 + $0x14] sm:$0xff]
      %v534 = vld [vmem:[#allocation2 + $0x1c] sm:$0xff]
      %v535 = vld [vmem:[#allocation2 + $0x24] sm:$0xff]
      %v536 = vld [vmem:[#allocation2 + $0x2c] sm:$0xff]
      %v537 = vld [vmem:[#allocation2 + $0x34] sm:$0xff]
      %v538 = vld [vmem:[#allocation2 + $0x3c] sm:$0xff]
      %v539 = vld [vmem:[#allocation2 + $0x44] sm:$0xff]
      %v540 = vld [vmem:[#allocation2 + $0x4c] sm:$0x7f]
      %549 = vrot.lane.b32.xlu0 %v501, 32
      %v550 = vpop.permute.xlu0 %549
      %551 = vrot.lane.b32.xlu0 %v502, 32
      %v552 = vpop.permute.xlu0 %551
      %553 = vrot.lane.b32.xlu0 %v503, 32
      %v554 = vpop.permute.xlu0 %553
      %555 = vrot.lane.b32.xlu0 %v504, 32
      %v556 = vpop.permute.xlu0 %555
      %557 = vrot.lane.b32.xlu0 %v505, 32
      %v558 = vpop.permute.xlu0 %557
      %559 = vrot.lane.b32.xlu0 %v506, 32
      %v560 = vpop.permute.xlu0 %559
      %561 = vrot.lane.b32.xlu0 %v507, 32
      %v562 = vpop.permute.xlu0 %561
      %563 = vrot.lane.b32.xlu0 %v508, 32
      %v564 = vpop.permute.xlu0 %563
      %581 = vrot.lane.b32.xlu0 %v509, 64
      %v582 = vpop.permute.xlu0 %581
      %583 = vrot.lane.b32.xlu0 %v510, 64
      %v584 = vpop.permute.xlu0 %583
      %585 = vrot.lane.b32.xlu0 %v511, 64
      %v586 = vpop.permute.xlu0 %585
      %587 = vrot.lane.b32.xlu0 %v512, 64
      %v588 = vpop.permute.xlu0 %587
      %589 = vrot.lane.b32.xlu0 %v513, 64
      %v590 = vpop.permute.xlu0 %589
      %591 = vrot.lane.b32.xlu0 %v514, 64
      %v592 = vpop.permute.xlu0 %591
      %593 = vrot.lane.b32.xlu0 %v515, 64
      %v594 = vpop.permute.xlu0 %593
      %595 = vrot.lane.b32.xlu0 %v516, 64
      %v596 = vpop.permute.xlu0 %595
      %607 = vrot.lane.b32.xlu0 %v502, 96
      %v608 = vpop.permute.xlu0 %607
      %609 = vrot.lane.b32.xlu0 %v503, 96
      %v610 = vpop.permute.xlu0 %609
      %611 = vrot.lane.b32.xlu0 %v504, 96
      %v612 = vpop.permute.xlu0 %611
      %613 = vrot.lane.b32.xlu0 %v505, 96
      %v614 = vpop.permute.xlu0 %613
      %615 = vrot.lane.b32.xlu0 %v506, 96
      %v616 = vpop.permute.xlu0 %615
      %617 = vrot.lane.b32.xlu0 %v507, 96
      %v618 = vpop.permute.xlu0 %617
      %619 = vrot.lane.b32.xlu0 %v517, 96
      %v620 = vpop.permute.xlu0 %619
      %621 = vrot.lane.b32.xlu0 %v518, 96
      %v622 = vpop.permute.xlu0 %621
      %v631 = vsel %vm479, %v493, %v550
      %v632 = vsel %vm479, %v494, %v552
      %v633 = vsel %vm479, %v495, %v554
      %v634 = vsel %vm479, %v496, %v556
      %v635 = vsel %vm479, %v497, %v558
      %v636 = vsel %vm479, %v498, %v560
      %v637 = vsel %vm479, %v499, %v562
      %v638 = vsel %vm479, %v500, %v564
      %vm639 = vcmask 523264
      %v640 = vsel %vm639, %v631, %v582
      %v641 = vsel %vm639, %v632, %v584
      %v642 = vsel %vm639, %v633, %v586
      %v643 = vsel %vm639, %v634, %v588
      %v644 = vsel %vm639, %v635, %v590
      %v645 = vsel %vm639, %v636, %v592
      %v646 = vsel %vm639, %v637, %v594
      %v647 = vsel %vm639, %v638, %v596
      %vm648 = vcmask 785408
      %v649 = vsel %vm648, %v640, %v608
      %v650 = vsel %vm648, %v641, %v610
      %v651 = vsel %vm648, %v642, %v612
      %v652 = vsel %vm648, %v643, %v614
      %v653 = vsel %vm648, %v644, %v616
      %v654 = vsel %vm648, %v645, %v618
      %v655 = vsel %vm648, %v646, %v620
      %v656 = vsel %vm648, %v647, %v622
      %657 = vst [vmem:[#allocation4] sm:$0xff] %v649
      %658 = vst [vmem:[#allocation4 + $0x18] sm:$0xff] %v650
      %659 = vst [vmem:[#allocation4 + $0x30] sm:$0xff] %v651
      %660 = vst [vmem:[#allocation4 + $0x48] sm:$0xff] %v652
      %661 = vst [vmem:[#allocation4 + $0x60] sm:$0xff] %v653
      %662 = vst [vmem:[#allocation4 + $0x78] sm:$0xff] %v654
      %663 = vst [vmem:[#allocation4 + $0x90] sm:$0xff] %v655
      %664 = vst [vmem:[#allocation4 + $0xa8] sm:$0x7f] %v656
      %673 = vrot.lane.b32.xlu0 %v521, 32
      %v674 = vpop.permute.xlu0 %673
      %675 = vrot.lane.b32.xlu0 %v522, 32
      %v676 = vpop.permute.xlu0 %675
      %677 = vrot.lane.b32.xlu0 %v523, 32
      %v678 = vpop.permute.xlu0 %677
      %679 = vrot.lane.b32.xlu0 %v524, 32
      %v680 = vpop.permute.xlu0 %679
      %681 = vrot.lane.b32.xlu0 %v525, 32
      %v682 = vpop.permute.xlu0 %681
      %683 = vrot.lane.b32.xlu0 %v526, 32
      %v684 = vpop.permute.xlu0 %683
      %685 = vrot.lane.b32.xlu0 %v527, 32
      %v686 = vpop.permute.xlu0 %685
      %687 = vrot.lane.b32.xlu0 %v528, 32
      %v688 = vpop.permute.xlu0 %687
      %700 = vrot.lane.b32.xlu0 %v519, 64
      %v701 = vpop.permute.xlu0 %700
      %702 = vrot.lane.b32.xlu0 %v529, 64
      %v703 = vpop.permute.xlu0 %702
      %704 = vrot.lane.b32.xlu0 %v530, 64
      %v705 = vpop.permute.xlu0 %704
      %711 = vrot.lane.b32.xlu0 %v522, 96
      %v712 = vpop.permute.xlu0 %711
      %713 = vrot.lane.b32.xlu0 %v523, 96
      %v714 = vpop.permute.xlu0 %713
      %715 = vrot.lane.b32.xlu0 %v524, 96
      %v716 = vpop.permute.xlu0 %715
      %717 = vrot.lane.b32.xlu0 %v525, 96
      %v718 = vpop.permute.xlu0 %717
      %719 = vrot.lane.b32.xlu0 %v526, 96
      %v720 = vpop.permute.xlu0 %719
      %721 = vrot.lane.b32.xlu0 %v527, 96
      %v722 = vpop.permute.xlu0 %721
      %723 = vrot.lane.b32.xlu0 %v531, 96
      %v724 = vpop.permute.xlu0 %723
      %725 = vrot.lane.b32.xlu0 %v532, 96
      %v726 = vpop.permute.xlu0 %725
      %v735 = vsel %vm479, %v510, %v674
      %v736 = vsel %vm479, %v511, %v676
      %v737 = vsel %vm479, %v512, %v678
      %v738 = vsel %vm479, %v513, %v680
      %v739 = vsel %vm479, %v514, %v682
      %v740 = vsel %vm479, %v515, %v684
      %v741 = vsel %vm479, %v519, %v686
      %v742 = vsel %vm479, %v520, %v688
      %v743 = vsel %vm639, %v735, %v586
      %v744 = vsel %vm639, %v736, %v588
      %v745 = vsel %vm639, %v737, %v590
      %v746 = vsel %vm639, %v738, %v592
      %v747 = vsel %vm639, %v739, %v594
      %v748 = vsel %vm639, %v740, %v701
      %v749 = vsel %vm639, %v741, %v703
      %v750 = vsel %vm639, %v742, %v705
      %v751 = vsel %vm648, %v743, %v712
      %v752 = vsel %vm648, %v744, %v714
      %v753 = vsel %vm648, %v745, %v716
      %v754 = vsel %vm648, %v746, %v718
      %v755 = vsel %vm648, %v747, %v720
      %v756 = vsel %vm648, %v748, %v722
      %v757 = vsel %vm648, %v749, %v724
      %v758 = vsel %vm648, %v750, %v726
      %759 = vst [vmem:[#allocation4 + $0x8] sm:$0xff] %v751
      %760 = vst [vmem:[#allocation4 + $0x20] sm:$0xff] %v752
      %761 = vst [vmem:[#allocation4 + $0x38] sm:$0xff] %v753
      %762 = vst [vmem:[#allocation4 + $0x50] sm:$0xff] %v754
      %763 = vst [vmem:[#allocation4 + $0x68] sm:$0xff] %v755
      %764 = vst [vmem:[#allocation4 + $0x80] sm:$0xff] %v756
      %765 = vst [vmem:[#allocation4 + $0x98] sm:$0xff] %v757
      %766 = vst [vmem:[#allocation4 + $0xb0] sm:$0x7f] %v758
      %767 = vst.msk [vmem:[#allocation4 + $0x10] sm:$0xff] %vm479, %v533
      %768 = vst.msk [vmem:[#allocation4 + $0x28] sm:$0xff] %vm479, %v534
      %769 = vst.msk [vmem:[#allocation4 + $0x40] sm:$0xff] %vm479, %v535
      %770 = vst.msk [vmem:[#allocation4 + $0x58] sm:$0xff] %vm479, %v536
      %771 = vst.msk [vmem:[#allocation4 + $0x70] sm:$0xff] %vm479, %v537
      %772 = vst.msk [vmem:[#allocation4 + $0x88] sm:$0xff] %vm479, %v538
      %773 = vst.msk [vmem:[#allocation4 + $0xa0] sm:$0xff] %vm479, %v539
      %vm774 = vcmask 260096
      %775 = vst.msk [vmem:[#allocation4 + $0xb8] sm:$0x7f] %vm774, %v540
      %v776 = vld [vmem:[#allocation4] sm:$0xff]
      %v777 = vld [vmem:[#allocation4 + $0x8] sm:$0xff]
      %v778 = vld [vmem:[#allocation4 + $0x10] sm:$0xff]
      %v779 = vld [vmem:[#allocation4 + $0x18] sm:$0xff]
      %v780 = vld [vmem:[#allocation4 + $0x20] sm:$0xff]
      %v781 = vld [vmem:[#allocation4 + $0x28] sm:$0xff]
      %v782 = vld [vmem:[#allocation4 + $0x30] sm:$0xff]
      %v783 = vld [vmem:[#allocation4 + $0x38] sm:$0xff]
      %v784 = vld [vmem:[#allocation4 + $0x40] sm:$0xff]
      %v785 = vld [vmem:[#allocation4 + $0x48] sm:$0xff]
      %v786 = vld [vmem:[#allocation4 + $0x50] sm:$0xff]
      %v787 = vld [vmem:[#allocation4 + $0x58] sm:$0xff]
      %v788 = vld [vmem:[#allocation4 + $0x60] sm:$0xff]
      %v789 = vld [vmem:[#allocation4 + $0x68] sm:$0xff]
      %v790 = vld [vmem:[#allocation4 + $0x70] sm:$0xff]
      %v791 = vld [vmem:[#allocation4 + $0x78] sm:$0xff]
      %v792 = vld [vmem:[#allocation4 + $0x80] sm:$0xff]
      %v793 = vld [vmem:[#allocation4 + $0x88] sm:$0xff]
      %v794 = vld [vmem:[#allocation4 + $0x90] sm:$0xff]
      %v795 = vld [vmem:[#allocation4 + $0x98] sm:$0xff]
      %v796 = vld [vmem:[#allocation4 + $0xa0] sm:$0xff]
      %v797 = vld [vmem:[#allocation4 + $0xa8] sm:$0x7f]
      %v798 = vld [vmem:[#allocation4 + $0xb0] sm:$0x7f]
      %v799 = vld [vmem:[#allocation4 + $0xb8] sm:$0x7f]
      %v800 = vld [vmem:[%s2] sm:$0xff]
      %v801 = vld [vmem:[%s2 + $0x8] sm:$0xff]
      %v802 = vld [vmem:[%s2 + $0x10] sm:$0xff]
      %v803 = vld [vmem:[%s2 + $0x18] sm:$0xff]
      %v804 = vld [vmem:[%s2 + $0x20] sm:$0xff]
      %v805 = vld [vmem:[%s2 + $0x28] sm:$0xff]
      %v806 = vld [vmem:[%s2 + $0x30] sm:$0xff]
      %v807 = vld [vmem:[%s2 + $0x38] sm:$0xff]
      %v808 = vld [vmem:[%s2 + $0x40] sm:$0xff]
      %v809 = vld [vmem:[%s2 + $0x48] sm:$0xff]
      %v810 = vld [vmem:[%s2 + $0x50] sm:$0xff]
      %v811 = vld [vmem:[%s2 + $0x58] sm:$0xff]
      %v812 = vld [vmem:[%s2 + $0x60] sm:$0xff]
      %v813 = vld [vmem:[%s2 + $0x68] sm:$0xff]
      %v814 = vld [vmem:[%s2 + $0x70] sm:$0xff]
      %v815 = vld [vmem:[%s2 + $0x78] sm:$0xff]
      %v816 = vld [vmem:[%s2 + $0x80] sm:$0xff]
      %v817 = vld [vmem:[%s2 + $0x88] sm:$0xff]
      %v818 = vld [vmem:[%s2 + $0x90] sm:$0xff]
      %v819 = vld [vmem:[%s2 + $0x98] sm:$0xff]
      %v820 = vld [vmem:[%s2 + $0xa0] sm:$0xff]
      %v821 = vld [vmem:[%s2 + $0xa8] sm:$0xff]
      %v822 = vld [vmem:[%s2 + $0xb0] sm:$0xff]
      %v823 = vld [vmem:[%s2 + $0xb8] sm:$0xff]
      %v824 = vld [vmem:[%s2 + $0xc0] sm:$0xff]
      %v825 = vld [vmem:[%s2 + $0xc8] sm:$0xff]
      %v826 = vld [vmem:[%s2 + $0xd0] sm:$0xff]
      %v827 = vld [vmem:[%s2 + $0xd8] sm:$0xff]
      %v828 = vld [vmem:[%s2 + $0xe0] sm:$0xff]
      %v829 = vld [vmem:[%s2 + $0xe8] sm:$0xff]
      %v830 = vld [vmem:[%s2 + $0xf0] sm:$0xff]
      %v831 = vld [vmem:[%s2 + $0xf8] sm:$0xff]
      %v832 = vld [vmem:[%s2 + $0x100] sm:$0xff]
      %v833 = vld [vmem:[%s2 + $0x108] sm:$0xff]
      %v834 = vld [vmem:[%s2 + $0x110] sm:$0xff]
      %v835 = vld [vmem:[%s2 + $0x118] sm:$0xff]
      %v836 = vlaneseq
      %v837 = vshrl.u32 %v836, 7
      %v838 = vsub.s32 0, %v837
      %v839 = vrot.slane %v492, %v838
      %v841 = vsel %vm479, %v778, 0
      %v844 = vsel %vm479, %v781, 0
      %v847 = vsel %vm479, %v784, 0
      %v850 = vsel %vm479, %v787, 0
      %v853 = vsel %vm479, %v790, 0
      %v856 = vsel %vm479, %v793, 0
      %v859 = vsel %vm479, %v796, 0
      %v862 = vsel %vm479, %v799, 0
      %864 = vmatprep.subr.mxu0 0.0
      %865 = vmatpush1.msra.mxu0 %v800
      %866 = vmatprep.subr.mxu0 0.0
      %867 = vmatpush1.msra.mxu0 %v801
      %868 = vmatprep.subr.mxu0 0.0
      %869 = vmatpush1.msra.mxu0 %v802
      %870 = vmatprep.subr.mxu0 0.0
      %871 = vmatpush1.msra.mxu0 %v803
      %872 = vmatprep.subr.mxu0 0.0
      %873 = vmatpush1.msra.mxu0 %v804
      %874 = vmatprep.subr.mxu0 0.0
      %875 = vmatpush1.msra.mxu0 %v805
      %876 = vmatprep.subr.mxu0 0.0
      %877 = vmatpush1.msra.mxu0 %v806
      %878 = vmatprep.subr.mxu0 0.0
      %879 = vmatpush1.msra.mxu0 %v807
      %880 = vmatprep.subr.mxu0 0.0
      %881 = vmatpush1.msra.mxu0 %v808
      %882 = vmatprep.subr.mxu0 0.0
      %883 = vmatpush1.msra.mxu0 %v809
      %884 = vmatprep.subr.mxu0 0.0
      %885 = vmatpush1.msra.mxu0 %v810
      %886 = vmatprep.subr.mxu0 0.0
      %887 = vmatpush1.msra.mxu0 %v811
      %888 = vmatprep.subr.mxu0 0.0
      %889 = vmatpush1.msra.mxu0 %v812
      %890 = vmatprep.subr.mxu0 0.0
      %891 = vmatpush1.msra.mxu0 %v813
      %892 = vmatprep.subr.mxu0 0.0
      %893 = vmatpush1.msra.mxu0 %v814
      %894 = vmatprep.subr.mxu0 0.0
      %895 = vmatpush1.msra.mxu0 %v815
      %896 = vmatprep.subr.mxu0 0.0
      %897 = vmatpush1.msra.mxu0 %v816
      %898 = vmatprep.subr.mxu0 0.0
      %899 = vmatpush1.msra.mxu0 %v817
      %900 = vmatprep.subr.mxu0 0.0
      %901 = vmatpush1.msra.mxu0 %v818
      %902 = vmatprep.subr.mxu0 0.0
      %903 = vmatpush1.msra.mxu0 %v819
      %904 = vmatprep.subr.mxu0 0.0
      %905 = vmatpush1.msra.mxu0 %v820
      %906 = vmatprep.subr.mxu0 0.0
      %907 = vmatpush1.msra.mxu0 %v821
      %908 = vmatprep.subr.mxu0 0.0
      %909 = vmatpush1.msra.mxu0 %v822
      %910 = vmatprep.subr.mxu0 0.0
      %911 = vmatpush1.msra.mxu0 %v823
      %912 = vmatprep.subr.mxu0 0.0
      %913 = vmatpush1.msra.mxu0 %v824
      %914 = vmatprep.subr.mxu0 0.0
      %915 = vmatpush1.msra.mxu0 %v825
      %916 = vmatprep.subr.mxu0 0.0
      %917 = vmatpush1.msra.mxu0 %v826
      %918 = vmatprep.subr.mxu0 0.0
      %919 = vmatpush1.msra.mxu0 %v827
      %920 = vmatprep.subr.mxu0 0.0
      %921 = vmatpush1.msra.mxu0 %v828
      %922 = vmatprep.subr.mxu0 0.0
      %923 = vmatpush1.msra.mxu0 %v829
      %924 = vmatprep.subr.mxu0 0.0
      %925 = vmatpush1.msra.mxu0 %v830
      %926 = vmatprep.subr.mxu0 0.0
      %927 = vmatpush1.msra.mxu0 %v831
      %928 = vmatprep.mubr.f32.mxu0 %v777
      %929 = vmatmul.mubr.f32.gmra.mrb[0].mxu0 %v776
      %v930 = vpop.f32.mrb[0].mxu0
      %v931 = vadd.f32 %v839, %v930
      %v932 = vpop.f32.mrb[0].mxu0
      %933 = vmatprep.mubr.f32.mxu0 %v780
      %934 = vmatmul.mubr.f32.gmra.mrb[0].mxu0 %v779
      %v935 = vpop.f32.mrb[0].mxu0
      %v936 = vadd.f32 %v839, %v935
      %v937 = vpop.f32.mrb[0].mxu0
      %938 = vmatprep.mubr.f32.mxu0 %v783
      %939 = vmatmul.mubr.f32.gmra.mrb[0].mxu0 %v782
      %v940 = vpop.f32.mrb[0].mxu0
      %v941 = vadd.f32 %v839, %v940
      %v942 = vpop.f32.mrb[0].mxu0
      %943 = vmatprep.mubr.f32.mxu0 %v786
      %944 = vmatmul.mubr.f32.gmra.mrb[0].mxu0 %v785
      %v945 = vpop.f32.mrb[0].mxu0
      %v946 = vadd.f32 %v839, %v945
      %v947 = vpop.f32.mrb[0].mxu0
      %948 = vmatprep.mubr.f32.mxu0 %v789
      %949 = vmatmul.mubr.f32.gmra.mrb[0].mxu0 %v788
      %v950 = vpop.f32.mrb[0].mxu0
      %v951 = vadd.f32 %v839, %v950
      %v952 = vpop.f32.mrb[0].mxu0
      %953 = vmatprep.mubr.f32.mxu0 %v792
      %954 = vmatmul.mubr.f32.gmra.mrb[0].mxu0 %v791
      %v955 = vpop.f32.mrb[0].mxu0
      %v956 = vadd.f32 %v839, %v955
      %v957 = vpop.f32.mrb[0].mxu0
      %958 = vmatprep.mubr.f32.mxu0 %v795
      %959 = vmatmul.mubr.f32.gmra.mrb[0].mxu0 %v794
      %v960 = vpop.f32.mrb[0].mxu0
      %v961 = vadd.f32 %v839, %v960
      %v962 = vpop.f32.mrb[0].mxu0
      %963 = vmatprep.mubr.f32.mxu0 %v798
      %964 = vmatmul.mubr.f32.gmra.mrb[0].mxu0 %v797
      %v965 = vpop.f32.mrb[0].mxu0
      %v966 = vadd.f32 %v839, %v965
      %v967 = vpop.f32.mrb[0].mxu0
      %968 = vdwg.mxu0
      %969 = vmatprep.subr.mxu0 0.0
      %970 = vmatpush1.msra.mxu0 %v832
      %971 = vmatprep.subr.mxu0 0.0
      %972 = vmatpush1.msra.mxu0 %v833
      %973 = vmatprep.subr.mxu0 0.0
      %974 = vmatpush1.msra.mxu0 %v834
      %975 = vmatprep.subr.mxu0 0.0
      %976 = vmatpush1.msra.mxu0 %v835
      %977 = vmatprep.subr.mxu0 0.0
      %978 = vmatpush1.msra.mxu0 0.0
      %979 = vmatprep.subr.mxu0 0.0
      %980 = vmatpush1.msra.mxu0 0.0
      %981 = vmatprep.subr.mxu0 0.0
      %982 = vmatpush1.msra.mxu0 0.0
      %983 = vmatprep.subr.mxu0 0.0
      %984 = vmatpush1.msra.mxu0 0.0
      %985 = vmatprep.subr.mxu0 0.0
      %986 = vmatpush1.msra.mxu0 0.0
      %987 = vmatprep.subr.mxu0 0.0
      %988 = vmatpush1.msra.mxu0 0.0
      %989 = vmatprep.subr.mxu0 0.0
      %990 = vmatpush1.msra.mxu0 0.0
      %991 = vmatprep.subr.mxu0 0.0
      %992 = vmatpush1.msra.mxu0 0.0
      %993 = vmatprep.subr.mxu0 0.0
      %994 = vmatpush1.msra.mxu0 0.0
      %995 = vmatprep.subr.mxu0 0.0
      %996 = vmatpush1.msra.mxu0 0.0
      %997 = vmatprep.subr.mxu0 0.0
      %998 = vmatpush1.msra.mxu0 0.0
      %999 = vmatprep.subr.mxu0 0.0
      %1000 = vmatpush1.msra.mxu0 0.0
      %1001 = vmatprep.subr.mxu0 0.0
      %1002 = vmatpush1.msra.mxu0 0.0
      %1003 = vmatprep.subr.mxu0 0.0
      %1004 = vmatpush1.msra.mxu0 0.0
      %1005 = vmatprep.subr.mxu0 0.0
      %1006 = vmatpush1.msra.mxu0 0.0
      %1007 = vmatprep.subr.mxu0 0.0
      %1008 = vmatpush1.msra.mxu0 0.0
      %1009 = vmatprep.subr.mxu0 0.0
      %1010 = vmatpush1.msra.mxu0 0.0
      %1011 = vmatprep.subr.mxu0 0.0
      %1012 = vmatpush1.msra.mxu0 0.0
      %1013 = vmatprep.subr.mxu0 0.0
      %1014 = vmatpush1.msra.mxu0 0.0
      %1015 = vmatprep.subr.mxu0 0.0
      %1016 = vmatpush1.msra.mxu0 0.0
      %1017 = vmatprep.subr.mxu0 0.0
      %1018 = vmatpush1.msra.mxu0 0.0
      %1019 = vmatprep.subr.mxu0 0.0
      %1020 = vmatpush1.msra.mxu0 0.0
      %1021 = vmatprep.subr.mxu0 0.0
      %1022 = vmatpush1.msra.mxu0 0.0
      %1023 = vmatprep.subr.mxu0 0.0
      %1024 = vmatpush1.msra.mxu0 0.0
      %1025 = vmatprep.subr.mxu0 0.0
      %1026 = vmatpush1.msra.mxu0 0.0
      %1027 = vmatprep.subr.mxu0 0.0
      %1028 = vmatpush1.msra.mxu0 0.0
      %1029 = vmatprep.subr.mxu0 0.0
      %1030 = vmatpush1.msra.mxu0 0.0
      %1031 = vmatprep.subr.mxu0 0.0
      %1032 = vmatpush1.msra.mxu0 0.0
      %1033 = vmatprep.mubr.f32.mxu0 0.0
      %1034 = vmatmul.mubr.f32.gmra.mrb[0].mxu0 %v841
      %v1035 = vpop.f32.mrb[0].mxu0
      %v1036 = vadd.f32 %v931, %v1035
      %v1037 = vpop.f32.mrb[0].mxu0
      %1038 = vmatprep.mubr.f32.mxu0 0.0
      %1039 = vmatmul.mubr.f32.gmra.mrb[0].mxu0 %v844
      %v1040 = vpop.f32.mrb[0].mxu0
      %v1041 = vadd.f32 %v936, %v1040
      %v1042 = vpop.f32.mrb[0].mxu0
      %1043 = vmatprep.mubr.f32.mxu0 0.0
      %1044 = vmatmul.mubr.f32.gmra.mrb[0].mxu0 %v847
      %v1045 = vpop.f32.mrb[0].mxu0
      %v1046 = vadd.f32 %v941, %v1045
      %v1047 = vpop.f32.mrb[0].mxu0
      %1048 = vmatprep.mubr.f32.mxu0 0.0
      %1049 = vmatmul.mubr.f32.gmra.mrb[0].mxu0 %v850
      %v1050 = vpop.f32.mrb[0].mxu0
      %v1051 = vadd.f32 %v946, %v1050
      %v1052 = vpop.f32.mrb[0].mxu0
      %1053 = vmatprep.mubr.f32.mxu0 0.0
      %1054 = vmatmul.mubr.f32.gmra.mrb[0].mxu0 %v853
      %v1055 = vpop.f32.mrb[0].mxu0
      %v1056 = vadd.f32 %v951, %v1055
      %v1057 = vpop.f32.mrb[0].mxu0
      %1058 = vmatprep.mubr.f32.mxu0 0.0
      %1059 = vmatmul.mubr.f32.gmra.mrb[0].mxu0 %v856
      %v1060 = vpop.f32.mrb[0].mxu0
      %v1061 = vadd.f32 %v956, %v1060
      %v1062 = vpop.f32.mrb[0].mxu0
      %1063 = vmatprep.mubr.f32.mxu0 0.0
      %1064 = vmatmul.mubr.f32.gmra.mrb[0].mxu0 %v859
      %v1065 = vpop.f32.mrb[0].mxu0
      %v1066 = vadd.f32 %v961, %v1065
      %v1067 = vpop.f32.mrb[0].mxu0
      %1068 = vmatprep.mubr.f32.mxu0 0.0
      %1069 = vmatmul.mubr.f32.gmra.mrb[0].mxu0 %v862
      %v1070 = vpop.f32.mrb[0].mxu0
      %v1071 = vadd.f32 %v966, %v1070
      %v1072 = vpop.f32.mrb[0].mxu0
      %1073 = vdwg.mxu0
      %v1074 = vmax.f32 %v1036, 0.0
      %v1075 = vmax.f32 %v1041, 0.0
      %v1076 = vmax.f32 %v1046, 0.0
      %v1077 = vmax.f32 %v1051, 0.0
      %v1078 = vmax.f32 %v1056, 0.0
      %v1079 = vmax.f32 %v1061, 0.0
      %v1080 = vmax.f32 %v1066, 0.0
      %v1081 = vmax.f32 %v1071, 0.0
      %1082 = vst.msk [vmem:[#allocation3] sm:$0xff] %vm479, %v1074
      %1083 = vst.msk [vmem:[#allocation3 + $0x8] sm:$0xff] %vm479, %v1075
      %1084 = vst.msk [vmem:[#allocation3 + $0x10] sm:$0xff] %vm479, %v1076
      %1085 = vst.msk [vmem:[#allocation3 + $0x18] sm:$0xff] %vm479, %v1077
      %1086 = vst.msk [vmem:[#allocation3 + $0x20] sm:$0xff] %vm479, %v1078
      %1087 = vst.msk [vmem:[#allocation3 + $0x28] sm:$0xff] %vm479, %v1079
      %1088 = vst.msk [vmem:[#allocation3 + $0x30] sm:$0xff] %vm479, %v1080
      %1089 = vst.msk [vmem:[#allocation3 + $0x38] sm:$0x7f] %vm774, %v1081
      %v1090 = vld [vmem:[%s5 + $0x2] sm:$0x1]
      %v1091 = vld [vmem:[#allocation3] sm:$0xff]
      %v1092 = vld [vmem:[#allocation3 + $0x8] sm:$0xff]
      %v1093 = vld [vmem:[#allocation3 + $0x10] sm:$0xff]
      %v1094 = vld [vmem:[#allocation3 + $0x18] sm:$0xff]
      %v1095 = vld [vmem:[#allocation3 + $0x20] sm:$0xff]
      %v1096 = vld [vmem:[#allocation3 + $0x28] sm:$0x1f]
      %v1097 = vld [vmem:[#allocation3 + $0x1] sm:$0xff]
      %v1098 = vld [vmem:[#allocation3 + $0x9] sm:$0xff]
      %v1099 = vld [vmem:[#allocation3 + $0x11] sm:$0xff]
      %v1100 = vld [vmem:[#allocation3 + $0x19] sm:$0xff]
      %v1101 = vld [vmem:[#allocation3 + $0x21] sm:$0xff]
      %v1102 = vld [vmem:[#allocation3 + $0x29] sm:$0x1f]
      %v1103 = vld [vmem:[#allocation3 + $0x2] sm:$0xff]
      %v1104 = vld [vmem:[#allocation3 + $0xa] sm:$0xff]
      %v1105 = vld [vmem:[#allocation3 + $0x12] sm:$0xff]
      %v1106 = vld [vmem:[#allocation3 + $0x1a] sm:$0xff]
      %v1107 = vld [vmem:[#allocation3 + $0x22] sm:$0xff]
      %v1108 = vld [vmem:[#allocation3 + $0x2a] sm:$0x1f]
      %v1109 = vld [vmem:[#allocation3 + $0x29] sm:$0xff]
      %v1110 = vld [vmem:[#allocation3 + $0x31] sm:$0x1f]
      %v1111 = vld [vmem:[#allocation3 + $0x2a] sm:$0xff]
      %v1112 = vld [vmem:[#allocation3 + $0x32] sm:$0x1f]
      %v1113 = vld [vmem:[#allocation3 + $0xb] sm:$0xff]
      %v1114 = vld [vmem:[#allocation3 + $0x13] sm:$0xff]
      %v1115 = vld [vmem:[#allocation3 + $0x1b] sm:$0xff]
      %v1116 = vld [vmem:[#allocation3 + $0x23] sm:$0xff]
      %v1117 = vld [vmem:[#allocation3 + $0x2b] sm:$0xff]
      %v1118 = vld [vmem:[#allocation3 + $0x33] sm:$0x1f]
      %v1119 = vld [vmem:[#allocation3 + $0x32] sm:$0xff]
      %v1120 = vld [vmem:[#allocation3 + $0x3a] sm:$0x1f]
      %v1121 = vld [vmem:[#allocation3 + $0x33] sm:$0xff]
      %v1122 = vld [vmem:[#allocation3 + $0x3b] sm:$0x1f]
      %v1123 = vld [vmem:[#allocation3 + $0x14] sm:$0xff]
      %v1124 = vld [vmem:[#allocation3 + $0x1c] sm:$0xff]
      %v1125 = vld [vmem:[#allocation3 + $0x24] sm:$0xff]
      %v1126 = vld [vmem:[#allocation3 + $0x2c] sm:$0xff]
      %v1127 = vld [vmem:[#allocation3 + $0x34] sm:$0xff]
      %v1128 = vld [vmem:[#allocation3 + $0x3c] sm:$0x1f]
      %1135 = vrot.lane.b32.xlu0 %v1097, 32
      %v1136 = vpop.permute.xlu0 %1135
      %1137 = vrot.lane.b32.xlu0 %v1098, 32
      %v1138 = vpop.permute.xlu0 %1137
      %1139 = vrot.lane.b32.xlu0 %v1099, 32
      %v1140 = vpop.permute.xlu0 %1139
      %1141 = vrot.lane.b32.xlu0 %v1100, 32
      %v1142 = vpop.permute.xlu0 %1141
      %1143 = vrot.lane.b32.xlu0 %v1101, 32
      %v1144 = vpop.permute.xlu0 %1143
      %1145 = vrot.lane.b32.xlu0 %v1102, 32
      %v1146 = vpop.permute.xlu0 %1145
      %1159 = vrot.lane.b32.xlu0 %v1103, 64
      %v1160 = vpop.permute.xlu0 %1159
      %1161 = vrot.lane.b32.xlu0 %v1104, 64
      %v1162 = vpop.permute.xlu0 %1161
      %1163 = vrot.lane.b32.xlu0 %v1105, 64
      %v1164 = vpop.permute.xlu0 %1163
      %1165 = vrot.lane.b32.xlu0 %v1106, 64
      %v1166 = vpop.permute.xlu0 %1165
      %1167 = vrot.lane.b32.xlu0 %v1107, 64
      %v1168 = vpop.permute.xlu0 %1167
      %1169 = vrot.lane.b32.xlu0 %v1108, 64
      %v1170 = vpop.permute.xlu0 %1169
      %1179 = vrot.lane.b32.xlu0 %v1098, 96
      %v1180 = vpop.permute.xlu0 %1179
      %1181 = vrot.lane.b32.xlu0 %v1099, 96
      %v1182 = vpop.permute.xlu0 %1181
      %1183 = vrot.lane.b32.xlu0 %v1100, 96
      %v1184 = vpop.permute.xlu0 %1183
      %1185 = vrot.lane.b32.xlu0 %v1101, 96
      %v1186 = vpop.permute.xlu0 %1185
      %1187 = vrot.lane.b32.xlu0 %v1109, 96
      %v1188 = vpop.permute.xlu0 %1187
      %1189 = vrot.lane.b32.xlu0 %v1110, 96
      %v1190 = vpop.permute.xlu0 %1189
      %v1197 = vsel %vm479, %v1091, %v1136
      %v1198 = vsel %vm479, %v1092, %v1138
      %v1199 = vsel %vm479, %v1093, %v1140
      %v1200 = vsel %vm479, %v1094, %v1142
      %v1201 = vsel %vm479, %v1095, %v1144
      %v1202 = vsel %vm479, %v1096, %v1146
      %v1203 = vsel %vm639, %v1197, %v1160
      %v1204 = vsel %vm639, %v1198, %v1162
      %v1205 = vsel %vm639, %v1199, %v1164
      %v1206 = vsel %vm639, %v1200, %v1166
      %v1207 = vsel %vm639, %v1201, %v1168
      %v1208 = vsel %vm639, %v1202, %v1170
      %v1209 = vsel %vm648, %v1203, %v1180
      %v1210 = vsel %vm648, %v1204, %v1182
      %v1211 = vsel %vm648, %v1205, %v1184
      %v1212 = vsel %vm648, %v1206, %v1186
      %v1213 = vsel %vm648, %v1207, %v1188
      %v1214 = vsel %vm648, %v1208, %v1190
      %1215 = vst [vmem:[#allocation4] sm:$0xff] %v1209
      %1216 = vst [vmem:[#allocation4 + $0x18] sm:$0xff] %v1210
      %1217 = vst [vmem:[#allocation4 + $0x30] sm:$0xff] %v1211
      %1218 = vst [vmem:[#allocation4 + $0x48] sm:$0xff] %v1212
      %1219 = vst [vmem:[#allocation4 + $0x60] sm:$0xff] %v1213
      %1220 = vst [vmem:[#allocation4 + $0x78] sm:$0x1f] %v1214
      %1227 = vrot.lane.b32.xlu0 %v1113, 32
      %v1228 = vpop.permute.xlu0 %1227
      %1229 = vrot.lane.b32.xlu0 %v1114, 32
      %v1230 = vpop.permute.xlu0 %1229
      %1231 = vrot.lane.b32.xlu0 %v1115, 32
      %v1232 = vpop.permute.xlu0 %1231
      %1233 = vrot.lane.b32.xlu0 %v1116, 32
      %v1234 = vpop.permute.xlu0 %1233
      %1235 = vrot.lane.b32.xlu0 %v1117, 32
      %v1236 = vpop.permute.xlu0 %1235
      %1237 = vrot.lane.b32.xlu0 %v1118, 32
      %v1238 = vpop.permute.xlu0 %1237
      %1248 = vrot.lane.b32.xlu0 %v1111, 64
      %v1249 = vpop.permute.xlu0 %1248
      %1250 = vrot.lane.b32.xlu0 %v1119, 64
      %v1251 = vpop.permute.xlu0 %1250
      %1252 = vrot.lane.b32.xlu0 %v1120, 64
      %v1253 = vpop.permute.xlu0 %1252
      %1259 = vrot.lane.b32.xlu0 %v1114, 96
      %v1260 = vpop.permute.xlu0 %1259
      %1261 = vrot.lane.b32.xlu0 %v1115, 96
      %v1262 = vpop.permute.xlu0 %1261
      %1263 = vrot.lane.b32.xlu0 %v1116, 96
      %v1264 = vpop.permute.xlu0 %1263
      %1265 = vrot.lane.b32.xlu0 %v1117, 96
      %v1266 = vpop.permute.xlu0 %1265
      %1267 = vrot.lane.b32.xlu0 %v1121, 96
      %v1268 = vpop.permute.xlu0 %1267
      %1269 = vrot.lane.b32.xlu0 %v1122, 96
      %v1270 = vpop.permute.xlu0 %1269
      %v1277 = vsel %vm479, %v1104, %v1228
      %v1278 = vsel %vm479, %v1105, %v1230
      %v1279 = vsel %vm479, %v1106, %v1232
      %v1280 = vsel %vm479, %v1107, %v1234
      %v1281 = vsel %vm479, %v1111, %v1236
      %v1282 = vsel %vm479, %v1112, %v1238
      %v1283 = vsel %vm639, %v1277, %v1164
      %v1284 = vsel %vm639, %v1278, %v1166
      %v1285 = vsel %vm639, %v1279, %v1168
      %v1286 = vsel %vm639, %v1280, %v1249
      %v1287 = vsel %vm639, %v1281, %v1251
      %v1288 = vsel %vm639, %v1282, %v1253
      %v1289 = vsel %vm648, %v1283, %v1260
      %v1290 = vsel %vm648, %v1284, %v1262
      %v1291 = vsel %vm648, %v1285, %v1264
      %v1292 = vsel %vm648, %v1286, %v1266
      %v1293 = vsel %vm648, %v1287, %v1268
      %v1294 = vsel %vm648, %v1288, %v1270
      %1295 = vst [vmem:[#allocation4 + $0x8] sm:$0xff] %v1289
      %1296 = vst [vmem:[#allocation4 + $0x20] sm:$0xff] %v1290
      %1297 = vst [vmem:[#allocation4 + $0x38] sm:$0xff] %v1291
      %1298 = vst [vmem:[#allocation4 + $0x50] sm:$0xff] %v1292
      %1299 = vst [vmem:[#allocation4 + $0x68] sm:$0xff] %v1293
      %1300 = vst [vmem:[#allocation4 + $0x80] sm:$0x1f] %v1294
      %1301 = vst.msk [vmem:[#allocation4 + $0x10] sm:$0xff] %vm479, %v1123
      %1302 = vst.msk [vmem:[#allocation4 + $0x28] sm:$0xff] %vm479, %v1124
      %1303 = vst.msk [vmem:[#allocation4 + $0x40] sm:$0xff] %vm479, %v1125
      %1304 = vst.msk [vmem:[#allocation4 + $0x58] sm:$0xff] %vm479, %v1126
      %1305 = vst.msk [vmem:[#allocation4 + $0x70] sm:$0xff] %vm479, %v1127
      %vm1306 = vcmask 258048
      %1307 = vst.msk [vmem:[#allocation4 + $0x88] sm:$0x1f] %vm1306, %v1128
      %v1308 = vld [vmem:[#allocation4] sm:$0xff]
      %v1309 = vld [vmem:[#allocation4 + $0x8] sm:$0xff]
      %v1310 = vld [vmem:[#allocation4 + $0x10] sm:$0xff]
      %v1311 = vld [vmem:[#allocation4 + $0x18] sm:$0xff]
      %v1312 = vld [vmem:[#allocation4 + $0x20] sm:$0xff]
      %v1313 = vld [vmem:[#allocation4 + $0x28] sm:$0xff]
      %v1314 = vld [vmem:[#allocation4 + $0x30] sm:$0xff]
      %v1315 = vld [vmem:[#allocation4 + $0x38] sm:$0xff]
      %v1316 = vld [vmem:[#allocation4 + $0x40] sm:$0xff]
      %v1317 = vld [vmem:[#allocation4 + $0x48] sm:$0xff]
      %v1318 = vld [vmem:[#allocation4 + $0x50] sm:$0xff]
      %v1319 = vld [vmem:[#allocation4 + $0x58] sm:$0xff]
      %v1320 = vld [vmem:[#allocation4 + $0x60] sm:$0xff]
      %v1321 = vld [vmem:[#allocation4 + $0x68] sm:$0xff]
      %v1322 = vld [vmem:[#allocation4 + $0x70] sm:$0xff]
      %v1323 = vld [vmem:[#allocation4 + $0x78] sm:$0x1f]
      %v1324 = vld [vmem:[#allocation4 + $0x80] sm:$0x1f]
      %v1325 = vld [vmem:[#allocation4 + $0x88] sm:$0x1f]
      %v1326 = vld [vmem:[%s3] sm:$0xff]
      %v1327 = vld [vmem:[%s3 + $0x8] sm:$0xff]
      %v1328 = vld [vmem:[%s3 + $0x10] sm:$0xff]
      %v1329 = vld [vmem:[%s3 + $0x18] sm:$0xff]
      %v1330 = vld [vmem:[%s3 + $0x20] sm:$0xff]
      %v1331 = vld [vmem:[%s3 + $0x28] sm:$0xff]
      %v1332 = vld [vmem:[%s3 + $0x30] sm:$0xff]
      %v1333 = vld [vmem:[%s3 + $0x38] sm:$0xff]
      %v1334 = vld [vmem:[%s3 + $0x40] sm:$0xff]
      %v1335 = vld [vmem:[%s3 + $0x48] sm:$0xff]
      %v1336 = vld [vmem:[%s3 + $0x50] sm:$0xff]
      %v1337 = vld [vmem:[%s3 + $0x58] sm:$0xff]
      %v1338 = vld [vmem:[%s3 + $0x60] sm:$0xff]
      %v1339 = vld [vmem:[%s3 + $0x68] sm:$0xff]
      %v1340 = vld [vmem:[%s3 + $0x70] sm:$0xff]
      %v1341 = vld [vmem:[%s3 + $0x78] sm:$0xff]
      %v1342 = vld [vmem:[%s3 + $0x80] sm:$0xff]
      %v1343 = vld [vmem:[%s3 + $0x88] sm:$0xff]
      %v1344 = vld [vmem:[%s3 + $0x90] sm:$0xff]
      %v1345 = vld [vmem:[%s3 + $0x98] sm:$0xff]
      %v1346 = vld [vmem:[%s3 + $0xa0] sm:$0xff]
      %v1347 = vld [vmem:[%s3 + $0xa8] sm:$0xff]
      %v1348 = vld [vmem:[%s3 + $0xb0] sm:$0xff]
      %v1349 = vld [vmem:[%s3 + $0xb8] sm:$0xff]
      %v1350 = vld [vmem:[%s3 + $0xc0] sm:$0xff]
      %v1351 = vld [vmem:[%s3 + $0xc8] sm:$0xff]
      %v1352 = vld [vmem:[%s3 + $0xd0] sm:$0xff]
      %v1353 = vld [vmem:[%s3 + $0xd8] sm:$0xff]
      %v1354 = vld [vmem:[%s3 + $0xe0] sm:$0xff]
      %v1355 = vld [vmem:[%s3 + $0xe8] sm:$0xff]
      %v1356 = vld [vmem:[%s3 + $0xf0] sm:$0xff]
      %v1357 = vld [vmem:[%s3 + $0xf8] sm:$0xff]
      %v1358 = vld [vmem:[%s3 + $0x100] sm:$0xff]
      %v1359 = vld [vmem:[%s3 + $0x108] sm:$0xff]
      %v1360 = vld [vmem:[%s3 + $0x110] sm:$0xff]
      %v1361 = vld [vmem:[%s3 + $0x118] sm:$0xff]
      %v1362 = vlaneseq
      %v1363 = vshrl.u32 %v1362, 7
      %v1364 = vsub.s32 0, %v1363
      %v1365 = vrot.slane %v1090, %v1364
      %v1367 = vsel %vm479, %v1310, 0
      %v1370 = vsel %vm479, %v1313, 0
      %v1373 = vsel %vm479, %v1316, 0
      %v1376 = vsel %vm479, %v1319, 0
      %v1379 = vsel %vm479, %v1322, 0
      %v1382 = vsel %vm479, %v1325, 0
      %1384 = vmatprep.subr.mxu0 0.0
      %1385 = vmatpush1.msra.mxu0 %v1326
      %1386 = vmatprep.subr.mxu0 0.0
      %1387 = vmatpush1.msra.mxu0 %v1327
      %1388 = vmatprep.subr.mxu0 0.0
      %1389 = vmatpush1.msra.mxu0 %v1328
      %1390 = vmatprep.subr.mxu0 0.0
      %1391 = vmatpush1.msra.mxu0 %v1329
      %1392 = vmatprep.subr.mxu0 0.0
      %1393 = vmatpush1.msra.mxu0 %v1330
      %1394 = vmatprep.subr.mxu0 0.0
      %1395 = vmatpush1.msra.mxu0 %v1331
      %1396 = vmatprep.subr.mxu0 0.0
      %1397 = vmatpush1.msra.mxu0 %v1332
      %1398 = vmatprep.subr.mxu0 0.0
      %1399 = vmatpush1.msra.mxu0 %v1333
      %1400 = vmatprep.subr.mxu0 0.0
      %1401 = vmatpush1.msra.mxu0 %v1334
      %1402 = vmatprep.subr.mxu0 0.0
      %1403 = vmatpush1.msra.mxu0 %v1335
      %1404 = vmatprep.subr.mxu0 0.0
      %1405 = vmatpush1.msra.mxu0 %v1336
      %1406 = vmatprep.subr.mxu0 0.0
      %1407 = vmatpush1.msra.mxu0 %v1337
      %1408 = vmatprep.subr.mxu0 0.0
      %1409 = vmatpush1.msra.mxu0 %v1338
      %1410 = vmatprep.subr.mxu0 0.0
      %1411 = vmatpush1.msra.mxu0 %v1339
      %1412 = vmatprep.subr.mxu0 0.0
      %1413 = vmatpush1.msra.mxu0 %v1340
      %1414 = vmatprep.subr.mxu0 0.0
      %1415 = vmatpush1.msra.mxu0 %v1341
      %1416 = vmatprep.subr.mxu0 0.0
      %1417 = vmatpush1.msra.mxu0 %v1342
      %1418 = vmatprep.subr.mxu0 0.0
      %1419 = vmatpush1.msra.mxu0 %v1343
      %1420 = vmatprep.subr.mxu0 0.0
      %1421 = vmatpush1.msra.mxu0 %v1344
      %1422 = vmatprep.subr.mxu0 0.0
      %1423 = vmatpush1.msra.mxu0 %v1345
      %1424 = vmatprep.subr.mxu0 0.0
      %1425 = vmatpush1.msra.mxu0 %v1346
      %1426 = vmatprep.subr.mxu0 0.0
      %1427 = vmatpush1.msra.mxu0 %v1347
      %1428 = vmatprep.subr.mxu0 0.0
      %1429 = vmatpush1.msra.mxu0 %v1348
      %1430 = vmatprep.subr.mxu0 0.0
      %1431 = vmatpush1.msra.mxu0 %v1349
      %1432 = vmatprep.subr.mxu0 0.0
      %1433 = vmatpush1.msra.mxu0 %v1350
      %1434 = vmatprep.subr.mxu0 0.0
      %1435 = vmatpush1.msra.mxu0 %v1351
      %1436 = vmatprep.subr.mxu0 0.0
      %1437 = vmatpush1.msra.mxu0 %v1352
      %1438 = vmatprep.subr.mxu0 0.0
      %1439 = vmatpush1.msra.mxu0 %v1353
      %1440 = vmatprep.subr.mxu0 0.0
      %1441 = vmatpush1.msra.mxu0 %v1354
      %1442 = vmatprep.subr.mxu0 0.0
      %1443 = vmatpush1.msra.mxu0 %v1355
      %1444 = vmatprep.subr.mxu0 0.0
      %1445 = vmatpush1.msra.mxu0 %v1356
      %1446 = vmatprep.subr.mxu0 0.0
      %1447 = vmatpush1.msra.mxu0 %v1357
      %1448 = vmatprep.mubr.f32.mxu0 %v1309
      %1449 = vmatmul.mubr.f32.gmra.mrb[0].mxu0 %v1308
      %v1450 = vpop.f32.mrb[0].mxu0
      %v1451 = vadd.f32 %v1365, %v1450
      %v1452 = vpop.f32.mrb[0].mxu0
      %1453 = vmatprep.mubr.f32.mxu0 %v1312
      %1454 = vmatmul.mubr.f32.gmra.mrb[0].mxu0 %v1311
      %v1455 = vpop.f32.mrb[0].mxu0
      %v1456 = vadd.f32 %v1365, %v1455
      %v1457 = vpop.f32.mrb[0].mxu0
      %1458 = vmatprep.mubr.f32.mxu0 %v1315
      %1459 = vmatmul.mubr.f32.gmra.mrb[0].mxu0 %v1314
      %v1460 = vpop.f32.mrb[0].mxu0
      %v1461 = vadd.f32 %v1365, %v1460
      %v1462 = vpop.f32.mrb[0].mxu0
      %1463 = vmatprep.mubr.f32.mxu0 %v1318
      %1464 = vmatmul.mubr.f32.gmra.mrb[0].mxu0 %v1317
      %v1465 = vpop.f32.mrb[0].mxu0
      %v1466 = vadd.f32 %v1365, %v1465
      %v1467 = vpop.f32.mrb[0].mxu0
      %1468 = vmatprep.mubr.f32.mxu0 %v1321
      %1469 = vmatmul.mubr.f32.gmra.mrb[0].mxu0 %v1320
      %v1470 = vpop.f32.mrb[0].mxu0
      %v1471 = vadd.f32 %v1365, %v1470
      %v1472 = vpop.f32.mrb[0].mxu0
      %1473 = vmatprep.mubr.f32.mxu0 %v1324
      %1474 = vmatmul.mubr.f32.gmra.mrb[0].mxu0 %v1323
      %v1475 = vpop.f32.mrb[0].mxu0
      %v1476 = vadd.f32 %v1365, %v1475
      %v1477 = vpop.f32.mrb[0].mxu0
      %1478 = vdwg.mxu0
      %1479 = vmatprep.subr.mxu0 0.0
      %1480 = vmatpush1.msra.mxu0 %v1358
      %1481 = vmatprep.subr.mxu0 0.0
      %1482 = vmatpush1.msra.mxu0 %v1359
      %1483 = vmatprep.subr.mxu0 0.0
      %1484 = vmatpush1.msra.mxu0 %v1360
      %1485 = vmatprep.subr.mxu0 0.0
      %1486 = vmatpush1.msra.mxu0 %v1361
      %1487 = vmatprep.subr.mxu0 0.0
      %1488 = vmatpush1.msra.mxu0 0.0
      %1489 = vmatprep.subr.mxu0 0.0
      %1490 = vmatpush1.msra.mxu0 0.0
      %1491 = vmatprep.subr.mxu0 0.0
      %1492 = vmatpush1.msra.mxu0 0.0
      %1493 = vmatprep.subr.mxu0 0.0
      %1494 = vmatpush1.msra.mxu0 0.0
      %1495 = vmatprep.subr.mxu0 0.0
      %1496 = vmatpush1.msra.mxu0 0.0
      %1497 = vmatprep.subr.mxu0 0.0
      %1498 = vmatpush1.msra.mxu0 0.0
      %1499 = vmatprep.subr.mxu0 0.0
      %1500 = vmatpush1.msra.mxu0 0.0
      %1501 = vmatprep.subr.mxu0 0.0
      %1502 = vmatpush1.msra.mxu0 0.0
      %1503 = vmatprep.subr.mxu0 0.0
      %1504 = vmatpush1.msra.mxu0 0.0
      %1505 = vmatprep.subr.mxu0 0.0
      %1506 = vmatpush1.msra.mxu0 0.0
      %1507 = vmatprep.subr.mxu0 0.0
      %1508 = vmatpush1.msra.mxu0 0.0
      %1509 = vmatprep.subr.mxu0 0.0
      %1510 = vmatpush1.msra.mxu0 0.0
      %1511 = vmatprep.subr.mxu0 0.0
      %1512 = vmatpush1.msra.mxu0 0.0
      %1513 = vmatprep.subr.mxu0 0.0
      %1514 = vmatpush1.msra.mxu0 0.0
      %1515 = vmatprep.subr.mxu0 0.0
      %1516 = vmatpush1.msra.mxu0 0.0
      %1517 = vmatprep.subr.mxu0 0.0
      %1518 = vmatpush1.msra.mxu0 0.0
      %1519 = vmatprep.subr.mxu0 0.0
      %1520 = vmatpush1.msra.mxu0 0.0
      %1521 = vmatprep.subr.mxu0 0.0
      %1522 = vmatpush1.msra.mxu0 0.0
      %1523 = vmatprep.subr.mxu0 0.0
      %1524 = vmatpush1.msra.mxu0 0.0
      %1525 = vmatprep.subr.mxu0 0.0
      %1526 = vmatpush1.msra.mxu0 0.0
      %1527 = vmatprep.subr.mxu0 0.0
      %1528 = vmatpush1.msra.mxu0 0.0
      %1529 = vmatprep.subr.mxu0 0.0
      %1530 = vmatpush1.msra.mxu0 0.0
      %1531 = vmatprep.subr.mxu0 0.0
      %1532 = vmatpush1.msra.mxu0 0.0
      %1533 = vmatprep.subr.mxu0 0.0
      %1534 = vmatpush1.msra.mxu0 0.0
      %1535 = vmatprep.subr.mxu0 0.0
      %1536 = vmatpush1.msra.mxu0 0.0
      %1537 = vmatprep.subr.mxu0 0.0
      %1538 = vmatpush1.msra.mxu0 0.0
      %1539 = vmatprep.subr.mxu0 0.0
      %1540 = vmatpush1.msra.mxu0 0.0
      %1541 = vmatprep.subr.mxu0 0.0
      %1542 = vmatpush1.msra.mxu0 0.0
      %1543 = vmatprep.mubr.f32.mxu0 0.0
      %1544 = vmatmul.mubr.f32.gmra.mrb[0].mxu0 %v1367
      %v1545 = vpop.f32.mrb[0].mxu0
      %v1546 = vadd.f32 %v1451, %v1545
      %v1547 = vpop.f32.mrb[0].mxu0
      %1548 = vmatprep.mubr.f32.mxu0 0.0
      %1549 = vmatmul.mubr.f32.gmra.mrb[0].mxu0 %v1370
      %v1550 = vpop.f32.mrb[0].mxu0
      %v1551 = vadd.f32 %v1456, %v1550
      %v1552 = vpop.f32.mrb[0].mxu0
      %1553 = vmatprep.mubr.f32.mxu0 0.0
      %1554 = vmatmul.mubr.f32.gmra.mrb[0].mxu0 %v1373
      %v1555 = vpop.f32.mrb[0].mxu0
      %v1556 = vadd.f32 %v1461, %v1555
      %v1557 = vpop.f32.mrb[0].mxu0
      %1558 = vmatprep.mubr.f32.mxu0 0.0
      %1559 = vmatmul.mubr.f32.gmra.mrb[0].mxu0 %v1376
      %v1560 = vpop.f32.mrb[0].mxu0
      %v1561 = vadd.f32 %v1466, %v1560
      %v1562 = vpop.f32.mrb[0].mxu0
      %1563 = vmatprep.mubr.f32.mxu0 0.0
      %1564 = vmatmul.mubr.f32.gmra.mrb[0].mxu0 %v1379
      %v1565 = vpop.f32.mrb[0].mxu0
      %v1566 = vadd.f32 %v1471, %v1565
      %v1567 = vpop.f32.mrb[0].mxu0
      %1568 = vmatprep.mubr.f32.mxu0 0.0
      %1569 = vmatmul.mubr.f32.gmra.mrb[0].mxu0 %v1382
      %v1570 = vpop.f32.mrb[0].mxu0
      %v1571 = vadd.f32 %v1476, %v1570
      %v1572 = vpop.f32.mrb[0].mxu0
      %1573 = vdwg.mxu0
      %v1574 = vmax.f32 %v1546, 0.0
      %v1575 = vmax.f32 %v1551, 0.0
      %v1576 = vmax.f32 %v1556, 0.0
      %v1577 = vmax.f32 %v1561, 0.0
      %v1578 = vmax.f32 %v1566, 0.0
      %v1579 = vmax.f32 %v1571, 0.0
      %1580 = vst.msk [vmem:[#allocation2] sm:$0xff] %vm479, %v1574
      %1581 = vst.msk [vmem:[#allocation2 + $0x8] sm:$0xff] %vm479, %v1575
      %1582 = vst.msk [vmem:[#allocation2 + $0x10] sm:$0xff] %vm479, %v1576
      %1583 = vst.msk [vmem:[#allocation2 + $0x18] sm:$0xff] %vm479, %v1577
      %1584 = vst.msk [vmem:[#allocation2 + $0x20] sm:$0xff] %vm479, %v1578
      %1585 = vst.msk [vmem:[#allocation2 + $0x28] sm:$0x1f] %vm1306, %v1579
      %v1586 = vld [vmem:[%s5 + $0x3] sm:$0x1]
      %v1587 = vld [vmem:[#allocation2] sm:$0xff]
      %v1588 = vld [vmem:[#allocation2 + $0x8] sm:$0xff]
      %v1589 = vld [vmem:[#allocation2 + $0x10] sm:$0xff]
      %v1590 = vld [vmem:[#allocation2 + $0x18] sm:$0x7]
      %v1591 = vld [vmem:[#allocation2 + $0x1] sm:$0xff]
      %v1592 = vld [vmem:[#allocation2 + $0x9] sm:$0xff]
      %v1593 = vld [vmem:[#allocation2 + $0x11] sm:$0xff]
      %v1594 = vld [vmem:[#allocation2 + $0x19] sm:$0x7]
      %v1595 = vld [vmem:[#allocation2 + $0x2] sm:$0xff]
      %v1596 = vld [vmem:[#allocation2 + $0xa] sm:$0xff]
      %v1597 = vld [vmem:[#allocation2 + $0x12] sm:$0xff]
      %v1598 = vld [vmem:[#allocation2 + $0x1a] sm:$0x7]
      %v1599 = vld [vmem:[#allocation2 + $0x19] sm:$0xff]
      %v1600 = vld [vmem:[#allocation2 + $0x21] sm:$0x7]
      %v1601 = vld [vmem:[#allocation2 + $0x1a] sm:$0xff]
      %v1602 = vld [vmem:[#allocation2 + $0x22] sm:$0x7]
      %v1603 = vld [vmem:[#allocation2 + $0xb] sm:$0xff]
      %v1604 = vld [vmem:[#allocation2 + $0x13] sm:$0xff]
      %v1605 = vld [vmem:[#allocation2 + $0x1b] sm:$0xff]
      %v1606 = vld [vmem:[#allocation2 + $0x23] sm:$0x7]
      %v1607 = vld [vmem:[#allocation2 + $0x22] sm:$0xff]
      %v1608 = vld [vmem:[#allocation2 + $0x2a] sm:$0x7]
      %v1609 = vld [vmem:[#allocation2 + $0x23] sm:$0xff]
      %v1610 = vld [vmem:[#allocation2 + $0x2b] sm:$0x7]
      %v1611 = vld [vmem:[#allocation2 + $0x14] sm:$0xff]
      %v1612 = vld [vmem:[#allocation2 + $0x1c] sm:$0xff]
      %v1613 = vld [vmem:[#allocation2 + $0x24] sm:$0xff]
      %v1614 = vld [vmem:[#allocation2 + $0x2c] sm:$0x7]
      %1619 = vrot.lane.b32.xlu0 %v1591, 32
      %v1620 = vpop.permute.xlu0 %1619
      %1621 = vrot.lane.b32.xlu0 %v1592, 32
      %v1622 = vpop.permute.xlu0 %1621
      %1623 = vrot.lane.b32.xlu0 %v1593, 32
      %v1624 = vpop.permute.xlu0 %1623
      %1625 = vrot.lane.b32.xlu0 %v1594, 32
      %v1626 = vpop.permute.xlu0 %1625
      %1635 = vrot.lane.b32.xlu0 %v1595, 64
      %v1636 = vpop.permute.xlu0 %1635
      %1637 = vrot.lane.b32.xlu0 %v1596, 64
      %v1638 = vpop.permute.xlu0 %1637
      %1639 = vrot.lane.b32.xlu0 %v1597, 64
      %v1640 = vpop.permute.xlu0 %1639
      %1641 = vrot.lane.b32.xlu0 %v1598, 64
      %v1642 = vpop.permute.xlu0 %1641
      %1649 = vrot.lane.b32.xlu0 %v1592, 96
      %v1650 = vpop.permute.xlu0 %1649
      %1651 = vrot.lane.b32.xlu0 %v1593, 96
      %v1652 = vpop.permute.xlu0 %1651
      %1653 = vrot.lane.b32.xlu0 %v1599, 96
      %v1654 = vpop.permute.xlu0 %1653
      %1655 = vrot.lane.b32.xlu0 %v1600, 96
      %v1656 = vpop.permute.xlu0 %1655
      %v1661 = vsel %vm479, %v1587, %v1620
      %v1662 = vsel %vm479, %v1588, %v1622
      %v1663 = vsel %vm479, %v1589, %v1624
      %v1664 = vsel %vm479, %v1590, %v1626
      %v1665 = vsel %vm639, %v1661, %v1636
      %v1666 = vsel %vm639, %v1662, %v1638
      %v1667 = vsel %vm639, %v1663, %v1640
      %v1668 = vsel %vm639, %v1664, %v1642
      %v1669 = vsel %vm648, %v1665, %v1650
      %v1670 = vsel %vm648, %v1666, %v1652
      %v1671 = vsel %vm648, %v1667, %v1654
      %v1672 = vsel %vm648, %v1668, %v1656
      %1673 = vst [vmem:[#allocation4] sm:$0xff] %v1669
      %1674 = vst [vmem:[#allocation4 + $0x18] sm:$0xff] %v1670
      %1675 = vst [vmem:[#allocation4 + $0x30] sm:$0xff] %v1671
      %1676 = vst [vmem:[#allocation4 + $0x48] sm:$0x7] %v1672
      %1681 = vrot.lane.b32.xlu0 %v1603, 32
      %v1682 = vpop.permute.xlu0 %1681
      %1683 = vrot.lane.b32.xlu0 %v1604, 32
      %v1684 = vpop.permute.xlu0 %1683
      %1685 = vrot.lane.b32.xlu0 %v1605, 32
      %v1686 = vpop.permute.xlu0 %1685
      %1687 = vrot.lane.b32.xlu0 %v1606, 32
      %v1688 = vpop.permute.xlu0 %1687
      %1696 = vrot.lane.b32.xlu0 %v1601, 64
      %v1697 = vpop.permute.xlu0 %1696
      %1698 = vrot.lane.b32.xlu0 %v1607, 64
      %v1699 = vpop.permute.xlu0 %1698
      %1700 = vrot.lane.b32.xlu0 %v1608, 64
      %v1701 = vpop.permute.xlu0 %1700
      %1707 = vrot.lane.b32.xlu0 %v1604, 96
      %v1708 = vpop.permute.xlu0 %1707
      %1709 = vrot.lane.b32.xlu0 %v1605, 96
      %v1710 = vpop.permute.xlu0 %1709
      %1711 = vrot.lane.b32.xlu0 %v1609, 96
      %v1712 = vpop.permute.xlu0 %1711
      %1713 = vrot.lane.b32.xlu0 %v1610, 96
      %v1714 = vpop.permute.xlu0 %1713
      %v1719 = vsel %vm479, %v1596, %v1682
      %v1720 = vsel %vm479, %v1597, %v1684
      %v1721 = vsel %vm479, %v1601, %v1686
      %v1722 = vsel %vm479, %v1602, %v1688
      %v1723 = vsel %vm639, %v1719, %v1640
      %v1724 = vsel %vm639, %v1720, %v1697
      %v1725 = vsel %vm639, %v1721, %v1699
      %v1726 = vsel %vm639, %v1722, %v1701
      %v1727 = vsel %vm648, %v1723, %v1708
      %v1728 = vsel %vm648, %v1724, %v1710
      %v1729 = vsel %vm648, %v1725, %v1712
      %v1730 = vsel %vm648, %v1726, %v1714
      %1731 = vst [vmem:[#allocation4 + $0x8] sm:$0xff] %v1727
      %1732 = vst [vmem:[#allocation4 + $0x20] sm:$0xff] %v1728
      %1733 = vst [vmem:[#allocation4 + $0x38] sm:$0xff] %v1729
      %1734 = vst [vmem:[#allocation4 + $0x50] sm:$0x7] %v1730
      %1735 = vst.msk [vmem:[#allocation4 + $0x10] sm:$0xff] %vm479, %v1611
      %1736 = vst.msk [vmem:[#allocation4 + $0x28] sm:$0xff] %vm479, %v1612
      %1737 = vst.msk [vmem:[#allocation4 + $0x40] sm:$0xff] %vm479, %v1613
      %vm1738 = vcmask 256000
      %1739 = vst.msk [vmem:[#allocation4 + $0x58] sm:$0x7] %vm1738, %v1614
      %v1740 = vld [vmem:[#allocation4] sm:$0xff]
      %v1741 = vld [vmem:[#allocation4 + $0x8] sm:$0xff]
      %v1742 = vld [vmem:[#allocation4 + $0x10] sm:$0xff]
      %v1743 = vld [vmem:[#allocation4 + $0x18] sm:$0xff]
      %v1744 = vld [vmem:[#allocation4 + $0x20] sm:$0xff]
      %v1745 = vld [vmem:[#allocation4 + $0x28] sm:$0xff]
      %v1746 = vld [vmem:[#allocation4 + $0x30] sm:$0xff]
      %v1747 = vld [vmem:[#allocation4 + $0x38] sm:$0xff]
      %v1748 = vld [vmem:[#allocation4 + $0x40] sm:$0xff]
      %v1749 = vld [vmem:[#allocation4 + $0x48] sm:$0x7]
      %v1750 = vld [vmem:[#allocation4 + $0x50] sm:$0x7]
      %v1751 = vld [vmem:[#allocation4 + $0x58] sm:$0x7]
      %v1752 = vld [vmem:[%s4] sm:$0xff]
      %v1753 = vld [vmem:[%s4 + $0x8] sm:$0xff]
      %v1754 = vld [vmem:[%s4 + $0x10] sm:$0xff]
      %v1755 = vld [vmem:[%s4 + $0x18] sm:$0xff]
      %v1756 = vld [vmem:[%s4 + $0x20] sm:$0xff]
      %v1757 = vld [vmem:[%s4 + $0x28] sm:$0xff]
      %v1758 = vld [vmem:[%s4 + $0x30] sm:$0xff]
      %v1759 = vld [vmem:[%s4 + $0x38] sm:$0xff]
      %v1760 = vld [vmem:[%s4 + $0x40] sm:$0xff]
      %v1761 = vld [vmem:[%s4 + $0x48] sm:$0xff]
      %v1762 = vld [vmem:[%s4 + $0x50] sm:$0xff]
      %v1763 = vld [vmem:[%s4 + $0x58] sm:$0xff]
      %v1764 = vld [vmem:[%s4 + $0x60] sm:$0xff]
      %v1765 = vld [vmem:[%s4 + $0x68] sm:$0xff]
      %v1766 = vld [vmem:[%s4 + $0x70] sm:$0xff]
      %v1767 = vld [vmem:[%s4 + $0x78] sm:$0xff]
      %v1768 = vld [vmem:[%s4 + $0x80] sm:$0xff]
      %v1769 = vld [vmem:[%s4 + $0x88] sm:$0xff]
      %v1770 = vld [vmem:[%s4 + $0x90] sm:$0xff]
      %v1771 = vld [vmem:[%s4 + $0x98] sm:$0xff]
      %v1772 = vld [vmem:[%s4 + $0xa0] sm:$0xff]
      %v1773 = vld [vmem:[%s4 + $0xa8] sm:$0xff]
      %v1774 = vld [vmem:[%s4 + $0xb0] sm:$0xff]
      %v1775 = vld [vmem:[%s4 + $0xb8] sm:$0xff]
      %v1776 = vld [vmem:[%s4 + $0xc0] sm:$0xff]
      %v1777 = vld [vmem:[%s4 + $0xc8] sm:$0xff]
      %v1778 = vld [vmem:[%s4 + $0xd0] sm:$0xff]
      %v1779 = vld [vmem:[%s4 + $0xd8] sm:$0xff]
      %v1780 = vld [vmem:[%s4 + $0xe0] sm:$0xff]
      %v1781 = vld [vmem:[%s4 + $0xe8] sm:$0xff]
      %v1782 = vld [vmem:[%s4 + $0xf0] sm:$0xff]
      %v1783 = vld [vmem:[%s4 + $0xf8] sm:$0xff]
      %v1784 = vld [vmem:[%s4 + $0x100] sm:$0xff]
      %v1785 = vld [vmem:[%s4 + $0x108] sm:$0xff]
      %v1786 = vld [vmem:[%s4 + $0x110] sm:$0xff]
      %v1787 = vld [vmem:[%s4 + $0x118] sm:$0xff]
      %v1788 = vlaneseq
      %v1789 = vshrl.u32 %v1788, 7
      %v1790 = vsub.s32 0, %v1789
      %v1791 = vrot.slane %v1586, %v1790
      %v1793 = vsel %vm479, %v1742, 0
      %v1796 = vsel %vm479, %v1745, 0
      %v1799 = vsel %vm479, %v1748, 0
      %v1802 = vsel %vm479, %v1751, 0
      %1804 = vmatprep.subr.mxu0 0.0
      %1805 = vmatpush1.msra.mxu0 %v1752
      %1806 = vmatprep.subr.mxu0 0.0
      %1807 = vmatpush1.msra.mxu0 %v1753
      %1808 = vmatprep.subr.mxu0 0.0
      %1809 = vmatpush1.msra.mxu0 %v1754
      %1810 = vmatprep.subr.mxu0 0.0
      %1811 = vmatpush1.msra.mxu0 %v1755
      %1812 = vmatprep.subr.mxu0 0.0
      %1813 = vmatpush1.msra.mxu0 %v1756
      %1814 = vmatprep.subr.mxu0 0.0
      %1815 = vmatpush1.msra.mxu0 %v1757
      %1816 = vmatprep.subr.mxu0 0.0
      %1817 = vmatpush1.msra.mxu0 %v1758
      %1818 = vmatprep.subr.mxu0 0.0
      %1819 = vmatpush1.msra.mxu0 %v1759
      %1820 = vmatprep.subr.mxu0 0.0
      %1821 = vmatpush1.msra.mxu0 %v1760
      %1822 = vmatprep.subr.mxu0 0.0
      %1823 = vmatpush1.msra.mxu0 %v1761
      %1824 = vmatprep.subr.mxu0 0.0
      %1825 = vmatpush1.msra.mxu0 %v1762
      %1826 = vmatprep.subr.mxu0 0.0
      %1827 = vmatpush1.msra.mxu0 %v1763
      %1828 = vmatprep.subr.mxu0 0.0
      %1829 = vmatpush1.msra.mxu0 %v1764
      %1830 = vmatprep.subr.mxu0 0.0
      %1831 = vmatpush1.msra.mxu0 %v1765
      %1832 = vmatprep.subr.mxu0 0.0
      %1833 = vmatpush1.msra.mxu0 %v1766
      %1834 = vmatprep.subr.mxu0 0.0
      %1835 = vmatpush1.msra.mxu0 %v1767
      %1836 = vmatprep.subr.mxu0 0.0
      %1837 = vmatpush1.msra.mxu0 %v1768
      %1838 = vmatprep.subr.mxu0 0.0
      %1839 = vmatpush1.msra.mxu0 %v1769
      %1840 = vmatprep.subr.mxu0 0.0
      %1841 = vmatpush1.msra.mxu0 %v1770
      %1842 = vmatprep.subr.mxu0 0.0
      %1843 = vmatpush1.msra.mxu0 %v1771
      %1844 = vmatprep.subr.mxu0 0.0
      %1845 = vmatpush1.msra.mxu0 %v1772
      %1846 = vmatprep.subr.mxu0 0.0
      %1847 = vmatpush1.msra.mxu0 %v1773
      %1848 = vmatprep.subr.mxu0 0.0
      %1849 = vmatpush1.msra.mxu0 %v1774
      %1850 = vmatprep.subr.mxu0 0.0
      %1851 = vmatpush1.msra.mxu0 %v1775
      %1852 = vmatprep.subr.mxu0 0.0
      %1853 = vmatpush1.msra.mxu0 %v1776
      %1854 = vmatprep.subr.mxu0 0.0
      %1855 = vmatpush1.msra.mxu0 %v1777
      %1856 = vmatprep.subr.mxu0 0.0
      %1857 = vmatpush1.msra.mxu0 %v1778
      %1858 = vmatprep.subr.mxu0 0.0
      %1859 = vmatpush1.msra.mxu0 %v1779
      %1860 = vmatprep.subr.mxu0 0.0
      %1861 = vmatpush1.msra.mxu0 %v1780
      %1862 = vmatprep.subr.mxu0 0.0
      %1863 = vmatpush1.msra.mxu0 %v1781
      %1864 = vmatprep.subr.mxu0 0.0
      %1865 = vmatpush1.msra.mxu0 %v1782
      %1866 = vmatprep.subr.mxu0 0.0
      %1867 = vmatpush1.msra.mxu0 %v1783
      %1868 = vmatprep.mubr.f32.mxu0 %v1741
      %1869 = vmatmul.mubr.f32.gmra.mrb[0].mxu0 %v1740
      %v1870 = vpop.f32.mrb[0].mxu0
      %v1871 = vadd.f32 %v1791, %v1870
      %v1872 = vpop.f32.mrb[0].mxu0
      %1873 = vmatprep.mubr.f32.mxu0 %v1744
      %1874 = vmatmul.mubr.f32.gmra.mrb[0].mxu0 %v1743
      %v1875 = vpop.f32.mrb[0].mxu0
      %v1876 = vadd.f32 %v1791, %v1875
      %v1877 = vpop.f32.mrb[0].mxu0
      %1878 = vmatprep.mubr.f32.mxu0 %v1747
      %1879 = vmatmul.mubr.f32.gmra.mrb[0].mxu0 %v1746
      %v1880 = vpop.f32.mrb[0].mxu0
      %v1881 = vadd.f32 %v1791, %v1880
      %v1882 = vpop.f32.mrb[0].mxu0
      %1883 = vmatprep.mubr.f32.mxu0 %v1750
      %1884 = vmatmul.mubr.f32.gmra.mrb[0].mxu0 %v1749
      %v1885 = vpop.f32.mrb[0].mxu0
      %v1886 = vpop.f32.mrb[0].mxu0
      %1887 = vdwg.mxu0
      %1888 = vmatprep.subr.mxu0 0.0
      %1889 = vmatpush1.msra.mxu0 %v1784
      %1890 = vmatprep.subr.mxu0 0.0
      %1891 = vmatpush1.msra.mxu0 %v1785
      %1892 = vmatprep.subr.mxu0 0.0
      %1893 = vmatpush1.msra.mxu0 %v1786
      %1894 = vmatprep.subr.mxu0 0.0
      %1895 = vmatpush1.msra.mxu0 %v1787
      %1896 = vmatprep.subr.mxu0 0.0
      %1897 = vmatpush1.msra.mxu0 0.0
      %1898 = vmatprep.subr.mxu0 0.0
      %1899 = vmatpush1.msra.mxu0 0.0
      %1900 = vmatprep.subr.mxu0 0.0
      %1901 = vmatpush1.msra.mxu0 0.0
      %1902 = vmatprep.subr.mxu0 0.0
      %1903 = vmatpush1.msra.mxu0 0.0
      %1904 = vmatprep.subr.mxu0 0.0
      %1905 = vmatpush1.msra.mxu0 0.0
      %1906 = vmatprep.subr.mxu0 0.0
      %1907 = vmatpush1.msra.mxu0 0.0
      %1908 = vmatprep.subr.mxu0 0.0
      %1909 = vmatpush1.msra.mxu0 0.0
      %1910 = vmatprep.subr.mxu0 0.0
      %1911 = vmatpush1.msra.mxu0 0.0
      %1912 = vmatprep.subr.mxu0 0.0
      %1913 = vmatpush1.msra.mxu0 0.0
      %1914 = vmatprep.subr.mxu0 0.0
      %1915 = vmatpush1.msra.mxu0 0.0
      %1916 = vmatprep.subr.mxu0 0.0
      %1917 = vmatpush1.msra.mxu0 0.0
      %1918 = vmatprep.subr.mxu0 0.0
      %1919 = vmatpush1.msra.mxu0 0.0
      %1920 = vmatprep.subr.mxu0 0.0
      %1921 = vmatpush1.msra.mxu0 0.0
      %1922 = vmatprep.subr.mxu0 0.0
      %1923 = vmatpush1.msra.mxu0 0.0
      %1924 = vmatprep.subr.mxu0 0.0
      %1925 = vmatpush1.msra.mxu0 0.0
      %1926 = vmatprep.subr.mxu0 0.0
      %1927 = vmatpush1.msra.mxu0 0.0
      %1928 = vmatprep.subr.mxu0 0.0
      %1929 = vmatpush1.msra.mxu0 0.0
      %1930 = vmatprep.subr.mxu0 0.0
      %1931 = vmatpush1.msra.mxu0 0.0
      %1932 = vmatprep.subr.mxu0 0.0
      %1933 = vmatpush1.msra.mxu0 0.0
      %1934 = vmatprep.subr.mxu0 0.0
      %1935 = vmatpush1.msra.mxu0 0.0
      %1936 = vmatprep.subr.mxu0 0.0
      %1937 = vmatpush1.msra.mxu0 0.0
      %1938 = vmatprep.subr.mxu0 0.0
      %1939 = vmatpush1.msra.mxu0 0.0
      %1940 = vmatprep.subr.mxu0 0.0
      %1941 = vmatpush1.msra.mxu0 0.0
      %1942 = vmatprep.subr.mxu0 0.0
      %1943 = vmatpush1.msra.mxu0 0.0
      %1944 = vmatprep.subr.mxu0 0.0
      %1945 = vmatpush1.msra.mxu0 0.0
      %1946 = vmatprep.subr.mxu0 0.0
      %1947 = vmatpush1.msra.mxu0 0.0
      %1948 = vmatprep.subr.mxu0 0.0
      %1949 = vmatpush1.msra.mxu0 0.0
      %1950 = vmatprep.subr.mxu0 0.0
      %1951 = vmatpush1.msra.mxu0 0.0
      %1952 = vmatprep.mubr.f32.mxu0 0.0
      %1953 = vmatmul.mubr.f32.gmra.mrb[0].mxu0 %v1793
      %v1954 = vpop.f32.mrb[0].mxu0
      %v1955 = vadd.f32 %v1871, %v1954
      %v1956 = vpop.f32.mrb[0].mxu0
      %1957 = vmatprep.mubr.f32.mxu0 0.0
      %1958 = vmatmul.mubr.f32.gmra.mrb[0].mxu0 %v1796
      %v1959 = vpop.f32.mrb[0].mxu0
      %v1960 = vadd.f32 %v1876, %v1959
      %v1961 = vpop.f32.mrb[0].mxu0
      %1962 = vmatprep.mubr.f32.mxu0 0.0
      %1963 = vmatmul.mubr.f32.gmra.mrb[0].mxu0 %v1799
      %v1964 = vpop.f32.mrb[0].mxu0
      %v1965 = vadd.f32 %v1881, %v1964
      %v1966 = vpop.f32.mrb[0].mxu0
      %1967 = vmatprep.mubr.f32.mxu0 0.0
      %1968 = vmatmul.mubr.f32.gmra.mrb[0].mxu0 %v1802
      %v1969 = vpop.f32.mrb[0].mxu0
      %v1970 = vpop.f32.mrb[0].mxu0
      %1971 = vdwg.mxu0
      %v1972 = vmax.f32 %v1955, 0.0
      %v1973 = vmax.f32 %v1960, 0.0
      %v1974 = vmax.f32 %v1965, 0.0
      %1975 = vst.msk [vmem:[#allocation3] sm:$0x7] %vm1738, %v1972
      %vm1976 = vcmask 257025
      %1977 = vst.msk [vmem:[#allocation3 + $0x2] sm:$0xe] %vm1976, %v1973
      %vm1978 = vcmask 258050
      %1979 = vst.msk [vmem:[#allocation3 + $0x4] sm:$0x1c] %vm1978, %v1974
      %v1980 = vld [vmem:[#allocation3] sm:$0xff]
      %v1981 = vld [vmem:[#allocation3 + $0x8] sm:$0x1]
      %1982 = vxpose.xlu0.b32.start [1/16] %v1980, 128
      %1983 = vxpose.xlu0.b32.cont [2/16] %v1981, 128
      %1984 = vxpose.xlu0.b32.cont [3/16] 0.0, 128
      %1985 = vxpose.xlu0.b32.cont [4/16] 0.0, 128
      %1986 = vxpose.xlu0.b32.cont [5/16] 0.0, 128
      %1987 = vxpose.xlu0.b32.cont [6/16] 0.0, 128
      %1988 = vxpose.xlu0.b32.cont [7/16] 0.0, 128
      %1989 = vxpose.xlu0.b32.cont [8/16] 0.0, 128
      %1990 = vxpose.xlu0.b32.cont [9/16] 0.0, 128
      %1991 = vxpose.xlu0.b32.cont [10/16] 0.0, 128
      %1992 = vxpose.xlu0.b32.cont [11/16] 0.0, 128
      %1993 = vxpose.xlu0.b32.cont [12/16] 0.0, 128
      %1994 = vxpose.xlu0.b32.cont [13/16] 0.0, 128
      %1995 = vxpose.xlu0.b32.cont [14/16] 0.0, 128
      %1996 = vxpose.xlu0.b32.cont [15/16] 0.0, 128
      %1997 = vxpose.xlu0.b32.end [16/16] 0.0, 128
      %v1998 = vpop.trf.xlu0
      %v1999 = vpop.trf.xlu0
      %v2000 = vpop.trf.xlu0
      %v2001 = vpop.trf.xlu0
      %v2002 = vpop.trf.xlu0
      %v2003 = vpop.trf.xlu0
      %v2004 = vpop.trf.xlu0
      %v2005 = vpop.trf.xlu0
      %v2006 = vpop.trf.xlu0
      %v2007 = vpop.trf.xlu0
      %v2008 = vpop.trf.xlu0
      %v2009 = vpop.trf.xlu0
      %v2010 = vpop.trf.xlu0
      %v2011 = vpop.trf.xlu0
      %v2012 = vpop.trf.xlu0
      %v2013 = vpop.trf.xlu0
      %vm2014 = vcmask 72704
      %2015 = vst.msk [vmem:[%s258] sm:$0xff] %vm2014, %v1998
      %2016 = vst.msk [vmem:[%s258 + $0x8] sm:$0xff] %vm2014, %v1999
      %2017 = vst.msk [vmem:[%s258 + $0x10] sm:$0xff] %vm2014, %v2000
      %2018 = vst.msk [vmem:[%s258 + $0x18] sm:$0xff] %vm2014, %v2001
      %s2019 = scalar_lea.vmem %s251, 44
      %v2020 = vld [vmem:[%s2019] sm:$0xf]
      %v2021 = vld [vmem:[%s2019 + $0x4] sm:$0xf]
      %v2022 = vld [vmem:[%s2019 + $0x8] sm:$0xf]
      %v2023 = vld [vmem:[%s2019 + $0xc] sm:$0xf]
      %v2024 = vld [vmem:[%s2019 + $0x10] sm:$0xf]
      %v2025 = vld [vmem:[%s2019 + $0x14] sm:$0xf]
      %v2026 = vld [vmem:[%s2019 + $0x18] sm:$0xf]
      %v2027 = vld [vmem:[%s2019 + $0x1c] sm:$0xf]
      %v2028 = vld [vmem:[%s2019 + $0x20] sm:$0xf]
      %v2029 = vld [vmem:[%s2019 + $0x24] sm:$0xf]
      %v2030 = vld [vmem:[%s2019 + $0x28] sm:$0x1]
      %v2031 = vunpack.c.l.bf16 %v2020
      %v2032 = vunpack.c.l.bf16 %v2021
      %v2033 = vunpack.c.l.bf16 %v2022
      %v2034 = vunpack.c.l.bf16 %v2023
      %v2035 = vunpack.c.l.bf16 %v2024
      %v2036 = vunpack.c.l.bf16 %v2025
      %v2037 = vunpack.c.l.bf16 %v2026
      %v2038 = vunpack.c.l.bf16 %v2027
      %v2039 = vunpack.c.l.bf16 %v2028
      %v2040 = vunpack.c.l.bf16 %v2029
      %v2041 = vunpack.c.l.bf16 %v2030
      %v2042 = vld [vmem:[%s1] sm:$0xff]
      %v2043 = vld [vmem:[%s1 + $0x8] sm:$0xff]
      %v2044 = vld [vmem:[%s1 + $0x10] sm:$0xff]
      %v2045 = vld [vmem:[%s1 + $0x18] sm:$0xff]
      %v2046 = vld [vmem:[%s1 + $0x20] sm:$0xff]
      %v2048 = vsel %vm287, %v2031, 0
      %v2051 = vsel %vm287, %v2032, 0
      %v2054 = vsel %vm287, %v2033, 0
      %v2057 = vsel %vm287, %v2034, 0
      %v2060 = vsel %vm287, %v2035, 0
      %v2063 = vsel %vm287, %v2036, 0
      %v2066 = vsel %vm287, %v2037, 0
      %v2069 = vsel %vm287, %v2038, 0
      %v2072 = vsel %vm287, %v2039, 0
      %v2075 = vsel %vm287, %v2040, 0
      %v2078 = vsel %vm287, %v2041, 0
      %2080 = vmatprep.subr.mxu0 0.0
      %2081 = vmatpush1.msra.mxu0 %v2042
      %2082 = vmatprep.subr.mxu0 0.0
      %2083 = vmatpush1.msra.mxu0 %v2043
      %2084 = vmatprep.subr.mxu0 0.0
      %2085 = vmatpush1.msra.mxu0 %v2044
      %2086 = vmatprep.subr.mxu0 0.0
      %2087 = vmatpush1.msra.mxu0 %v2045
      %2088 = vmatprep.subr.mxu0 0.0
      %2089 = vmatpush1.msra.mxu0 %v2046
      %2090 = vmatprep.subr.mxu0 0.0
      %2091 = vmatpush1.msra.mxu0 0.0
      %2092 = vmatprep.subr.mxu0 0.0
      %2093 = vmatpush1.msra.mxu0 0.0
      %2094 = vmatprep.subr.mxu0 0.0
      %2095 = vmatpush1.msra.mxu0 0.0
      %2096 = vmatprep.subr.mxu0 0.0
      %2097 = vmatpush1.msra.mxu0 0.0
      %2098 = vmatprep.subr.mxu0 0.0
      %2099 = vmatpush1.msra.mxu0 0.0
      %2100 = vmatprep.subr.mxu0 0.0
      %2101 = vmatpush1.msra.mxu0 0.0
      %2102 = vmatprep.subr.mxu0 0.0
      %2103 = vmatpush1.msra.mxu0 0.0
      %2104 = vmatprep.subr.mxu0 0.0
      %2105 = vmatpush1.msra.mxu0 0.0
      %2106 = vmatprep.subr.mxu0 0.0
      %2107 = vmatpush1.msra.mxu0 0.0
      %2108 = vmatprep.subr.mxu0 0.0
      %2109 = vmatpush1.msra.mxu0 0.0
      %2110 = vmatprep.subr.mxu0 0.0
      %2111 = vmatpush1.msra.mxu0 0.0
      %2112 = vmatprep.subr.mxu0 0.0
      %2113 = vmatpush1.msra.mxu0 0.0
      %2114 = vmatprep.subr.mxu0 0.0
      %2115 = vmatpush1.msra.mxu0 0.0
      %2116 = vmatprep.subr.mxu0 0.0
      %2117 = vmatpush1.msra.mxu0 0.0
      %2118 = vmatprep.subr.mxu0 0.0
      %2119 = vmatpush1.msra.mxu0 0.0
      %2120 = vmatprep.subr.mxu0 0.0
      %2121 = vmatpush1.msra.mxu0 0.0
      %2122 = vmatprep.subr.mxu0 0.0
      %2123 = vmatpush1.msra.mxu0 0.0
      %2124 = vmatprep.subr.mxu0 0.0
      %2125 = vmatpush1.msra.mxu0 0.0
      %2126 = vmatprep.subr.mxu0 0.0
      %2127 = vmatpush1.msra.mxu0 0.0
      %2128 = vmatprep.subr.mxu0 0.0
      %2129 = vmatpush1.msra.mxu0 0.0
      %2130 = vmatprep.subr.mxu0 0.0
      %2131 = vmatpush1.msra.mxu0 0.0
      %2132 = vmatprep.subr.mxu0 0.0
      %2133 = vmatpush1.msra.mxu0 0.0
      %2134 = vmatprep.subr.mxu0 0.0
      %2135 = vmatpush1.msra.mxu0 0.0
      %2136 = vmatprep.subr.mxu0 0.0
      %2137 = vmatpush1.msra.mxu0 0.0
      %2138 = vmatprep.subr.mxu0 0.0
      %2139 = vmatpush1.msra.mxu0 0.0
      %2140 = vmatprep.subr.mxu0 0.0
      %2141 = vmatpush1.msra.mxu0 0.0
      %2142 = vmatprep.subr.mxu0 0.0
      %2143 = vmatpush1.msra.mxu0 0.0
      %2144 = vmatprep.mubr.f32.mxu0 0.0
      %2145 = vmatmul.mubr.f32.gmra.mrb[0].mxu0 %v2048
      %v2146 = vpop.f32.mrb[0].mxu0
      %v2147 = vadd.f32 0.0, %v2146
      %v2148 = vpop.f32.mrb[0].mxu0
      %2149 = vmatprep.mubr.f32.mxu0 0.0
      %2150 = vmatmul.mubr.f32.gmra.mrb[0].mxu0 %v2051
      %v2151 = vpop.f32.mrb[0].mxu0
      %v2152 = vadd.f32 0.0, %v2151
      %v2153 = vpop.f32.mrb[0].mxu0
      %2154 = vmatprep.mubr.f32.mxu0 0.0
      %2155 = vmatmul.mubr.f32.gmra.mrb[0].mxu0 %v2054
      %v2156 = vpop.f32.mrb[0].mxu0
      %v2157 = vadd.f32 0.0, %v2156
      %v2158 = vpop.f32.mrb[0].mxu0
      %2159 = vmatprep.mubr.f32.mxu0 0.0
      %2160 = vmatmul.mubr.f32.gmra.mrb[0].mxu0 %v2057
      %v2161 = vpop.f32.mrb[0].mxu0
      %v2162 = vadd.f32 0.0, %v2161
      %v2163 = vpop.f32.mrb[0].mxu0
      %2164 = vmatprep.mubr.f32.mxu0 0.0
      %2165 = vmatmul.mubr.f32.gmra.mrb[0].mxu0 %v2060
      %v2166 = vpop.f32.mrb[0].mxu0
      %v2167 = vadd.f32 0.0, %v2166
      %v2168 = vpop.f32.mrb[0].mxu0
      %2169 = vmatprep.mubr.f32.mxu0 0.0
      %2170 = vmatmul.mubr.f32.gmra.mrb[0].mxu0 %v2063
      %v2171 = vpop.f32.mrb[0].mxu0
      %v2172 = vadd.f32 0.0, %v2171
      %v2173 = vpop.f32.mrb[0].mxu0
      %2174 = vmatprep.mubr.f32.mxu0 0.0
      %2175 = vmatmul.mubr.f32.gmra.mrb[0].mxu0 %v2066
      %v2176 = vpop.f32.mrb[0].mxu0
      %v2177 = vadd.f32 0.0, %v2176
      %v2178 = vpop.f32.mrb[0].mxu0
      %2179 = vmatprep.mubr.f32.mxu0 0.0
      %2180 = vmatmul.mubr.f32.gmra.mrb[0].mxu0 %v2069
      %v2181 = vpop.f32.mrb[0].mxu0
      %v2182 = vadd.f32 0.0, %v2181
      %v2183 = vpop.f32.mrb[0].mxu0
      %2184 = vmatprep.mubr.f32.mxu0 0.0
      %2185 = vmatmul.mubr.f32.gmra.mrb[0].mxu0 %v2072
      %v2186 = vpop.f32.mrb[0].mxu0
      %v2187 = vadd.f32 0.0, %v2186
      %v2188 = vpop.f32.mrb[0].mxu0
      %2189 = vmatprep.mubr.f32.mxu0 0.0
      %2190 = vmatmul.mubr.f32.gmra.mrb[0].mxu0 %v2075
      %v2191 = vpop.f32.mrb[0].mxu0
      %v2192 = vadd.f32 0.0, %v2191
      %v2193 = vpop.f32.mrb[0].mxu0
      %2194 = vmatprep.mubr.f32.mxu0 0.0
      %2195 = vmatmul.mubr.f32.gmra.mrb[0].mxu0 %v2078
      %v2196 = vpop.f32.mrb[0].mxu0
      %v2197 = vadd.f32 0.0, %v2196
      %v2198 = vpop.f32.mrb[0].mxu0
      %2199 = vdwg.mxu0
      %v2200 = vmul.f32 %v2147, 0.003921569
      %v2201 = vmul.f32 %v2152, 0.003921569
      %v2202 = vmul.f32 %v2157, 0.003921569
      %v2203 = vmul.f32 %v2162, 0.003921569
      %v2204 = vmul.f32 %v2167, 0.003921569
      %v2205 = vmul.f32 %v2172, 0.003921569
      %v2206 = vmul.f32 %v2177, 0.003921569
      %v2207 = vmul.f32 %v2182, 0.003921569
      %v2208 = vmul.f32 %v2187, 0.003921569
      %v2209 = vmul.f32 %v2192, 0.003921569
      %v2210 = vmul.f32 %v2197, 0.003921569
      %v2211 = vld [vmem:[%s5] sm:$0x1]
      %v2212 = vlaneseq
      %v2213 = vshrl.u32 %v2212, 7
      %v2214 = vsub.s32 0, %v2213
      %v2215 = vrot.slane %v2211, %v2214
      %v2216 = vadd.f32 %v2200, %v2215
      %v2217 = vadd.f32 %v2201, %v2215
      %v2218 = vadd.f32 %v2202, %v2215
      %v2219 = vadd.f32 %v2203, %v2215
      %v2220 = vadd.f32 %v2204, %v2215
      %v2221 = vadd.f32 %v2205, %v2215
      %v2222 = vadd.f32 %v2206, %v2215
      %v2223 = vadd.f32 %v2207, %v2215
      %v2224 = vadd.f32 %v2208, %v2215
      %v2225 = vadd.f32 %v2209, %v2215
      %v2226 = vadd.f32 %v2210, %v2215
      %v2227 = vmax.f32 %v2216, 0.0
      %v2228 = vmax.f32 %v2217, 0.0
      %v2229 = vmax.f32 %v2218, 0.0
      %v2230 = vmax.f32 %v2219, 0.0
      %v2231 = vmax.f32 %v2220, 0.0
      %v2232 = vmax.f32 %v2221, 0.0
      %v2233 = vmax.f32 %v2222, 0.0
      %v2234 = vmax.f32 %v2223, 0.0
      %v2235 = vmax.f32 %v2224, 0.0
      %v2236 = vmax.f32 %v2225, 0.0
      %v2237 = vmax.f32 %v2226, 0.0
      %2238 = vst.msk [vmem:[#allocation2] sm:$0xff] %vm479, %v2227
      %2239 = vst.msk [vmem:[#allocation2 + $0x8] sm:$0xff] %vm479, %v2228
      %2240 = vst.msk [vmem:[#allocation2 + $0x10] sm:$0xff] %vm479, %v2229
      %2241 = vst.msk [vmem:[#allocation2 + $0x18] sm:$0xff] %vm479, %v2230
      %2242 = vst.msk [vmem:[#allocation2 + $0x20] sm:$0xff] %vm479, %v2231
      %2243 = vst.msk [vmem:[#allocation2 + $0x28] sm:$0xff] %vm479, %v2232
      %2244 = vst.msk [vmem:[#allocation2 + $0x30] sm:$0xff] %vm479, %v2233
      %2245 = vst.msk [vmem:[#allocation2 + $0x38] sm:$0xff] %vm479, %v2234
      %2246 = vst.msk [vmem:[#allocation2 + $0x40] sm:$0xff] %vm479, %v2235
      %2247 = vst.msk [vmem:[#allocation2 + $0x48] sm:$0xff] %vm479, %v2236
      %2248 = vst.msk [vmem:[#allocation2 + $0x50] sm:$0x1] %vm490, %v2237
      %v2249 = vld [vmem:[%s5 + $0x1] sm:$0x1]
      %v2250 = vld [vmem:[#allocation2] sm:$0xff]
      %v2251 = vld [vmem:[#allocation2 + $0x8] sm:$0xff]
      %v2252 = vld [vmem:[#allocation2 + $0x10] sm:$0xff]
      %v2253 = vld [vmem:[#allocation2 + $0x18] sm:$0xff]
      %v2254 = vld [vmem:[#allocation2 + $0x20] sm:$0xff]
      %v2255 = vld [vmem:[#allocation2 + $0x28] sm:$0xff]
      %v2256 = vld [vmem:[#allocation2 + $0x30] sm:$0xff]
      %v2257 = vld [vmem:[#allocation2 + $0x38] sm:$0x7f]
      %v2258 = vld [vmem:[#allocation2 + $0x1] sm:$0xff]
      %v2259 = vld [vmem:[#allocation2 + $0x9] sm:$0xff]
      %v2260 = vld [vmem:[#allocation2 + $0x11] sm:$0xff]
      %v2261 = vld [vmem:[#allocation2 + $0x19] sm:$0xff]
      %v2262 = vld [vmem:[#allocation2 + $0x21] sm:$0xff]
      %v2263 = vld [vmem:[#allocation2 + $0x29] sm:$0xff]
      %v2264 = vld [vmem:[#allocation2 + $0x31] sm:$0xff]
      %v2265 = vld [vmem:[#allocation2 + $0x39] sm:$0x7f]
      %v2266 = vld [vmem:[#allocation2 + $0x2] sm:$0xff]
      %v2267 = vld [vmem:[#allocation2 + $0xa] sm:$0xff]
      %v2268 = vld [vmem:[#allocation2 + $0x12] sm:$0xff]
      %v2269 = vld [vmem:[#allocation2 + $0x1a] sm:$0xff]
      %v2270 = vld [vmem:[#allocation2 + $0x22] sm:$0xff]
      %v2271 = vld [vmem:[#allocation2 + $0x2a] sm:$0xff]
      %v2272 = vld [vmem:[#allocation2 + $0x32] sm:$0xff]
      %v2273 = vld [vmem:[#allocation2 + $0x3a] sm:$0x7f]
      %v2274 = vld [vmem:[#allocation2 + $0x39] sm:$0xff]
      %v2275 = vld [vmem:[#allocation2 + $0x41] sm:$0x7f]
      %v2276 = vld [vmem:[#allocation2 + $0x3a] sm:$0xff]
      %v2277 = vld [vmem:[#allocation2 + $0x42] sm:$0x7f]
      %v2278 = vld [vmem:[#allocation2 + $0xb] sm:$0xff]
      %v2279 = vld [vmem:[#allocation2 + $0x13] sm:$0xff]
      %v2280 = vld [vmem:[#allocation2 + $0x1b] sm:$0xff]
      %v2281 = vld [vmem:[#allocation2 + $0x23] sm:$0xff]
      %v2282 = vld [vmem:[#allocation2 + $0x2b] sm:$0xff]
      %v2283 = vld [vmem:[#allocation2 + $0x33] sm:$0xff]
      %v2284 = vld [vmem:[#allocation2 + $0x3b] sm:$0xff]
      %v2285 = vld [vmem:[#allocation2 + $0x43] sm:$0x7f]
      %v2286 = vld [vmem:[#allocation2 + $0x42] sm:$0xff]
      %v2287 = vld [vmem:[#allocation2 + $0x4a] sm:$0x7f]
      %v2288 = vld [vmem:[#allocation2 + $0x43] sm:$0xff]
      %v2289 = vld [vmem:[#allocation2 + $0x4b] sm:$0x7f]
      %v2290 = vld [vmem:[#allocation2 + $0x14] sm:$0xff]
      %v2291 = vld [vmem:[#allocation2 + $0x1c] sm:$0xff]
      %v2292 = vld [vmem:[#allocation2 + $0x24] sm:$0xff]
      %v2293 = vld [vmem:[#allocation2 + $0x2c] sm:$0xff]
      %v2294 = vld [vmem:[#allocation2 + $0x34] sm:$0xff]
      %v2295 = vld [vmem:[#allocation2 + $0x3c] sm:$0xff]
      %v2296 = vld [vmem:[#allocation2 + $0x44] sm:$0xff]
      %v2297 = vld [vmem:[#allocation2 + $0x4c] sm:$0x7f]
      %2306 = vrot.lane.b32.xlu0 %v2258, 32
      %v2307 = vpop.permute.xlu0 %2306
      %2308 = vrot.lane.b32.xlu0 %v2259, 32
      %v2309 = vpop.permute.xlu0 %2308
      %2310 = vrot.lane.b32.xlu0 %v2260, 32
      %v2311 = vpop.permute.xlu0 %2310
      %2312 = vrot.lane.b32.xlu0 %v2261, 32
      %v2313 = vpop.permute.xlu0 %2312
      %2314 = vrot.lane.b32.xlu0 %v2262, 32
      %v2315 = vpop.permute.xlu0 %2314
      %2316 = vrot.lane.b32.xlu0 %v2263, 32
      %v2317 = vpop.permute.xlu0 %2316
      %2318 = vrot.lane.b32.xlu0 %v2264, 32
      %v2319 = vpop.permute.xlu0 %2318
      %2320 = vrot.lane.b32.xlu0 %v2265, 32
      %v2321 = vpop.permute.xlu0 %2320
      %2338 = vrot.lane.b32.xlu0 %v2266, 64
      %v2339 = vpop.permute.xlu0 %2338
      %2340 = vrot.lane.b32.xlu0 %v2267, 64
      %v2341 = vpop.permute.xlu0 %2340
      %2342 = vrot.lane.b32.xlu0 %v2268, 64
      %v2343 = vpop.permute.xlu0 %2342
      %2344 = vrot.lane.b32.xlu0 %v2269, 64
      %v2345 = vpop.permute.xlu0 %2344
      %2346 = vrot.lane.b32.xlu0 %v2270, 64
      %v2347 = vpop.permute.xlu0 %2346
      %2348 = vrot.lane.b32.xlu0 %v2271, 64
      %v2349 = vpop.permute.xlu0 %2348
      %2350 = vrot.lane.b32.xlu0 %v2272, 64
      %v2351 = vpop.permute.xlu0 %2350
      %2352 = vrot.lane.b32.xlu0 %v2273, 64
      %v2353 = vpop.permute.xlu0 %2352
      %2364 = vrot.lane.b32.xlu0 %v2259, 96
      %v2365 = vpop.permute.xlu0 %2364
      %2366 = vrot.lane.b32.xlu0 %v2260, 96
      %v2367 = vpop.permute.xlu0 %2366
      %2368 = vrot.lane.b32.xlu0 %v2261, 96
      %v2369 = vpop.permute.xlu0 %2368
      %2370 = vrot.lane.b32.xlu0 %v2262, 96
      %v2371 = vpop.permute.xlu0 %2370
      %2372 = vrot.lane.b32.xlu0 %v2263, 96
      %v2373 = vpop.permute.xlu0 %2372
      %2374 = vrot.lane.b32.xlu0 %v2264, 96
      %v2375 = vpop.permute.xlu0 %2374
      %2376 = vrot.lane.b32.xlu0 %v2274, 96
      %v2377 = vpop.permute.xlu0 %2376
      %2378 = vrot.lane.b32.xlu0 %v2275, 96
      %v2379 = vpop.permute.xlu0 %2378
      %v2388 = vsel %vm479, %v2250, %v2307
      %v2389 = vsel %vm479, %v2251, %v2309
      %v2390 = vsel %vm479, %v2252, %v2311
      %v2391 = vsel %vm479, %v2253, %v2313
      %v2392 = vsel %vm479, %v2254, %v2315
      %v2393 = vsel %vm479, %v2255, %v2317
      %v2394 = vsel %vm479, %v2256, %v2319
      %v2395 = vsel %vm479, %v2257, %v2321
      %v2396 = vsel %vm639, %v2388, %v2339
      %v2397 = vsel %vm639, %v2389, %v2341
      %v2398 = vsel %vm639, %v2390, %v2343
      %v2399 = vsel %vm639, %v2391, %v2345
      %v2400 = vsel %vm639, %v2392, %v2347
      %v2401 = vsel %vm639, %v2393, %v2349
      %v2402 = vsel %vm639, %v2394, %v2351
      %v2403 = vsel %vm639, %v2395, %v2353
      %v2404 = vsel %vm648, %v2396, %v2365
      %v2405 = vsel %vm648, %v2397, %v2367
      %v2406 = vsel %vm648, %v2398, %v2369
      %v2407 = vsel %vm648, %v2399, %v2371
      %v2408 = vsel %vm648, %v2400, %v2373
      %v2409 = vsel %vm648, %v2401, %v2375
      %v2410 = vsel %vm648, %v2402, %v2377
      %v2411 = vsel %vm648, %v2403, %v2379
      %2412 = vst [vmem:[#allocation4] sm:$0xff] %v2404
      %2413 = vst [vmem:[#allocation4 + $0x18] sm:$0xff] %v2405
      %2414 = vst [vmem:[#allocation4 + $0x30] sm:$0xff] %v2406
      %2415 = vst [vmem:[#allocation4 + $0x48] sm:$0xff] %v2407
      %2416 = vst [vmem:[#allocation4 + $0x60] sm:$0xff] %v2408
      %2417 = vst [vmem:[#allocation4 + $0x78] sm:$0xff] %v2409
      %2418 = vst [vmem:[#allocation4 + $0x90] sm:$0xff] %v2410
      %2419 = vst [vmem:[#allocation4 + $0xa8] sm:$0x7f] %v2411
      %2428 = vrot.lane.b32.xlu0 %v2278, 32
      %v2429 = vpop.permute.xlu0 %2428
      %2430 = vrot.lane.b32.xlu0 %v2279, 32
      %v2431 = vpop.permute.xlu0 %2430
      %2432 = vrot.lane.b32.xlu0 %v2280, 32
      %v2433 = vpop.permute.xlu0 %2432
      %2434 = vrot.lane.b32.xlu0 %v2281, 32
      %v2435 = vpop.permute.xlu0 %2434
      %2436 = vrot.lane.b32.xlu0 %v2282, 32
      %v2437 = vpop.permute.xlu0 %2436
      %2438 = vrot.lane.b32.xlu0 %v2283, 32
      %v2439 = vpop.permute.xlu0 %2438
      %2440 = vrot.lane.b32.xlu0 %v2284, 32
      %v2441 = vpop.permute.xlu0 %2440
      %2442 = vrot.lane.b32.xlu0 %v2285, 32
      %v2443 = vpop.permute.xlu0 %2442
      %2455 = vrot.lane.b32.xlu0 %v2276, 64
      %v2456 = vpop.permute.xlu0 %2455
      %2457 = vrot.lane.b32.xlu0 %v2286, 64
      %v2458 = vpop.permute.xlu0 %2457
      %2459 = vrot.lane.b32.xlu0 %v2287, 64
      %v2460 = vpop.permute.xlu0 %2459
      %2466 = vrot.lane.b32.xlu0 %v2279, 96
      %v2467 = vpop.permute.xlu0 %2466
      %2468 = vrot.lane.b32.xlu0 %v2280, 96
      %v2469 = vpop.permute.xlu0 %2468
      %2470 = vrot.lane.b32.xlu0 %v2281, 96
      %v2471 = vpop.permute.xlu0 %2470
      %2472 = vrot.lane.b32.xlu0 %v2282, 96
      %v2473 = vpop.permute.xlu0 %2472
      %2474 = vrot.lane.b32.xlu0 %v2283, 96
      %v2475 = vpop.permute.xlu0 %2474
      %2476 = vrot.lane.b32.xlu0 %v2284, 96
      %v2477 = vpop.permute.xlu0 %2476
      %2478 = vrot.lane.b32.xlu0 %v2288, 96
      %v2479 = vpop.permute.xlu0 %2478
      %2480 = vrot.lane.b32.xlu0 %v2289, 96
      %v2481 = vpop.permute.xlu0 %2480
      %v2490 = vsel %vm479, %v2267, %v2429
      %v2491 = vsel %vm479, %v2268, %v2431
      %v2492 = vsel %vm479, %v2269, %v2433
      %v2493 = vsel %vm479, %v2270, %v2435
      %v2494 = vsel %vm479, %v2271, %v2437
      %v2495 = vsel %vm479, %v2272, %v2439
      %v2496 = vsel %vm479, %v2276, %v2441
      %v2497 = vsel %vm479, %v2277, %v2443
      %v2498 = vsel %vm639, %v2490, %v2343
      %v2499 = vsel %vm639, %v2491, %v2345
      %v2500 = vsel %vm639, %v2492, %v2347
      %v2501 = vsel %vm639, %v2493, %v2349
      %v2502 = vsel %vm639, %v2494, %v2351
      %v2503 = vsel %vm639, %v2495, %v2456
      %v2504 = vsel %vm639, %v2496, %v2458
      %v2505 = vsel %vm639, %v2497, %v2460
      %v2506 = vsel %vm648, %v2498, %v2467
      %v2507 = vsel %vm648, %v2499, %v2469
      %v2508 = vsel %vm648, %v2500, %v2471
      %v2509 = vsel %vm648, %v2501, %v2473
      %v2510 = vsel %vm648, %v2502, %v2475
      %v2511 = vsel %vm648, %v2503, %v2477
      %v2512 = vsel %vm648, %v2504, %v2479
      %v2513 = vsel %vm648, %v2505, %v2481
      %2514 = vst [vmem:[#allocation4 + $0x8] sm:$0xff] %v2506
      %2515 = vst [vmem:[#allocation4 + $0x20] sm:$0xff] %v2507
      %2516 = vst [vmem:[#allocation4 + $0x38] sm:$0xff] %v2508
      %2517 = vst [vmem:[#allocation4 + $0x50] sm:$0xff] %v2509
      %2518 = vst [vmem:[#allocation4 + $0x68] sm:$0xff] %v2510
      %2519 = vst [vmem:[#allocation4 + $0x80] sm:$0xff] %v2511
      %2520 = vst [vmem:[#allocation4 + $0x98] sm:$0xff] %v2512
      %2521 = vst [vmem:[#allocation4 + $0xb0] sm:$0x7f] %v2513
      %2522 = vst.msk [vmem:[#allocation4 + $0x10] sm:$0xff] %vm479, %v2290
      %2523 = vst.msk [vmem:[#allocation4 + $0x28] sm:$0xff] %vm479, %v2291
      %2524 = vst.msk [vmem:[#allocation4 + $0x40] sm:$0xff] %vm479, %v2292
      %2525 = vst.msk [vmem:[#allocation4 + $0x58] sm:$0xff] %vm479, %v2293
      %2526 = vst.msk [vmem:[#allocation4 + $0x70] sm:$0xff] %vm479, %v2294
      %2527 = vst.msk [vmem:[#allocation4 + $0x88] sm:$0xff] %vm479, %v2295
      %2528 = vst.msk [vmem:[#allocation4 + $0xa0] sm:$0xff] %vm479, %v2296
      %2529 = vst.msk [vmem:[#allocation4 + $0xb8] sm:$0x7f] %vm774, %v2297
      %v2530 = vld [vmem:[#allocation4] sm:$0xff]
      %v2531 = vld [vmem:[#allocation4 + $0x8] sm:$0xff]
      %v2532 = vld [vmem:[#allocation4 + $0x10] sm:$0xff]
      %v2533 = vld [vmem:[#allocation4 + $0x18] sm:$0xff]
      %v2534 = vld [vmem:[#allocation4 + $0x20] sm:$0xff]
      %v2535 = vld [vmem:[#allocation4 + $0x28] sm:$0xff]
      %v2536 = vld [vmem:[#allocation4 + $0x30] sm:$0xff]
      %v2537 = vld [vmem:[#allocation4 + $0x38] sm:$0xff]
      %v2538 = vld [vmem:[#allocation4 + $0x40] sm:$0xff]
      %v2539 = vld [vmem:[#allocation4 + $0x48] sm:$0xff]
      %v2540 = vld [vmem:[#allocation4 + $0x50] sm:$0xff]
      %v2541 = vld [vmem:[#allocation4 + $0x58] sm:$0xff]
      %v2542 = vld [vmem:[#allocation4 + $0x60] sm:$0xff]
      %v2543 = vld [vmem:[#allocation4 + $0x68] sm:$0xff]
      %v2544 = vld [vmem:[#allocation4 + $0x70] sm:$0xff]
      %v2545 = vld [vmem:[#allocation4 + $0x78] sm:$0xff]
      %v2546 = vld [vmem:[#allocation4 + $0x80] sm:$0xff]
      %v2547 = vld [vmem:[#allocation4 + $0x88] sm:$0xff]
      %v2548 = vld [vmem:[#allocation4 + $0x90] sm:$0xff]
      %v2549 = vld [vmem:[#allocation4 + $0x98] sm:$0xff]
      %v2550 = vld [vmem:[#allocation4 + $0xa0] sm:$0xff]
      %v2551 = vld [vmem:[#allocation4 + $0xa8] sm:$0x7f]
      %v2552 = vld [vmem:[#allocation4 + $0xb0] sm:$0x7f]
      %v2553 = vld [vmem:[#allocation4 + $0xb8] sm:$0x7f]
      %v2554 = vld [vmem:[%s2] sm:$0xff]
      %v2555 = vld [vmem:[%s2 + $0x8] sm:$0xff]
      %v2556 = vld [vmem:[%s2 + $0x10] sm:$0xff]
      %v2557 = vld [vmem:[%s2 + $0x18] sm:$0xff]
      %v2558 = vld [vmem:[%s2 + $0x20] sm:$0xff]
      %v2559 = vld [vmem:[%s2 + $0x28] sm:$0xff]
      %v2560 = vld [vmem:[%s2 + $0x30] sm:$0xff]
      %v2561 = vld [vmem:[%s2 + $0x38] sm:$0xff]
      %v2562 = vld [vmem:[%s2 + $0x40] sm:$0xff]
      %v2563 = vld [vmem:[%s2 + $0x48] sm:$0xff]
      %v2564 = vld [vmem:[%s2 + $0x50] sm:$0xff]
      %v2565 = vld [vmem:[%s2 + $0x58] sm:$0xff]
      %v2566 = vld [vmem:[%s2 + $0x60] sm:$0xff]
      %v2567 = vld [vmem:[%s2 + $0x68] sm:$0xff]
      %v2568 = vld [vmem:[%s2 + $0x70] sm:$0xff]
      %v2569 = vld [vmem:[%s2 + $0x78] sm:$0xff]
      %v2570 = vld [vmem:[%s2 + $0x80] sm:$0xff]
      %v2571 = vld [vmem:[%s2 + $0x88] sm:$0xff]
      %v2572 = vld [vmem:[%s2 + $0x90] sm:$0xff]
      %v2573 = vld [vmem:[%s2 + $0x98] sm:$0xff]
      %v2574 = vld [vmem:[%s2 + $0xa0] sm:$0xff]
      %v2575 = vld [vmem:[%s2 + $0xa8] sm:$0xff]
      %v2576 = vld [vmem:[%s2 + $0xb0] sm:$0xff]
      %v2577 = vld [vmem:[%s2 + $0xb8] sm:$0xff]
      %v2578 = vld [vmem:[%s2 + $0xc0] sm:$0xff]
      %v2579 = vld [vmem:[%s2 + $0xc8] sm:$0xff]
      %v2580 = vld [vmem:[%s2 + $0xd0] sm:$0xff]
      %v2581 = vld [vmem:[%s2 + $0xd8] sm:$0xff]
      %v2582 = vld [vmem:[%s2 + $0xe0] sm:$0xff]
      %v2583 = vld [vmem:[%s2 + $0xe8] sm:$0xff]
      %v2584 = vld [vmem:[%s2 + $0xf0] sm:$0xff]
      %v2585 = vld [vmem:[%s2 + $0xf8] sm:$0xff]
      %v2586 = vld [vmem:[%s2 + $0x100] sm:$0xff]
      %v2587 = vld [vmem:[%s2 + $0x108] sm:$0xff]
      %v2588 = vld [vmem:[%s2 + $0x110] sm:$0xff]
      %v2589 = vld [vmem:[%s2 + $0x118] sm:$0xff]
      %v2590 = vlaneseq
      %v2591 = vshrl.u32 %v2590, 7
      %v2592 = vsub.s32 0, %v2591
      %v2593 = vrot.slane %v2249, %v2592
      %v2595 = vsel %vm479, %v2532, 0
      %v2598 = vsel %vm479, %v2535, 0
      %v2601 = vsel %vm479, %v2538, 0
      %v2604 = vsel %vm479, %v2541, 0
      %v2607 = vsel %vm479, %v2544, 0
      %v2610 = vsel %vm479, %v2547, 0
      %v2613 = vsel %vm479, %v2550, 0
      %v2616 = vsel %vm479, %v2553, 0
      %2618 = vmatprep.subr.mxu0 0.0
      %2619 = vmatpush1.msra.mxu0 %v2554
      %2620 = vmatprep.subr.mxu0 0.0
      %2621 = vmatpush1.msra.mxu0 %v2555
      %2622 = vmatprep.subr.mxu0 0.0
      %2623 = vmatpush1.msra.mxu0 %v2556
      %2624 = vmatprep.subr.mxu0 0.0
      %2625 = vmatpush1.msra.mxu0 %v2557
      %2626 = vmatprep.subr.mxu0 0.0
      %2627 = vmatpush1.msra.mxu0 %v2558
      %2628 = vmatprep.subr.mxu0 0.0
      %2629 = vmatpush1.msra.mxu0 %v2559
      %2630 = vmatprep.subr.mxu0 0.0
      %2631 = vmatpush1.msra.mxu0 %v2560
      %2632 = vmatprep.subr.mxu0 0.0
      %2633 = vmatpush1.msra.mxu0 %v2561
      %2634 = vmatprep.subr.mxu0 0.0
      %2635 = vmatpush1.msra.mxu0 %v2562
      %2636 = vmatprep.subr.mxu0 0.0
      %2637 = vmatpush1.msra.mxu0 %v2563
      %2638 = vmatprep.subr.mxu0 0.0
      %2639 = vmatpush1.msra.mxu0 %v2564
      %2640 = vmatprep.subr.mxu0 0.0
      %2641 = vmatpush1.msra.mxu0 %v2565
      %2642 = vmatprep.subr.mxu0 0.0
      %2643 = vmatpush1.msra.mxu0 %v2566
      %2644 = vmatprep.subr.mxu0 0.0
      %2645 = vmatpush1.msra.mxu0 %v2567
      %2646 = vmatprep.subr.mxu0 0.0
      %2647 = vmatpush1.msra.mxu0 %v2568
      %2648 = vmatprep.subr.mxu0 0.0
      %2649 = vmatpush1.msra.mxu0 %v2569
      %2650 = vmatprep.subr.mxu0 0.0
      %2651 = vmatpush1.msra.mxu0 %v2570
      %2652 = vmatprep.subr.mxu0 0.0
      %2653 = vmatpush1.msra.mxu0 %v2571
      %2654 = vmatprep.subr.mxu0 0.0
      %2655 = vmatpush1.msra.mxu0 %v2572
      %2656 = vmatprep.subr.mxu0 0.0
      %2657 = vmatpush1.msra.mxu0 %v2573
      %2658 = vmatprep.subr.mxu0 0.0
      %2659 = vmatpush1.msra.mxu0 %v2574
      %2660 = vmatprep.subr.mxu0 0.0
      %2661 = vmatpush1.msra.mxu0 %v2575
      %2662 = vmatprep.subr.mxu0 0.0
      %2663 = vmatpush1.msra.mxu0 %v2576
      %2664 = vmatprep.subr.mxu0 0.0
      %2665 = vmatpush1.msra.mxu0 %v2577
      %2666 = vmatprep.subr.mxu0 0.0
      %2667 = vmatpush1.msra.mxu0 %v2578
      %2668 = vmatprep.subr.mxu0 0.0
      %2669 = vmatpush1.msra.mxu0 %v2579
      %2670 = vmatprep.subr.mxu0 0.0
      %2671 = vmatpush1.msra.mxu0 %v2580
      %2672 = vmatprep.subr.mxu0 0.0
      %2673 = vmatpush1.msra.mxu0 %v2581
      %2674 = vmatprep.subr.mxu0 0.0
      %2675 = vmatpush1.msra.mxu0 %v2582
      %2676 = vmatprep.subr.mxu0 0.0
      %2677 = vmatpush1.msra.mxu0 %v2583
      %2678 = vmatprep.subr.mxu0 0.0
      %2679 = vmatpush1.msra.mxu0 %v2584
      %2680 = vmatprep.subr.mxu0 0.0
      %2681 = vmatpush1.msra.mxu0 %v2585
      %2682 = vmatprep.mubr.f32.mxu0 %v2531
      %2683 = vmatmul.mubr.f32.gmra.mrb[0].mxu0 %v2530
      %v2684 = vpop.f32.mrb[0].mxu0
      %v2685 = vadd.f32 %v2593, %v2684
      %v2686 = vpop.f32.mrb[0].mxu0
      %2687 = vmatprep.mubr.f32.mxu0 %v2534
      %2688 = vmatmul.mubr.f32.gmra.mrb[0].mxu0 %v2533
      %v2689 = vpop.f32.mrb[0].mxu0
      %v2690 = vadd.f32 %v2593, %v2689
      %v2691 = vpop.f32.mrb[0].mxu0
      %2692 = vmatprep.mubr.f32.mxu0 %v2537
      %2693 = vmatmul.mubr.f32.gmra.mrb[0].mxu0 %v2536
      %v2694 = vpop.f32.mrb[0].mxu0
      %v2695 = vadd.f32 %v2593, %v2694
      %v2696 = vpop.f32.mrb[0].mxu0
      %2697 = vmatprep.mubr.f32.mxu0 %v2540
      %2698 = vmatmul.mubr.f32.gmra.mrb[0].mxu0 %v2539
      %v2699 = vpop.f32.mrb[0].mxu0
      %v2700 = vadd.f32 %v2593, %v2699
      %v2701 = vpop.f32.mrb[0].mxu0
      %2702 = vmatprep.mubr.f32.mxu0 %v2543
      %2703 = vmatmul.mubr.f32.gmra.mrb[0].mxu0 %v2542
      %v2704 = vpop.f32.mrb[0].mxu0
      %v2705 = vadd.f32 %v2593, %v2704
      %v2706 = vpop.f32.mrb[0].mxu0
      %2707 = vmatprep.mubr.f32.mxu0 %v2546
      %2708 = vmatmul.mubr.f32.gmra.mrb[0].mxu0 %v2545
      %v2709 = vpop.f32.mrb[0].mxu0
      %v2710 = vadd.f32 %v2593, %v2709
      %v2711 = vpop.f32.mrb[0].mxu0
      %2712 = vmatprep.mubr.f32.mxu0 %v2549
      %2713 = vmatmul.mubr.f32.gmra.mrb[0].mxu0 %v2548
      %v2714 = vpop.f32.mrb[0].mxu0
      %v2715 = vadd.f32 %v2593, %v2714
      %v2716 = vpop.f32.mrb[0].mxu0
      %2717 = vmatprep.mubr.f32.mxu0 %v2552
      %2718 = vmatmul.mubr.f32.gmra.mrb[0].mxu0 %v2551
      %v2719 = vpop.f32.mrb[0].mxu0
      %v2720 = vadd.f32 %v2593, %v2719
      %v2721 = vpop.f32.mrb[0].mxu0
      %2722 = vdwg.mxu0
      %2723 = vmatprep.subr.mxu0 0.0
      %2724 = vmatpush1.msra.mxu0 %v2586
      %2725 = vmatprep.subr.mxu0 0.0
      %2726 = vmatpush1.msra.mxu0 %v2587
      %2727 = vmatprep.subr.mxu0 0.0
      %2728 = vmatpush1.msra.mxu0 %v2588
      %2729 = vmatprep.subr.mxu0 0.0
      %2730 = vmatpush1.msra.mxu0 %v2589
      %2731 = vmatprep.subr.mxu0 0.0
      %2732 = vmatpush1.msra.mxu0 0.0
      %2733 = vmatprep.subr.mxu0 0.0
      %2734 = vmatpush1.msra.mxu0 0.0
      %2735 = vmatprep.subr.mxu0 0.0
      %2736 = vmatpush1.msra.mxu0 0.0
      %2737 = vmatprep.subr.mxu0 0.0
      %2738 = vmatpush1.msra.mxu0 0.0
      %2739 = vmatprep.subr.mxu0 0.0
      %2740 = vmatpush1.msra.mxu0 0.0
      %2741 = vmatprep.subr.mxu0 0.0
      %2742 = vmatpush1.msra.mxu0 0.0
      %2743 = vmatprep.subr.mxu0 0.0
      %2744 = vmatpush1.msra.mxu0 0.0
      %2745 = vmatprep.subr.mxu0 0.0
      %2746 = vmatpush1.msra.mxu0 0.0
      %2747 = vmatprep.subr.mxu0 0.0
      %2748 = vmatpush1.msra.mxu0 0.0
      %2749 = vmatprep.subr.mxu0 0.0
      %2750 = vmatpush1.msra.mxu0 0.0
      %2751 = vmatprep.subr.mxu0 0.0
      %2752 = vmatpush1.msra.mxu0 0.0
      %2753 = vmatprep.subr.mxu0 0.0
      %2754 = vmatpush1.msra.mxu0 0.0
      %2755 = vmatprep.subr.mxu0 0.0
      %2756 = vmatpush1.msra.mxu0 0.0
      %2757 = vmatprep.subr.mxu0 0.0
      %2758 = vmatpush1.msra.mxu0 0.0
      %2759 = vmatprep.subr.mxu0 0.0
      %2760 = vmatpush1.msra.mxu0 0.0
      %2761 = vmatprep.subr.mxu0 0.0
      %2762 = vmatpush1.msra.mxu0 0.0
      %2763 = vmatprep.subr.mxu0 0.0
      %2764 = vmatpush1.msra.mxu0 0.0
      %2765 = vmatprep.subr.mxu0 0.0
      %2766 = vmatpush1.msra.mxu0 0.0
      %2767 = vmatprep.subr.mxu0 0.0
      %2768 = vmatpush1.msra.mxu0 0.0
      %2769 = vmatprep.subr.mxu0 0.0
      %2770 = vmatpush1.msra.mxu0 0.0
      %2771 = vmatprep.subr.mxu0 0.0
      %2772 = vmatpush1.msra.mxu0 0.0
      %2773 = vmatprep.subr.mxu0 0.0
      %2774 = vmatpush1.msra.mxu0 0.0
      %2775 = vmatprep.subr.mxu0 0.0
      %2776 = vmatpush1.msra.mxu0 0.0
      %2777 = vmatprep.subr.mxu0 0.0
      %2778 = vmatpush1.msra.mxu0 0.0
      %2779 = vmatprep.subr.mxu0 0.0
      %2780 = vmatpush1.msra.mxu0 0.0
      %2781 = vmatprep.subr.mxu0 0.0
      %2782 = vmatpush1.msra.mxu0 0.0
      %2783 = vmatprep.subr.mxu0 0.0
      %2784 = vmatpush1.msra.mxu0 0.0
      %2785 = vmatprep.subr.mxu0 0.0
      %2786 = vmatpush1.msra.mxu0 0.0
      %2787 = vmatprep.mubr.f32.mxu0 0.0
      %2788 = vmatmul.mubr.f32.gmra.mrb[0].mxu0 %v2595
      %v2789 = vpop.f32.mrb[0].mxu0
      %v2790 = vadd.f32 %v2685, %v2789
      %v2791 = vpop.f32.mrb[0].mxu0
      %2792 = vmatprep.mubr.f32.mxu0 0.0
      %2793 = vmatmul.mubr.f32.gmra.mrb[0].mxu0 %v2598
      %v2794 = vpop.f32.mrb[0].mxu0
      %v2795 = vadd.f32 %v2690, %v2794
      %v2796 = vpop.f32.mrb[0].mxu0
      %2797 = vmatprep.mubr.f32.mxu0 0.0
      %2798 = vmatmul.mubr.f32.gmra.mrb[0].mxu0 %v2601
      %v2799 = vpop.f32.mrb[0].mxu0
      %v2800 = vadd.f32 %v2695, %v2799
      %v2801 = vpop.f32.mrb[0].mxu0
      %2802 = vmatprep.mubr.f32.mxu0 0.0
      %2803 = vmatmul.mubr.f32.gmra.mrb[0].mxu0 %v2604
      %v2804 = vpop.f32.mrb[0].mxu0
      %v2805 = vadd.f32 %v2700, %v2804
      %v2806 = vpop.f32.mrb[0].mxu0
      %2807 = vmatprep.mubr.f32.mxu0 0.0
      %2808 = vmatmul.mubr.f32.gmra.mrb[0].mxu0 %v2607
      %v2809 = vpop.f32.mrb[0].mxu0
      %v2810 = vadd.f32 %v2705, %v2809
      %v2811 = vpop.f32.mrb[0].mxu0
      %2812 = vmatprep.mubr.f32.mxu0 0.0
      %2813 = vmatmul.mubr.f32.gmra.mrb[0].mxu0 %v2610
      %v2814 = vpop.f32.mrb[0].mxu0
      %v2815 = vadd.f32 %v2710, %v2814
      %v2816 = vpop.f32.mrb[0].mxu0
      %2817 = vmatprep.mubr.f32.mxu0 0.0
      %2818 = vmatmul.mubr.f32.gmra.mrb[0].mxu0 %v2613
      %v2819 = vpop.f32.mrb[0].mxu0
      %v2820 = vadd.f32 %v2715, %v2819
      %v2821 = vpop.f32.mrb[0].mxu0
      %2822 = vmatprep.mubr.f32.mxu0 0.0
      %2823 = vmatmul.mubr.f32.gmra.mrb[0].mxu0 %v2616
      %v2824 = vpop.f32.mrb[0].mxu0
      %v2825 = vadd.f32 %v2720, %v2824
      %v2826 = vpop.f32.mrb[0].mxu0
      %2827 = vdwg.mxu0
      %v2828 = vmax.f32 %v2790, 0.0
      %v2829 = vmax.f32 %v2795, 0.0
      %v2830 = vmax.f32 %v2800, 0.0
      %v2831 = vmax.f32 %v2805, 0.0
      %v2832 = vmax.f32 %v2810, 0.0
      %v2833 = vmax.f32 %v2815, 0.0
      %v2834 = vmax.f32 %v2820, 0.0
      %v2835 = vmax.f32 %v2825, 0.0
      %2836 = vst.msk [vmem:[#allocation3] sm:$0xff] %vm479, %v2828
      %2837 = vst.msk [vmem:[#allocation3 + $0x8] sm:$0xff] %vm479, %v2829
      %2838 = vst.msk [vmem:[#allocation3 + $0x10] sm:$0xff] %vm479, %v2830
      %2839 = vst.msk [vmem:[#allocation3 + $0x18] sm:$0xff] %vm479, %v2831
      %2840 = vst.msk [vmem:[#allocation3 + $0x20] sm:$0xff] %vm479, %v2832
      %2841 = vst.msk [vmem:[#allocation3 + $0x28] sm:$0xff] %vm479, %v2833
      %2842 = vst.msk [vmem:[#allocation3 + $0x30] sm:$0xff] %vm479, %v2834
      %2843 = vst.msk [vmem:[#allocation3 + $0x38] sm:$0x7f] %vm774, %v2835
      %v2844 = vld [vmem:[%s5 + $0x2] sm:$0x1]
      %v2845 = vld [vmem:[#allocation3] sm:$0xff]
      %v2846 = vld [vmem:[#allocation3 + $0x8] sm:$0xff]
      %v2847 = vld [vmem:[#allocation3 + $0x10] sm:$0xff]
      %v2848 = vld [vmem:[#allocation3 + $0x18] sm:$0xff]
      %v2849 = vld [vmem:[#allocation3 + $0x20] sm:$0xff]
      %v2850 = vld [vmem:[#allocation3 + $0x28] sm:$0x1f]
      %v2851 = vld [vmem:[#allocation3 + $0x1] sm:$0xff]
      %v2852 = vld [vmem:[#allocation3 + $0x9] sm:$0xff]
      %v2853 = vld [vmem:[#allocation3 + $0x11] sm:$0xff]
      %v2854 = vld [vmem:[#allocation3 + $0x19] sm:$0xff]
      %v2855 = vld [vmem:[#allocation3 + $0x21] sm:$0xff]
      %v2856 = vld [vmem:[#allocation3 + $0x29] sm:$0x1f]
      %v2857 = vld [vmem:[#allocation3 + $0x2] sm:$0xff]
      %v2858 = vld [vmem:[#allocation3 + $0xa] sm:$0xff]
      %v2859 = vld [vmem:[#allocation3 + $0x12] sm:$0xff]
      %v2860 = vld [vmem:[#allocation3 + $0x1a] sm:$0xff]
      %v2861 = vld [vmem:[#allocation3 + $0x22] sm:$0xff]
      %v2862 = vld [vmem:[#allocation3 + $0x2a] sm:$0x1f]
      %v2863 = vld [vmem:[#allocation3 + $0x29] sm:$0xff]
      %v2864 = vld [vmem:[#allocation3 + $0x31] sm:$0x1f]
      %v2865 = vld [vmem:[#allocation3 + $0x2a] sm:$0xff]
      %v2866 = vld [vmem:[#allocation3 + $0x32] sm:$0x1f]
      %v2867 = vld [vmem:[#allocation3 + $0xb] sm:$0xff]
      %v2868 = vld [vmem:[#allocation3 + $0x13] sm:$0xff]
      %v2869 = vld [vmem:[#allocation3 + $0x1b] sm:$0xff]
      %v2870 = vld [vmem:[#allocation3 + $0x23] sm:$0xff]
      %v2871 = vld [vmem:[#allocation3 + $0x2b] sm:$0xff]
      %v2872 = vld [vmem:[#allocation3 + $0x33] sm:$0x1f]
      %v2873 = vld [vmem:[#allocation3 + $0x32] sm:$0xff]
      %v2874 = vld [vmem:[#allocation3 + $0x3a] sm:$0x1f]
      %v2875 = vld [vmem:[#allocation3 + $0x33] sm:$0xff]
      %v2876 = vld [vmem:[#allocation3 + $0x3b] sm:$0x1f]
      %v2877 = vld [vmem:[#allocation3 + $0x14] sm:$0xff]
      %v2878 = vld [vmem:[#allocation3 + $0x1c] sm:$0xff]
      %v2879 = vld [vmem:[#allocation3 + $0x24] sm:$0xff]
      %v2880 = vld [vmem:[#allocation3 + $0x2c] sm:$0xff]
      %v2881 = vld [vmem:[#allocation3 + $0x34] sm:$0xff]
      %v2882 = vld [vmem:[#allocation3 + $0x3c] sm:$0x1f]
      %2889 = vrot.lane.b32.xlu0 %v2851, 32
      %v2890 = vpop.permute.xlu0 %2889
      %2891 = vrot.lane.b32.xlu0 %v2852, 32
      %v2892 = vpop.permute.xlu0 %2891
      %2893 = vrot.lane.b32.xlu0 %v2853, 32
      %v2894 = vpop.permute.xlu0 %2893
      %2895 = vrot.lane.b32.xlu0 %v2854, 32
      %v2896 = vpop.permute.xlu0 %2895
      %2897 = vrot.lane.b32.xlu0 %v2855, 32
      %v2898 = vpop.permute.xlu0 %2897
      %2899 = vrot.lane.b32.xlu0 %v2856, 32
      %v2900 = vpop.permute.xlu0 %2899
      %2913 = vrot.lane.b32.xlu0 %v2857, 64
      %v2914 = vpop.permute.xlu0 %2913
      %2915 = vrot.lane.b32.xlu0 %v2858, 64
      %v2916 = vpop.permute.xlu0 %2915
      %2917 = vrot.lane.b32.xlu0 %v2859, 64
      %v2918 = vpop.permute.xlu0 %2917
      %2919 = vrot.lane.b32.xlu0 %v2860, 64
      %v2920 = vpop.permute.xlu0 %2919
      %2921 = vrot.lane.b32.xlu0 %v2861, 64
      %v2922 = vpop.permute.xlu0 %2921
      %2923 = vrot.lane.b32.xlu0 %v2862, 64
      %v2924 = vpop.permute.xlu0 %2923
      %2933 = vrot.lane.b32.xlu0 %v2852, 96
      %v2934 = vpop.permute.xlu0 %2933
      %2935 = vrot.lane.b32.xlu0 %v2853, 96
      %v2936 = vpop.permute.xlu0 %2935
      %2937 = vrot.lane.b32.xlu0 %v2854, 96
      %v2938 = vpop.permute.xlu0 %2937
      %2939 = vrot.lane.b32.xlu0 %v2855, 96
      %v2940 = vpop.permute.xlu0 %2939
      %2941 = vrot.lane.b32.xlu0 %v2863, 96
      %v2942 = vpop.permute.xlu0 %2941
      %2943 = vrot.lane.b32.xlu0 %v2864, 96
      %v2944 = vpop.permute.xlu0 %2943
      %v2951 = vsel %vm479, %v2845, %v2890
      %v2952 = vsel %vm479, %v2846, %v2892
      %v2953 = vsel %vm479, %v2847, %v2894
      %v2954 = vsel %vm479, %v2848, %v2896
      %v2955 = vsel %vm479, %v2849, %v2898
      %v2956 = vsel %vm479, %v2850, %v2900
      %v2957 = vsel %vm639, %v2951, %v2914
      %v2958 = vsel %vm639, %v2952, %v2916
      %v2959 = vsel %vm639, %v2953, %v2918
      %v2960 = vsel %vm639, %v2954, %v2920
      %v2961 = vsel %vm639, %v2955, %v2922
      %v2962 = vsel %vm639, %v2956, %v2924
      %v2963 = vsel %vm648, %v2957, %v2934
      %v2964 = vsel %vm648, %v2958, %v2936
      %v2965 = vsel %vm648, %v2959, %v2938
      %v2966 = vsel %vm648, %v2960, %v2940
      %v2967 = vsel %vm648, %v2961, %v2942
      %v2968 = vsel %vm648, %v2962, %v2944
      %2969 = vst [vmem:[#allocation4] sm:$0xff] %v2963
      %2970 = vst [vmem:[#allocation4 + $0x18] sm:$0xff] %v2964
      %2971 = vst [vmem:[#allocation4 + $0x30] sm:$0xff] %v2965
      %2972 = vst [vmem:[#allocation4 + $0x48] sm:$0xff] %v2966
      %2973 = vst [vmem:[#allocation4 + $0x60] sm:$0xff] %v2967
      %2974 = vst [vmem:[#allocation4 + $0x78] sm:$0x1f] %v2968
      %2981 = vrot.lane.b32.xlu0 %v2867, 32
      %v2982 = vpop.permute.xlu0 %2981
      %2983 = vrot.lane.b32.xlu0 %v2868, 32
      %v2984 = vpop.permute.xlu0 %2983
      %2985 = vrot.lane.b32.xlu0 %v2869, 32
      %v2986 = vpop.permute.xlu0 %2985
      %2987 = vrot.lane.b32.xlu0 %v2870, 32
      %v2988 = vpop.permute.xlu0 %2987
      %2989 = vrot.lane.b32.xlu0 %v2871, 32
      %v2990 = vpop.permute.xlu0 %2989
      %2991 = vrot.lane.b32.xlu0 %v2872, 32
      %v2992 = vpop.permute.xlu0 %2991
      %3002 = vrot.lane.b32.xlu0 %v2865, 64
      %v3003 = vpop.permute.xlu0 %3002
      %3004 = vrot.lane.b32.xlu0 %v2873, 64
      %v3005 = vpop.permute.xlu0 %3004
      %3006 = vrot.lane.b32.xlu0 %v2874, 64
      %v3007 = vpop.permute.xlu0 %3006
      %3013 = vrot.lane.b32.xlu0 %v2868, 96
      %v3014 = vpop.permute.xlu0 %3013
      %3015 = vrot.lane.b32.xlu0 %v2869, 96
      %v3016 = vpop.permute.xlu0 %3015
      %3017 = vrot.lane.b32.xlu0 %v2870, 96
      %v3018 = vpop.permute.xlu0 %3017
      %3019 = vrot.lane.b32.xlu0 %v2871, 96
      %v3020 = vpop.permute.xlu0 %3019
      %3021 = vrot.lane.b32.xlu0 %v2875, 96
      %v3022 = vpop.permute.xlu0 %3021
      %3023 = vrot.lane.b32.xlu0 %v2876, 96
      %v3024 = vpop.permute.xlu0 %3023
      %v3031 = vsel %vm479, %v2858, %v2982
      %v3032 = vsel %vm479, %v2859, %v2984
      %v3033 = vsel %vm479, %v2860, %v2986
      %v3034 = vsel %vm479, %v2861, %v2988
      %v3035 = vsel %vm479, %v2865, %v2990
      %v3036 = vsel %vm479, %v2866, %v2992
      %v3037 = vsel %vm639, %v3031, %v2918
      %v3038 = vsel %vm639, %v3032, %v2920
      %v3039 = vsel %vm639, %v3033, %v2922
      %v3040 = vsel %vm639, %v3034, %v3003
      %v3041 = vsel %vm639, %v3035, %v3005
      %v3042 = vsel %vm639, %v3036, %v3007
      %v3043 = vsel %vm648, %v3037, %v3014
      %v3044 = vsel %vm648, %v3038, %v3016
      %v3045 = vsel %vm648, %v3039, %v3018
      %v3046 = vsel %vm648, %v3040, %v3020
      %v3047 = vsel %vm648, %v3041, %v3022
      %v3048 = vsel %vm648, %v3042, %v3024
      %3049 = vst [vmem:[#allocation4 + $0x8] sm:$0xff] %v3043
      %3050 = vst [vmem:[#allocation4 + $0x20] sm:$0xff] %v3044
      %3051 = vst [vmem:[#allocation4 + $0x38] sm:$0xff] %v3045
      %3052 = vst [vmem:[#allocation4 + $0x50] sm:$0xff] %v3046
      %3053 = vst [vmem:[#allocation4 + $0x68] sm:$0xff] %v3047
      %3054 = vst [vmem:[#allocation4 + $0x80] sm:$0x1f] %v3048
      %3055 = vst.msk [vmem:[#allocation4 + $0x10] sm:$0xff] %vm479, %v2877
      %3056 = vst.msk [vmem:[#allocation4 + $0x28] sm:$0xff] %vm479, %v2878
      %3057 = vst.msk [vmem:[#allocation4 + $0x40] sm:$0xff] %vm479, %v2879
      %3058 = vst.msk [vmem:[#allocation4 + $0x58] sm:$0xff] %vm479, %v2880
      %3059 = vst.msk [vmem:[#allocation4 + $0x70] sm:$0xff] %vm479, %v2881
      %3060 = vst.msk [vmem:[#allocation4 + $0x88] sm:$0x1f] %vm1306, %v2882
      %v3061 = vld [vmem:[#allocation4] sm:$0xff]
      %v3062 = vld [vmem:[#allocation4 + $0x8] sm:$0xff]
      %v3063 = vld [vmem:[#allocation4 + $0x10] sm:$0xff]
      %v3064 = vld [vmem:[#allocation4 + $0x18] sm:$0xff]
      %v3065 = vld [vmem:[#allocation4 + $0x20] sm:$0xff]
      %v3066 = vld [vmem:[#allocation4 + $0x28] sm:$0xff]
      %v3067 = vld [vmem:[#allocation4 + $0x30] sm:$0xff]
      %v3068 = vld [vmem:[#allocation4 + $0x38] sm:$0xff]
      %v3069 = vld [vmem:[#allocation4 + $0x40] sm:$0xff]
      %v3070 = vld [vmem:[#allocation4 + $0x48] sm:$0xff]
      %v3071 = vld [vmem:[#allocation4 + $0x50] sm:$0xff]
      %v3072 = vld [vmem:[#allocation4 + $0x58] sm:$0xff]
      %v3073 = vld [vmem:[#allocation4 + $0x60] sm:$0xff]
      %v3074 = vld [vmem:[#allocation4 + $0x68] sm:$0xff]
      %v3075 = vld [vmem:[#allocation4 + $0x70] sm:$0xff]
      %v3076 = vld [vmem:[#allocation4 + $0x78] sm:$0x1f]
      %v3077 = vld [vmem:[#allocation4 + $0x80] sm:$0x1f]
      %v3078 = vld [vmem:[#allocation4 + $0x88] sm:$0x1f]
      %v3079 = vld [vmem:[%s3] sm:$0xff]
      %v3080 = vld [vmem:[%s3 + $0x8] sm:$0xff]
      %v3081 = vld [vmem:[%s3 + $0x10] sm:$0xff]
      %v3082 = vld [vmem:[%s3 + $0x18] sm:$0xff]
      %v3083 = vld [vmem:[%s3 + $0x20] sm:$0xff]
      %v3084 = vld [vmem:[%s3 + $0x28] sm:$0xff]
      %v3085 = vld [vmem:[%s3 + $0x30] sm:$0xff]
      %v3086 = vld [vmem:[%s3 + $0x38] sm:$0xff]
      %v3087 = vld [vmem:[%s3 + $0x40] sm:$0xff]
      %v3088 = vld [vmem:[%s3 + $0x48] sm:$0xff]
      %v3089 = vld [vmem:[%s3 + $0x50] sm:$0xff]
      %v3090 = vld [vmem:[%s3 + $0x58] sm:$0xff]
      %v3091 = vld [vmem:[%s3 + $0x60] sm:$0xff]
      %v3092 = vld [vmem:[%s3 + $0x68] sm:$0xff]
      %v3093 = vld [vmem:[%s3 + $0x70] sm:$0xff]
      %v3094 = vld [vmem:[%s3 + $0x78] sm:$0xff]
      %v3095 = vld [vmem:[%s3 + $0x80] sm:$0xff]
      %v3096 = vld [vmem:[%s3 + $0x88] sm:$0xff]
      %v3097 = vld [vmem:[%s3 + $0x90] sm:$0xff]
      %v3098 = vld [vmem:[%s3 + $0x98] sm:$0xff]
      %v3099 = vld [vmem:[%s3 + $0xa0] sm:$0xff]
      %v3100 = vld [vmem:[%s3 + $0xa8] sm:$0xff]
      %v3101 = vld [vmem:[%s3 + $0xb0] sm:$0xff]
      %v3102 = vld [vmem:[%s3 + $0xb8] sm:$0xff]
      %v3103 = vld [vmem:[%s3 + $0xc0] sm:$0xff]
      %v3104 = vld [vmem:[%s3 + $0xc8] sm:$0xff]
      %v3105 = vld [vmem:[%s3 + $0xd0] sm:$0xff]
      %v3106 = vld [vmem:[%s3 + $0xd8] sm:$0xff]
      %v3107 = vld [vmem:[%s3 + $0xe0] sm:$0xff]
      %v3108 = vld [vmem:[%s3 + $0xe8] sm:$0xff]
      %v3109 = vld [vmem:[%s3 + $0xf0] sm:$0xff]
      %v3110 = vld [vmem:[%s3 + $0xf8] sm:$0xff]
      %v3111 = vld [vmem:[%s3 + $0x100] sm:$0xff]
      %v3112 = vld [vmem:[%s3 + $0x108] sm:$0xff]
      %v3113 = vld [vmem:[%s3 + $0x110] sm:$0xff]
      %v3114 = vld [vmem:[%s3 + $0x118] sm:$0xff]
      %v3115 = vlaneseq
      %v3116 = vshrl.u32 %v3115, 7
      %v3117 = vsub.s32 0, %v3116
      %v3118 = vrot.slane %v2844, %v3117
      %v3120 = vsel %vm479, %v3063, 0
      %v3123 = vsel %vm479, %v3066, 0
      %v3126 = vsel %vm479, %v3069, 0
      %v3129 = vsel %vm479, %v3072, 0
      %v3132 = vsel %vm479, %v3075, 0
      %v3135 = vsel %vm479, %v3078, 0
      %3137 = vmatprep.subr.mxu0 0.0
      %3138 = vmatpush1.msra.mxu0 %v3079
      %3139 = vmatprep.subr.mxu0 0.0
      %3140 = vmatpush1.msra.mxu0 %v3080
      %3141 = vmatprep.subr.mxu0 0.0
      %3142 = vmatpush1.msra.mxu0 %v3081
      %3143 = vmatprep.subr.mxu0 0.0
      %3144 = vmatpush1.msra.mxu0 %v3082
      %3145 = vmatprep.subr.mxu0 0.0
      %3146 = vmatpush1.msra.mxu0 %v3083
      %3147 = vmatprep.subr.mxu0 0.0
      %3148 = vmatpush1.msra.mxu0 %v3084
      %3149 = vmatprep.subr.mxu0 0.0
      %3150 = vmatpush1.msra.mxu0 %v3085
      %3151 = vmatprep.subr.mxu0 0.0
      %3152 = vmatpush1.msra.mxu0 %v3086
      %3153 = vmatprep.subr.mxu0 0.0
      %3154 = vmatpush1.msra.mxu0 %v3087
      %3155 = vmatprep.subr.mxu0 0.0
      %3156 = vmatpush1.msra.mxu0 %v3088
      %3157 = vmatprep.subr.mxu0 0.0
      %3158 = vmatpush1.msra.mxu0 %v3089
      %3159 = vmatprep.subr.mxu0 0.0
      %3160 = vmatpush1.msra.mxu0 %v3090
      %3161 = vmatprep.subr.mxu0 0.0
      %3162 = vmatpush1.msra.mxu0 %v3091
      %3163 = vmatprep.subr.mxu0 0.0
      %3164 = vmatpush1.msra.mxu0 %v3092
      %3165 = vmatprep.subr.mxu0 0.0
      %3166 = vmatpush1.msra.mxu0 %v3093
      %3167 = vmatprep.subr.mxu0 0.0
      %3168 = vmatpush1.msra.mxu0 %v3094
      %3169 = vmatprep.subr.mxu0 0.0
      %3170 = vmatpush1.msra.mxu0 %v3095
      %3171 = vmatprep.subr.mxu0 0.0
      %3172 = vmatpush1.msra.mxu0 %v3096
      %3173 = vmatprep.subr.mxu0 0.0
      %3174 = vmatpush1.msra.mxu0 %v3097
      %3175 = vmatprep.subr.mxu0 0.0
      %3176 = vmatpush1.msra.mxu0 %v3098
      %3177 = vmatprep.subr.mxu0 0.0
      %3178 = vmatpush1.msra.mxu0 %v3099
      %3179 = vmatprep.subr.mxu0 0.0
      %3180 = vmatpush1.msra.mxu0 %v3100
      %3181 = vmatprep.subr.mxu0 0.0
      %3182 = vmatpush1.msra.mxu0 %v3101
      %3183 = vmatprep.subr.mxu0 0.0
      %3184 = vmatpush1.msra.mxu0 %v3102
      %3185 = vmatprep.subr.mxu0 0.0
      %3186 = vmatpush1.msra.mxu0 %v3103
      %3187 = vmatprep.subr.mxu0 0.0
      %3188 = vmatpush1.msra.mxu0 %v3104
      %3189 = vmatprep.subr.mxu0 0.0
      %3190 = vmatpush1.msra.mxu0 %v3105
      %3191 = vmatprep.subr.mxu0 0.0
      %3192 = vmatpush1.msra.mxu0 %v3106
      %3193 = vmatprep.subr.mxu0 0.0
      %3194 = vmatpush1.msra.mxu0 %v3107
      %3195 = vmatprep.subr.mxu0 0.0
      %3196 = vmatpush1.msra.mxu0 %v3108
      %3197 = vmatprep.subr.mxu0 0.0
      %3198 = vmatpush1.msra.mxu0 %v3109
      %3199 = vmatprep.subr.mxu0 0.0
      %3200 = vmatpush1.msra.mxu0 %v3110
      %3201 = vmatprep.mubr.f32.mxu0 %v3062
      %3202 = vmatmul.mubr.f32.gmra.mrb[0].mxu0 %v3061
      %v3203 = vpop.f32.mrb[0].mxu0
      %v3204 = vadd.f32 %v3118, %v3203
      %v3205 = vpop.f32.mrb[0].mxu0
      %3206 = vmatprep.mubr.f32.mxu0 %v3065
      %3207 = vmatmul.mubr.f32.gmra.mrb[0].mxu0 %v3064
      %v3208 = vpop.f32.mrb[0].mxu0
      %v3209 = vadd.f32 %v3118, %v3208
      %v3210 = vpop.f32.mrb[0].mxu0
      %3211 = vmatprep.mubr.f32.mxu0 %v3068
      %3212 = vmatmul.mubr.f32.gmra.mrb[0].mxu0 %v3067
      %v3213 = vpop.f32.mrb[0].mxu0
      %v3214 = vadd.f32 %v3118, %v3213
      %v3215 = vpop.f32.mrb[0].mxu0
      %3216 = vmatprep.mubr.f32.mxu0 %v3071
      %3217 = vmatmul.mubr.f32.gmra.mrb[0].mxu0 %v3070
      %v3218 = vpop.f32.mrb[0].mxu0
      %v3219 = vadd.f32 %v3118, %v3218
      %v3220 = vpop.f32.mrb[0].mxu0
      %3221 = vmatprep.mubr.f32.mxu0 %v3074
      %3222 = vmatmul.mubr.f32.gmra.mrb[0].mxu0 %v3073
      %v3223 = vpop.f32.mrb[0].mxu0
      %v3224 = vadd.f32 %v3118, %v3223
      %v3225 = vpop.f32.mrb[0].mxu0
      %3226 = vmatprep.mubr.f32.mxu0 %v3077
      %3227 = vmatmul.mubr.f32.gmra.mrb[0].mxu0 %v3076
      %v3228 = vpop.f32.mrb[0].mxu0
      %v3229 = vadd.f32 %v3118, %v3228
      %v3230 = vpop.f32.mrb[0].mxu0
      %3231 = vdwg.mxu0
      %3232 = vmatprep.subr.mxu0 0.0
      %3233 = vmatpush1.msra.mxu0 %v3111
      %3234 = vmatprep.subr.mxu0 0.0
      %3235 = vmatpush1.msra.mxu0 %v3112
      %3236 = vmatprep.subr.mxu0 0.0
      %3237 = vmatpush1.msra.mxu0 %v3113
      %3238 = vmatprep.subr.mxu0 0.0
      %3239 = vmatpush1.msra.mxu0 %v3114
      %3240 = vmatprep.subr.mxu0 0.0
      %3241 = vmatpush1.msra.mxu0 0.0
      %3242 = vmatprep.subr.mxu0 0.0
      %3243 = vmatpush1.msra.mxu0 0.0
      %3244 = vmatprep.subr.mxu0 0.0
      %3245 = vmatpush1.msra.mxu0 0.0
      %3246 = vmatprep.subr.mxu0 0.0
      %3247 = vmatpush1.msra.mxu0 0.0
      %3248 = vmatprep.subr.mxu0 0.0
      %3249 = vmatpush1.msra.mxu0 0.0
      %3250 = vmatprep.subr.mxu0 0.0
      %3251 = vmatpush1.msra.mxu0 0.0
      %3252 = vmatprep.subr.mxu0 0.0
      %3253 = vmatpush1.msra.mxu0 0.0
      %3254 = vmatprep.subr.mxu0 0.0
      %3255 = vmatpush1.msra.mxu0 0.0
      %3256 = vmatprep.subr.mxu0 0.0
      %3257 = vmatpush1.msra.mxu0 0.0
      %3258 = vmatprep.subr.mxu0 0.0
      %3259 = vmatpush1.msra.mxu0 0.0
      %3260 = vmatprep.subr.mxu0 0.0
      %3261 = vmatpush1.msra.mxu0 0.0
      %3262 = vmatprep.subr.mxu0 0.0
      %3263 = vmatpush1.msra.mxu0 0.0
      %3264 = vmatprep.subr.mxu0 0.0
      %3265 = vmatpush1.msra.mxu0 0.0
      %3266 = vmatprep.subr.mxu0 0.0
      %3267 = vmatpush1.msra.mxu0 0.0
      %3268 = vmatprep.subr.mxu0 0.0
      %3269 = vmatpush1.msra.mxu0 0.0
      %3270 = vmatprep.subr.mxu0 0.0
      %3271 = vmatpush1.msra.mxu0 0.0
      %3272 = vmatprep.subr.mxu0 0.0
      %3273 = vmatpush1.msra.mxu0 0.0
      %3274 = vmatprep.subr.mxu0 0.0
      %3275 = vmatpush1.msra.mxu0 0.0
      %3276 = vmatprep.subr.mxu0 0.0
      %3277 = vmatpush1.msra.mxu0 0.0
      %3278 = vmatprep.subr.mxu0 0.0
      %3279 = vmatpush1.msra.mxu0 0.0
      %3280 = vmatprep.subr.mxu0 0.0
      %3281 = vmatpush1.msra.mxu0 0.0
      %3282 = vmatprep.subr.mxu0 0.0
      %3283 = vmatpush1.msra.mxu0 0.0
      %3284 = vmatprep.subr.mxu0 0.0
      %3285 = vmatpush1.msra.mxu0 0.0
      %3286 = vmatprep.subr.mxu0 0.0
      %3287 = vmatpush1.msra.mxu0 0.0
      %3288 = vmatprep.subr.mxu0 0.0
      %3289 = vmatpush1.msra.mxu0 0.0
      %3290 = vmatprep.subr.mxu0 0.0
      %3291 = vmatpush1.msra.mxu0 0.0
      %3292 = vmatprep.subr.mxu0 0.0
      %3293 = vmatpush1.msra.mxu0 0.0
      %3294 = vmatprep.subr.mxu0 0.0
      %3295 = vmatpush1.msra.mxu0 0.0
      %3296 = vmatprep.mubr.f32.mxu0 0.0
      %3297 = vmatmul.mubr.f32.gmra.mrb[0].mxu0 %v3120
      %v3298 = vpop.f32.mrb[0].mxu0
      %v3299 = vadd.f32 %v3204, %v3298
      %v3300 = vpop.f32.mrb[0].mxu0
      %3301 = vmatprep.mubr.f32.mxu0 0.0
      %3302 = vmatmul.mubr.f32.gmra.mrb[0].mxu0 %v3123
      %v3303 = vpop.f32.mrb[0].mxu0
      %v3304 = vadd.f32 %v3209, %v3303
      %v3305 = vpop.f32.mrb[0].mxu0
      %3306 = vmatprep.mubr.f32.mxu0 0.0
      %3307 = vmatmul.mubr.f32.gmra.mrb[0].mxu0 %v3126
      %v3308 = vpop.f32.mrb[0].mxu0
      %v3309 = vadd.f32 %v3214, %v3308
      %v3310 = vpop.f32.mrb[0].mxu0
      %3311 = vmatprep.mubr.f32.mxu0 0.0
      %3312 = vmatmul.mubr.f32.gmra.mrb[0].mxu0 %v3129
      %v3313 = vpop.f32.mrb[0].mxu0
      %v3314 = vadd.f32 %v3219, %v3313
      %v3315 = vpop.f32.mrb[0].mxu0
      %3316 = vmatprep.mubr.f32.mxu0 0.0
      %3317 = vmatmul.mubr.f32.gmra.mrb[0].mxu0 %v3132
      %v3318 = vpop.f32.mrb[0].mxu0
      %v3319 = vadd.f32 %v3224, %v3318
      %v3320 = vpop.f32.mrb[0].mxu0
      %3321 = vmatprep.mubr.f32.mxu0 0.0
      %3322 = vmatmul.mubr.f32.gmra.mrb[0].mxu0 %v3135
      %v3323 = vpop.f32.mrb[0].mxu0
      %v3324 = vadd.f32 %v3229, %v3323
      %v3325 = vpop.f32.mrb[0].mxu0
      %3326 = vdwg.mxu0
      %v3327 = vmax.f32 %v3299, 0.0
      %v3328 = vmax.f32 %v3304, 0.0
      %v3329 = vmax.f32 %v3309, 0.0
      %v3330 = vmax.f32 %v3314, 0.0
      %v3331 = vmax.f32 %v3319, 0.0
      %v3332 = vmax.f32 %v3324, 0.0
      %3333 = vst.msk [vmem:[#allocation2] sm:$0xff] %vm479, %v3327
      %3334 = vst.msk [vmem:[#allocation2 + $0x8] sm:$0xff] %vm479, %v3328
      %3335 = vst.msk [vmem:[#allocation2 + $0x10] sm:$0xff] %vm479, %v3329
      %3336 = vst.msk [vmem:[#allocation2 + $0x18] sm:$0xff] %vm479, %v3330
      %3337 = vst.msk [vmem:[#allocation2 + $0x20] sm:$0xff] %vm479, %v3331
      %3338 = vst.msk [vmem:[#allocation2 + $0x28] sm:$0x1f] %vm1306, %v3332
      %v3339 = vld [vmem:[%s5 + $0x3] sm:$0x1]
      %v3340 = vld [vmem:[#allocation2] sm:$0xff]
      %v3341 = vld [vmem:[#allocation2 + $0x8] sm:$0xff]
      %v3342 = vld [vmem:[#allocation2 + $0x10] sm:$0xff]
      %v3343 = vld [vmem:[#allocation2 + $0x18] sm:$0x7]
      %v3344 = vld [vmem:[#allocation2 + $0x1] sm:$0xff]
      %v3345 = vld [vmem:[#allocation2 + $0x9] sm:$0xff]
      %v3346 = vld [vmem:[#allocation2 + $0x11] sm:$0xff]
      %v3347 = vld [vmem:[#allocation2 + $0x19] sm:$0x7]
      %v3348 = vld [vmem:[#allocation2 + $0x2] sm:$0xff]
      %v3349 = vld [vmem:[#allocation2 + $0xa] sm:$0xff]
      %v3350 = vld [vmem:[#allocation2 + $0x12] sm:$0xff]
      %v3351 = vld [vmem:[#allocation2 + $0x1a] sm:$0x7]
      %v3352 = vld [vmem:[#allocation2 + $0x19] sm:$0xff]
      %v3353 = vld [vmem:[#allocation2 + $0x21] sm:$0x7]
      %v3354 = vld [vmem:[#allocation2 + $0x1a] sm:$0xff]
      %v3355 = vld [vmem:[#allocation2 + $0x22] sm:$0x7]
      %v3356 = vld [vmem:[#allocation2 + $0xb] sm:$0xff]
      %v3357 = vld [vmem:[#allocation2 + $0x13] sm:$0xff]
      %v3358 = vld [vmem:[#allocation2 + $0x1b] sm:$0xff]
      %v3359 = vld [vmem:[#allocation2 + $0x23] sm:$0x7]
      %v3360 = vld [vmem:[#allocation2 + $0x22] sm:$0xff]
      %v3361 = vld [vmem:[#allocation2 + $0x2a] sm:$0x7]
      %v3362 = vld [vmem:[#allocation2 + $0x23] sm:$0xff]
      %v3363 = vld [vmem:[#allocation2 + $0x2b] sm:$0x7]
      %v3364 = vld [vmem:[#allocation2 + $0x14] sm:$0xff]
      %v3365 = vld [vmem:[#allocation2 + $0x1c] sm:$0xff]
      %v3366 = vld [vmem:[#allocation2 + $0x24] sm:$0xff]
      %v3367 = vld [vmem:[#allocation2 + $0x2c] sm:$0x7]
      %3372 = vrot.lane.b32.xlu0 %v3344, 32
      %v3373 = vpop.permute.xlu0 %3372
      %3374 = vrot.lane.b32.xlu0 %v3345, 32
      %v3375 = vpop.permute.xlu0 %3374
      %3376 = vrot.lane.b32.xlu0 %v3346, 32
      %v3377 = vpop.permute.xlu0 %3376
      %3378 = vrot.lane.b32.xlu0 %v3347, 32
      %v3379 = vpop.permute.xlu0 %3378
      %3388 = vrot.lane.b32.xlu0 %v3348, 64
      %v3389 = vpop.permute.xlu0 %3388
      %3390 = vrot.lane.b32.xlu0 %v3349, 64
      %v3391 = vpop.permute.xlu0 %3390
      %3392 = vrot.lane.b32.xlu0 %v3350, 64
      %v3393 = vpop.permute.xlu0 %3392
      %3394 = vrot.lane.b32.xlu0 %v3351, 64
      %v3395 = vpop.permute.xlu0 %3394
      %3402 = vrot.lane.b32.xlu0 %v3345, 96
      %v3403 = vpop.permute.xlu0 %3402
      %3404 = vrot.lane.b32.xlu0 %v3346, 96
      %v3405 = vpop.permute.xlu0 %3404
      %3406 = vrot.lane.b32.xlu0 %v3352, 96
      %v3407 = vpop.permute.xlu0 %3406
      %3408 = vrot.lane.b32.xlu0 %v3353, 96
      %v3409 = vpop.permute.xlu0 %3408
      %v3414 = vsel %vm479, %v3340, %v3373
      %v3415 = vsel %vm479, %v3341, %v3375
      %v3416 = vsel %vm479, %v3342, %v3377
      %v3417 = vsel %vm479, %v3343, %v3379
      %v3418 = vsel %vm639, %v3414, %v3389
      %v3419 = vsel %vm639, %v3415, %v3391
      %v3420 = vsel %vm639, %v3416, %v3393
      %v3421 = vsel %vm639, %v3417, %v3395
      %v3422 = vsel %vm648, %v3418, %v3403
      %v3423 = vsel %vm648, %v3419, %v3405
      %v3424 = vsel %vm648, %v3420, %v3407
      %v3425 = vsel %vm648, %v3421, %v3409
      %3426 = vst [vmem:[#allocation4] sm:$0xff] %v3422
      %3427 = vst [vmem:[#allocation4 + $0x18] sm:$0xff] %v3423
      %3428 = vst [vmem:[#allocation4 + $0x30] sm:$0xff] %v3424
      %3429 = vst [vmem:[#allocation4 + $0x48] sm:$0x7] %v3425
      %3434 = vrot.lane.b32.xlu0 %v3356, 32
      %v3435 = vpop.permute.xlu0 %3434
      %3436 = vrot.lane.b32.xlu0 %v3357, 32
      %v3437 = vpop.permute.xlu0 %3436
      %3438 = vrot.lane.b32.xlu0 %v3358, 32
      %v3439 = vpop.permute.xlu0 %3438
      %3440 = vrot.lane.b32.xlu0 %v3359, 32
      %v3441 = vpop.permute.xlu0 %3440
      %3449 = vrot.lane.b32.xlu0 %v3354, 64
      %v3450 = vpop.permute.xlu0 %3449
      %3451 = vrot.lane.b32.xlu0 %v3360, 64
      %v3452 = vpop.permute.xlu0 %3451
      %3453 = vrot.lane.b32.xlu0 %v3361, 64
      %v3454 = vpop.permute.xlu0 %3453
      %3460 = vrot.lane.b32.xlu0 %v3357, 96
      %v3461 = vpop.permute.xlu0 %3460
      %3462 = vrot.lane.b32.xlu0 %v3358, 96
      %v3463 = vpop.permute.xlu0 %3462
      %3464 = vrot.lane.b32.xlu0 %v3362, 96
      %v3465 = vpop.permute.xlu0 %3464
      %3466 = vrot.lane.b32.xlu0 %v3363, 96
      %v3467 = vpop.permute.xlu0 %3466
      %v3472 = vsel %vm479, %v3349, %v3435
      %v3473 = vsel %vm479, %v3350, %v3437
      %v3474 = vsel %vm479, %v3354, %v3439
      %v3475 = vsel %vm479, %v3355, %v3441
      %v3476 = vsel %vm639, %v3472, %v3393
      %v3477 = vsel %vm639, %v3473, %v3450
      %v3478 = vsel %vm639, %v3474, %v3452
      %v3479 = vsel %vm639, %v3475, %v3454
      %v3480 = vsel %vm648, %v3476, %v3461
      %v3481 = vsel %vm648, %v3477, %v3463
      %v3482 = vsel %vm648, %v3478, %v3465
      %v3483 = vsel %vm648, %v3479, %v3467
      %3484 = vst [vmem:[#allocation4 + $0x8] sm:$0xff] %v3480
      %3485 = vst [vmem:[#allocation4 + $0x20] sm:$0xff] %v3481
      %3486 = vst [vmem:[#allocation4 + $0x38] sm:$0xff] %v3482
      %3487 = vst [vmem:[#allocation4 + $0x50] sm:$0x7] %v3483
      %3488 = vst.msk [vmem:[#allocation4 + $0x10] sm:$0xff] %vm479, %v3364
      %3489 = vst.msk [vmem:[#allocation4 + $0x28] sm:$0xff] %vm479, %v3365
      %3490 = vst.msk [vmem:[#allocation4 + $0x40] sm:$0xff] %vm479, %v3366
      %3491 = vst.msk [vmem:[#allocation4 + $0x58] sm:$0x7] %vm1738, %v3367
      %v3492 = vld [vmem:[#allocation4] sm:$0xff]
      %v3493 = vld [vmem:[#allocation4 + $0x8] sm:$0xff]
      %v3494 = vld [vmem:[#allocation4 + $0x10] sm:$0xff]
      %v3495 = vld [vmem:[#allocation4 + $0x18] sm:$0xff]
      %v3496 = vld [vmem:[#allocation4 + $0x20] sm:$0xff]
      %v3497 = vld [vmem:[#allocation4 + $0x28] sm:$0xff]
      %v3498 = vld [vmem:[#allocation4 + $0x30] sm:$0xff]
      %v3499 = vld [vmem:[#allocation4 + $0x38] sm:$0xff]
      %v3500 = vld [vmem:[#allocation4 + $0x40] sm:$0xff]
      %v3501 = vld [vmem:[#allocation4 + $0x48] sm:$0x7]
      %v3502 = vld [vmem:[#allocation4 + $0x50] sm:$0x7]
      %v3503 = vld [vmem:[#allocation4 + $0x58] sm:$0x7]
      %v3504 = vld [vmem:[%s4] sm:$0xff]
      %v3505 = vld [vmem:[%s4 + $0x8] sm:$0xff]
      %v3506 = vld [vmem:[%s4 + $0x10] sm:$0xff]
      %v3507 = vld [vmem:[%s4 + $0x18] sm:$0xff]
      %v3508 = vld [vmem:[%s4 + $0x20] sm:$0xff]
      %v3509 = vld [vmem:[%s4 + $0x28] sm:$0xff]
      %v3510 = vld [vmem:[%s4 + $0x30] sm:$0xff]
      %v3511 = vld [vmem:[%s4 + $0x38] sm:$0xff]
      %v3512 = vld [vmem:[%s4 + $0x40] sm:$0xff]
      %v3513 = vld [vmem:[%s4 + $0x48] sm:$0xff]
      %v3514 = vld [vmem:[%s4 + $0x50] sm:$0xff]
      %v3515 = vld [vmem:[%s4 + $0x58] sm:$0xff]
      %v3516 = vld [vmem:[%s4 + $0x60] sm:$0xff]
      %v3517 = vld [vmem:[%s4 + $0x68] sm:$0xff]
      %v3518 = vld [vmem:[%s4 + $0x70] sm:$0xff]
      %v3519 = vld [vmem:[%s4 + $0x78] sm:$0xff]
      %v3520 = vld [vmem:[%s4 + $0x80] sm:$0xff]
      %v3521 = vld [vmem:[%s4 + $0x88] sm:$0xff]
      %v3522 = vld [vmem:[%s4 + $0x90] sm:$0xff]
      %v3523 = vld [vmem:[%s4 + $0x98] sm:$0xff]
      %v3524 = vld [vmem:[%s4 + $0xa0] sm:$0xff]
      %v3525 = vld [vmem:[%s4 + $0xa8] sm:$0xff]
      %v3526 = vld [vmem:[%s4 + $0xb0] sm:$0xff]
      %v3527 = vld [vmem:[%s4 + $0xb8] sm:$0xff]
      %v3528 = vld [vmem:[%s4 + $0xc0] sm:$0xff]
      %v3529 = vld [vmem:[%s4 + $0xc8] sm:$0xff]
      %v3530 = vld [vmem:[%s4 + $0xd0] sm:$0xff]
      %v3531 = vld [vmem:[%s4 + $0xd8] sm:$0xff]
      %v3532 = vld [vmem:[%s4 + $0xe0] sm:$0xff]
      %v3533 = vld [vmem:[%s4 + $0xe8] sm:$0xff]
      %v3534 = vld [vmem:[%s4 + $0xf0] sm:$0xff]
      %v3535 = vld [vmem:[%s4 + $0xf8] sm:$0xff]
      %v3536 = vld [vmem:[%s4 + $0x100] sm:$0xff]
      %v3537 = vld [vmem:[%s4 + $0x108] sm:$0xff]
      %v3538 = vld [vmem:[%s4 + $0x110] sm:$0xff]
      %v3539 = vld [vmem:[%s4 + $0x118] sm:$0xff]
      %v3540 = vlaneseq
      %v3541 = vshrl.u32 %v3540, 7
      %v3542 = vsub.s32 0, %v3541
      %v3543 = vrot.slane %v3339, %v3542
      %v3545 = vsel %vm479, %v3494, 0
      %v3548 = vsel %vm479, %v3497, 0
      %v3551 = vsel %vm479, %v3500, 0
      %v3554 = vsel %vm479, %v3503, 0
      %3556 = vmatprep.subr.mxu0 0.0
      %3557 = vmatpush1.msra.mxu0 %v3504
      %3558 = vmatprep.subr.mxu0 0.0
      %3559 = vmatpush1.msra.mxu0 %v3505
      %3560 = vmatprep.subr.mxu0 0.0
      %3561 = vmatpush1.msra.mxu0 %v3506
      %3562 = vmatprep.subr.mxu0 0.0
      %3563 = vmatpush1.msra.mxu0 %v3507
      %3564 = vmatprep.subr.mxu0 0.0
      %3565 = vmatpush1.msra.mxu0 %v3508
      %3566 = vmatprep.subr.mxu0 0.0
      %3567 = vmatpush1.msra.mxu0 %v3509
      %3568 = vmatprep.subr.mxu0 0.0
      %3569 = vmatpush1.msra.mxu0 %v3510
      %3570 = vmatprep.subr.mxu0 0.0
      %3571 = vmatpush1.msra.mxu0 %v3511
      %3572 = vmatprep.subr.mxu0 0.0
      %3573 = vmatpush1.msra.mxu0 %v3512
      %3574 = vmatprep.subr.mxu0 0.0
      %3575 = vmatpush1.msra.mxu0 %v3513
      %3576 = vmatprep.subr.mxu0 0.0
      %3577 = vmatpush1.msra.mxu0 %v3514
      %3578 = vmatprep.subr.mxu0 0.0
      %3579 = vmatpush1.msra.mxu0 %v3515
      %3580 = vmatprep.subr.mxu0 0.0
      %3581 = vmatpush1.msra.mxu0 %v3516
      %3582 = vmatprep.subr.mxu0 0.0
      %3583 = vmatpush1.msra.mxu0 %v3517
      %3584 = vmatprep.subr.mxu0 0.0
      %3585 = vmatpush1.msra.mxu0 %v3518
      %3586 = vmatprep.subr.mxu0 0.0
      %3587 = vmatpush1.msra.mxu0 %v3519
      %3588 = vmatprep.subr.mxu0 0.0
      %3589 = vmatpush1.msra.mxu0 %v3520
      %3590 = vmatprep.subr.mxu0 0.0
      %3591 = vmatpush1.msra.mxu0 %v3521
      %3592 = vmatprep.subr.mxu0 0.0
      %3593 = vmatpush1.msra.mxu0 %v3522
      %3594 = vmatprep.subr.mxu0 0.0
      %3595 = vmatpush1.msra.mxu0 %v3523
      %3596 = vmatprep.subr.mxu0 0.0
      %3597 = vmatpush1.msra.mxu0 %v3524
      %3598 = vmatprep.subr.mxu0 0.0
      %3599 = vmatpush1.msra.mxu0 %v3525
      %3600 = vmatprep.subr.mxu0 0.0
      %3601 = vmatpush1.msra.mxu0 %v3526
      %3602 = vmatprep.subr.mxu0 0.0
      %3603 = vmatpush1.msra.mxu0 %v3527
      %3604 = vmatprep.subr.mxu0 0.0
      %3605 = vmatpush1.msra.mxu0 %v3528
      %3606 = vmatprep.subr.mxu0 0.0
      %3607 = vmatpush1.msra.mxu0 %v3529
      %3608 = vmatprep.subr.mxu0 0.0
      %3609 = vmatpush1.msra.mxu0 %v3530
      %3610 = vmatprep.subr.mxu0 0.0
      %3611 = vmatpush1.msra.mxu0 %v3531
      %3612 = vmatprep.subr.mxu0 0.0
      %3613 = vmatpush1.msra.mxu0 %v3532
      %3614 = vmatprep.subr.mxu0 0.0
      %3615 = vmatpush1.msra.mxu0 %v3533
      %3616 = vmatprep.subr.mxu0 0.0
      %3617 = vmatpush1.msra.mxu0 %v3534
      %3618 = vmatprep.subr.mxu0 0.0
      %3619 = vmatpush1.msra.mxu0 %v3535
      %3620 = vmatprep.mubr.f32.mxu0 %v3493
      %3621 = vmatmul.mubr.f32.gmra.mrb[0].mxu0 %v3492
      %v3622 = vpop.f32.mrb[0].mxu0
      %v3623 = vadd.f32 %v3543, %v3622
      %v3624 = vpop.f32.mrb[0].mxu0
      %3625 = vmatprep.mubr.f32.mxu0 %v3496
      %3626 = vmatmul.mubr.f32.gmra.mrb[0].mxu0 %v3495
      %v3627 = vpop.f32.mrb[0].mxu0
      %v3628 = vadd.f32 %v3543, %v3627
      %v3629 = vpop.f32.mrb[0].mxu0
      %3630 = vmatprep.mubr.f32.mxu0 %v3499
      %3631 = vmatmul.mubr.f32.gmra.mrb[0].mxu0 %v3498
      %v3632 = vpop.f32.mrb[0].mxu0
      %v3633 = vadd.f32 %v3543, %v3632
      %v3634 = vpop.f32.mrb[0].mxu0
      %3635 = vmatprep.mubr.f32.mxu0 %v3502
      %3636 = vmatmul.mubr.f32.gmra.mrb[0].mxu0 %v3501
      %v3637 = vpop.f32.mrb[0].mxu0
      %v3638 = vpop.f32.mrb[0].mxu0
      %3639 = vdwg.mxu0
      %3640 = vmatprep.subr.mxu0 0.0
      %3641 = vmatpush1.msra.mxu0 %v3536
      %3642 = vmatprep.subr.mxu0 0.0
      %3643 = vmatpush1.msra.mxu0 %v3537
      %3644 = vmatprep.subr.mxu0 0.0
      %3645 = vmatpush1.msra.mxu0 %v3538
      %3646 = vmatprep.subr.mxu0 0.0
      %3647 = vmatpush1.msra.mxu0 %v3539
      %3648 = vmatprep.subr.mxu0 0.0
      %3649 = vmatpush1.msra.mxu0 0.0
      %3650 = vmatprep.subr.mxu0 0.0
      %3651 = vmatpush1.msra.mxu0 0.0
      %3652 = vmatprep.subr.mxu0 0.0
      %3653 = vmatpush1.msra.mxu0 0.0
      %3654 = vmatprep.subr.mxu0 0.0
      %3655 = vmatpush1.msra.mxu0 0.0
      %3656 = vmatprep.subr.mxu0 0.0
      %3657 = vmatpush1.msra.mxu0 0.0
      %3658 = vmatprep.subr.mxu0 0.0
      %3659 = vmatpush1.msra.mxu0 0.0
      %3660 = vmatprep.subr.mxu0 0.0
      %3661 = vmatpush1.msra.mxu0 0.0
      %3662 = vmatprep.subr.mxu0 0.0
      %3663 = vmatpush1.msra.mxu0 0.0
      %3664 = vmatprep.subr.mxu0 0.0
      %3665 = vmatpush1.msra.mxu0 0.0
      %3666 = vmatprep.subr.mxu0 0.0
      %3667 = vmatpush1.msra.mxu0 0.0
      %3668 = vmatprep.subr.mxu0 0.0
      %3669 = vmatpush1.msra.mxu0 0.0
      %3670 = vmatprep.subr.mxu0 0.0
      %3671 = vmatpush1.msra.mxu0 0.0
      %3672 = vmatprep.subr.mxu0 0.0
      %3673 = vmatpush1.msra.mxu0 0.0
      %3674 = vmatprep.subr.mxu0 0.0
      %3675 = vmatpush1.msra.mxu0 0.0
      %3676 = vmatprep.subr.mxu0 0.0
      %3677 = vmatpush1.msra.mxu0 0.0
      %3678 = vmatprep.subr.mxu0 0.0
      %3679 = vmatpush1.msra.mxu0 0.0
      %3680 = vmatprep.subr.mxu0 0.0
      %3681 = vmatpush1.msra.mxu0 0.0
      %3682 = vmatprep.subr.mxu0 0.0
      %3683 = vmatpush1.msra.mxu0 0.0
      %3684 = vmatprep.subr.mxu0 0.0
      %3685 = vmatpush1.msra.mxu0 0.0
      %3686 = vmatprep.subr.mxu0 0.0
      %3687 = vmatpush1.msra.mxu0 0.0
      %3688 = vmatprep.subr.mxu0 0.0
      %3689 = vmatpush1.msra.mxu0 0.0
      %3690 = vmatprep.subr.mxu0 0.0
      %3691 = vmatpush1.msra.mxu0 0.0
      %3692 = vmatprep.subr.mxu0 0.0
      %3693 = vmatpush1.msra.mxu0 0.0
      %3694 = vmatprep.subr.mxu0 0.0
      %3695 = vmatpush1.msra.mxu0 0.0
      %3696 = vmatprep.subr.mxu0 0.0
      %3697 = vmatpush1.msra.mxu0 0.0
      %3698 = vmatprep.subr.mxu0 0.0
      %3699 = vmatpush1.msra.mxu0 0.0
      %3700 = vmatprep.subr.mxu0 0.0
      %3701 = vmatpush1.msra.mxu0 0.0
      %3702 = vmatprep.subr.mxu0 0.0
      %3703 = vmatpush1.msra.mxu0 0.0
      %3704 = vmatprep.mubr.f32.mxu0 0.0
      %3705 = vmatmul.mubr.f32.gmra.mrb[0].mxu0 %v3545
      %v3706 = vpop.f32.mrb[0].mxu0
      %v3707 = vadd.f32 %v3623, %v3706
      %v3708 = vpop.f32.mrb[0].mxu0
      %3709 = vmatprep.mubr.f32.mxu0 0.0
      %3710 = vmatmul.mubr.f32.gmra.mrb[0].mxu0 %v3548
      %v3711 = vpop.f32.mrb[0].mxu0
      %v3712 = vadd.f32 %v3628, %v3711
      %v3713 = vpop.f32.mrb[0].mxu0
      %3714 = vmatprep.mubr.f32.mxu0 0.0
      %3715 = vmatmul.mubr.f32.gmra.mrb[0].mxu0 %v3551
      %v3716 = vpop.f32.mrb[0].mxu0
      %v3717 = vadd.f32 %v3633, %v3716
      %v3718 = vpop.f32.mrb[0].mxu0
      %3719 = vmatprep.mubr.f32.mxu0 0.0
      %3720 = vmatmul.mubr.f32.gmra.mrb[0].mxu0 %v3554
      %v3721 = vpop.f32.mrb[0].mxu0
      %v3722 = vpop.f32.mrb[0].mxu0
      %3723 = vdwg.mxu0
      %v3724 = vmax.f32 %v3707, 0.0
      %v3725 = vmax.f32 %v3712, 0.0
      %v3726 = vmax.f32 %v3717, 0.0
      %3727 = vst.msk [vmem:[#allocation3] sm:$0x7] %vm1738, %v3724
      %3728 = vst.msk [vmem:[#allocation3 + $0x2] sm:$0xe] %vm1976, %v3725
      %3729 = vst.msk [vmem:[#allocation3 + $0x4] sm:$0x1c] %vm1978, %v3726
      %v3730 = vld [vmem:[#allocation3] sm:$0xff]
      %v3731 = vld [vmem:[#allocation3 + $0x8] sm:$0x1]
      %3732 = vxpose.xlu0.b32.start [1/16] %v3730, 128
      %3733 = vxpose.xlu0.b32.cont [2/16] %v3731, 128
      %3734 = vxpose.xlu0.b32.cont [3/16] 0.0, 128
      %3735 = vxpose.xlu0.b32.cont [4/16] 0.0, 128
      %3736 = vxpose.xlu0.b32.cont [5/16] 0.0, 128
      %3737 = vxpose.xlu0.b32.cont [6/16] 0.0, 128
      %3738 = vxpose.xlu0.b32.cont [7/16] 0.0, 128
      %3739 = vxpose.xlu0.b32.cont [8/16] 0.0, 128
      %3740 = vxpose.xlu0.b32.cont [9/16] 0.0, 128
      %3741 = vxpose.xlu0.b32.cont [10/16] 0.0, 128
      %3742 = vxpose.xlu0.b32.cont [11/16] 0.0, 128
      %3743 = vxpose.xlu0.b32.cont [12/16] 0.0, 128
      %3744 = vxpose.xlu0.b32.cont [13/16] 0.0, 128
      %3745 = vxpose.xlu0.b32.cont [14/16] 0.0, 128
      %3746 = vxpose.xlu0.b32.cont [15/16] 0.0, 128
      %3747 = vxpose.xlu0.b32.end [16/16] 0.0, 128
      %v3748 = vpop.trf.xlu0
      %v3749 = vpop.trf.xlu0
      %v3750 = vpop.trf.xlu0
      %v3751 = vpop.trf.xlu0
      %v3752 = vpop.trf.xlu0
      %v3753 = vpop.trf.xlu0
      %v3754 = vpop.trf.xlu0
      %v3755 = vpop.trf.xlu0
      %v3756 = vpop.trf.xlu0
      %v3757 = vpop.trf.xlu0
      %v3758 = vpop.trf.xlu0
      %v3759 = vpop.trf.xlu0
      %v3760 = vpop.trf.xlu0
      %v3761 = vpop.trf.xlu0
      %v3762 = vpop.trf.xlu0
      %v3763 = vpop.trf.xlu0
      %s3764 = scalar_lea.vmem %s258, 32
      %3765 = vst.msk [vmem:[%s3764] sm:$0xff] %vm2014, %v3748
      %3766 = vst.msk [vmem:[%s3764 + $0x8] sm:$0xff] %vm2014, %v3749
      %3767 = vst.msk [vmem:[%s3764 + $0x10] sm:$0xff] %vm2014, %v3750
      %3768 = vst.msk [vmem:[%s3764 + $0x18] sm:$0xff] %vm2014, %v3751
      %s3769 = smul.u32 2, %s17
      %p3770 = scmp.lt.s32.totalorder %s3769, 3
      %s3771 = scalar_select %p3770, %s3769, 3
      %s3772 = smul.addr %s3771, 4
      %s3773 = smul.addr %s3772, 8
      %s3774 = scalar_lea.vmem %s6, %s3773
      // Predicated region
      $region45: #{encoder_forward.1} parent=43 // pred_check
        %p3775 = pneg %p166
      $region46: #{encoder_forward.1} parent=43 // pred_check_branch
        %3777 = sbr.rel (%p3775) target = $region48
      $region47: #{encoder_forward.1} parent=43 // pred_region
        %s3778 = smul.u32 2, %s17
      $region48: #{encoder_forward.1} parent=43 // pred_fallthru
        _
    $region44: #{encoder_forward.1} parent=5 // pred_fallthru
      _
    %p3779 = scmp.le.s32.totalorder 2, %s12
    // Predicated region
    $region49: #{encoder_forward.1} parent=5 // pred_check
      %p3780 = pneg %p3779
    $region50: #{encoder_forward.1} parent=5 // pred_check_branch
      %3782 = sbr.rel (%p3780) target = $region52
    $region51: #{encoder_forward.1} parent=5 // pred_region
      %s3783 = ssub.s32 %s12, 2
      // Predicated region
      $region53: #{encoder_forward.1} parent=51 // pred_check
        %p3784 = pneg %p172
      $region54: #{encoder_forward.1} parent=51 // pred_check_branch
        %3786 = sbr.rel (%p3784) target = $region56
      $region55: #{encoder_forward.1} parent=51 // pred_region
        %s3787 = smul.u32 2, %s18
        %p3788 = scmp.lt.s32.totalorder %s3787, 3
        %s3789 = scalar_select %p3788, %s3787, 3
        %s3790 = smul.addr %s3789, 4
        %s3791 = smul.addr %s3790, 8
        %s3792 = scalar_lea.vmem %s6, %s3791
      $region56: #{encoder_forward.1} parent=51 // pred_fallthru
        _
    $region52: #{encoder_forward.1} parent=5 // pred_fallthru
      _
  $region6: #{encoder_forward.1} parent=0 // loop_footer
    %s16 = sadd.s32 1, %s12
  $region7: #{encoder_forward.1} parent=0 // loop_footer_branch
    %11 = sbr.rel target = $region3
  $region8: #{encoder_forward.1} parent=0 // loop_exit
    _

</llo_original>
